<compile_context>
chip_gen: v6e
topology: v6e:2x2x1
jax: 0.10.0
libtpu: 0.0.40
codegen_flags: <defaults>
</compile_context>

<pallas_src>
import functools

import jax
import jax.numpy as jnp
from jax.experimental import pallas as pl
from jax.experimental.pallas import tpu as pltpu

GPAD = 128             # per-gate lane block in the packed LSTM weights
GATES_W = 4 * GPAD     # 512 lanes: [i | f | g | o]
HPAD = 128             # LSTM hidden (10) padded to a full lane group
A_PAD = 128            # lane-dense padded output width (real actions occupy [:action_dim])
NEG_BIG = -1e30        # logits padding value (exp underflows to exactly 0)


# --------------------------- fused forward kernel ----------------------------

def alloc_actor2_kernel(x_ref, wih_ref, whh_ref, bl_ref,
                        w1_ref, b1_ref, w2_ref, b2_ref, w3_ref, b3_ref,
                        out_ref, xw_ref, h_ref):
    T, Bb, F = x_ref.shape            # window, batch block, feature
    HID = w2_ref.shape[0]             # MLP hidden size
    f32 = jnp.float32

    # ---- Input projections: off the serial h-chain, staged in VMEM ----------
    # x_t @ W_ih_packed + b  -> xw_ref[t]   ([Bb, 512], gate k in lanes k*128:+H)
    wih = wih_ref[...]                                          # [F, 512]
    b_g = jnp.broadcast_to(bl_ref[...], (Bb, GATES_W))          # hoisted broadcast
    for t in range(T):
        xw_ref[t] = jnp.dot(x_ref[t], wih, preferred_element_type=f32) + b_g

    # ---- LSTM recurrence: ONE gate-packed matmul per step -------------------
    whh = whh_ref[...]                                          # [128, 512], rows >= H are 0
    h = jnp.zeros((Bb, HPAD), f32)
    c = jnp.zeros((Bb, HPAD), f32)
    for t in range(T):                                          # static unroll, T = 5
        gates = xw_ref[t] + jnp.dot(h, whh, preferred_element_type=f32)   # [Bb, 512]
        # 128-aligned slices: whole-vreg selects, no cross-lane movement.
        i_g = jax.nn.sigmoid(gates[:, 0 * GPAD:1 * GPAD])
        f_g = jax.nn.sigmoid(gates[:, 1 * GPAD:2 * GPAD])
        g_g = jnp.tanh(gates[:, 2 * GPAD:3 * GPAD])
        o_g = jax.nn.sigmoid(gates[:, 3 * GPAD:4 * GPAD])
        c = f_g * c + i_g * g_g
        h = o_g * jnp.tanh(c)
        h_ref[t] = h                  # h history for the fused flatten @ W1 below

    # ---- flatten + Linear1, off the serial chain:  flat(seq)@W1 == sum_t h_t@W1[t]
    acc1 = jnp.broadcast_to(b1_ref[...], (Bb, HID))
    for t in range(T):
        acc1 = acc1 + jnp.dot(h_ref[t], w1_ref[t], preferred_element_type=f32)

    # ---- MLPAllocator tail: ReLU -> Linear -> ReLU -> Linear -> softmax -----
    h1 = jnp.maximum(acc1, 0.0)
    h2 = jnp.maximum(jnp.dot(h1, w2_ref[...], preferred_element_type=f32) + b2_ref[...], 0.0)
    logits = jnp.dot(h2, w3_ref[...], preferred_element_type=f32) + b3_ref[...]   # [Bb, 128]
    m = jnp.max(logits, axis=-1, keepdims=True)
    e = jnp.exp(logits - m)           # padded lanes: exp(-1e30 - m) == 0
    p = e * pl.reciprocal(jnp.sum(e, axis=-1, keepdims=True), approx=True)
    out_ref[...] = p.astype(out_ref.dtype)      # lane-dense bf16 store


# ------------------------------- wrapper --------------------------------------

def _round_up(x, m):
    return ((x + m - 1) // m) * m


@functools.partial(jax.jit, static_argnames=("action_dim",))
def alloc_actor2_forward(obs, params, *, action_dim):
    B, T, F = obs.shape
    HID = params["w2"].shape[0]
    A_pad = params["w3"].shape[1]

    # Batch tiling: pad to full sublanes, always >= 2 grid steps so v7x megacore
    # shards the batch across both TensorCores; tiles stay well inside VMEM.
    BLOCK_B_MAX = 512
    b8 = _round_up(max(B, 1), 8)
    if b8 <= BLOCK_B_MAX:
        block_b = max(8, _round_up(b8 // 2, 8))
        B_pad = 2 * block_b
    else:
        block_b = BLOCK_B_MAX
        B_pad = _round_up(b8, BLOCK_B_MAX)

    # Time-major obs: leading-axis per-step loads in the kernel, clean DMA tile.
    obs_tm = jnp.transpose(obs, (1, 0, 2))                  # [T, B, F]
    if B_pad != B:
        obs_tm = jnp.pad(obs_tm, ((0, 0), (0, B_pad - B), (0, 0)))

    out = pl.pallas_call(
        alloc_actor2_kernel,
        out_shape=jax.ShapeDtypeStruct((B_pad, A_pad), jnp.bfloat16),
        grid=(B_pad // block_b,),
        in_specs=[
            pl.BlockSpec((T, block_b, F), lambda i: (0, i, 0)),    # obs (time-major, batch tiled)
            pl.BlockSpec((F, GATES_W),    lambda i: (0, 0)),       # W_ih  (gate-packed)
            pl.BlockSpec((HPAD, GATES_W), lambda i: (0, 0)),       # W_hh  (gate-packed, zero-padded rows)
            pl.BlockSpec((1, GATES_W),    lambda i: (0, 0)),       # b_ih + b_hh (gate-packed)
            pl.BlockSpec((T, HPAD, HID),  lambda i: (0, 0, 0)),    # W1 (time-major, zero-padded rows)
            pl.BlockSpec((1, HID),        lambda i: (0, 0)),       # b1
            pl.BlockSpec((HID, HID),      lambda i: (0, 0)),       # w2
            pl.BlockSpec((1, HID),        lambda i: (0, 0)),       # b2
            pl.BlockSpec((HID, A_pad),    lambda i: (0, 0)),       # w3 (lane-padded)
            pl.BlockSpec((1, A_pad),      lambda i: (0, 0)),       # b3 (lane-padded)
        ],
        out_specs=pl.BlockSpec((block_b, A_pad), lambda i: (i, 0)),
        scratch_shapes=[
            pltpu.VMEM((T, block_b, GATES_W), jnp.float32),        # staged input projections
            pltpu.VMEM((T, block_b, HPAD), jnp.float32),           # h history for flatten@W1
        ],
        compiler_params=pltpu.CompilerParams(
            dimension_semantics=("parallel",)),                    # megacore on v7x
    )(obs_tm, params["w_ih"], params["w_hh"], params["b_lstm"],
      params["w1"], params["b1"], params["w2"], params["b2"],
      params["w3"], params["b3"])

    return out[:B, :action_dim].astype(jnp.float32)


# ------------------- parameter packing (kernel-friendly layout) ---------------

def pack_lstm_params(w_ih, w_hh, b_ih, b_hh):
    """Convert PyTorch nn.LSTM weights to the gate-packed kernel layout.

    w_ih: [4H, F], w_hh: [4H, H], b_ih/b_hh: [4H]   (PyTorch gate order i, f, g, o)
    Returns W_ih_p [F, 4*128], W_hh_p [128, 4*128], b_p [1, 4*128] where gate k
    occupies lanes [k*128, k*128 + H); all padding (extra lanes / rows >= H) is zero.
    """
    fourH, _ = w_ih.shape
    H = fourH // 4
    b = b_ih + b_hh
    w_ih_p = jnp.zeros((w_ih.shape[1], GATES_W), jnp.float32)
    w_hh_p = jnp.zeros((HPAD, GATES_W), jnp.float32)
    b_p = jnp.zeros((1, GATES_W), jnp.float32)
    for k in range(4):
        w_ih_p = w_ih_p.at[:, k * GPAD:k * GPAD + H].set(w_ih[k * H:(k + 1) * H, :].T)
        w_hh_p = w_hh_p.at[:H, k * GPAD:k * GPAD + H].set(w_hh[k * H:(k + 1) * H, :].T)
        b_p = b_p.at[0, k * GPAD:k * GPAD + H].set(b[k * H:(k + 1) * H])
    return w_ih_p, w_hh_p, b_p


def init_params(key, feat_dim, window_size, lstm_hidden, hidden_dim, action_dim):
    ks = jax.random.split(key, 10)
    s = 0.1
    # ObsProcessor LSTM in PyTorch layout, then packed for the kernel.
    w_ih_t = s * jax.random.normal(ks[0], (4 * lstm_hidden, feat_dim), jnp.float32)
    w_hh_t = s * jax.random.normal(ks[1], (4 * lstm_hidden, lstm_hidden), jnp.float32)
    b_ih_t = s * jax.random.normal(ks[2], (4 * lstm_hidden,), jnp.float32)
    b_hh_t = s * jax.random.normal(ks[3], (4 * lstm_hidden,), jnp.float32)
    w_ih_p, w_hh_p, b_p = pack_lstm_params(w_ih_t, w_hh_t, b_ih_t, b_hh_t)

    # MLPAllocator. W1 stored time-major [T, HPAD, hidden] (rows >= H zero) so the
    # flatten + first Linear folds into sum_t h_t @ W1[t].
    w1 = s * jax.random.normal(ks[4], (window_size * lstm_hidden, hidden_dim), jnp.float32)
    w1_p = jnp.zeros((window_size, HPAD, hidden_dim), jnp.float32)
    w1_p = w1_p.at[:, :lstm_hidden, :].set(
        w1.reshape(window_size, lstm_hidden, hidden_dim))
    b1 = s * jax.random.normal(ks[5], (1, hidden_dim), jnp.float32)
    w2 = s * jax.random.normal(ks[6], (hidden_dim, hidden_dim), jnp.float32)
    b2 = s * jax.random.normal(ks[7], (1, hidden_dim), jnp.float32)
    w3 = s * jax.random.normal(ks[8], (hidden_dim, action_dim), jnp.float32)
    b3 = s * jax.random.normal(ks[9], (1, action_dim), jnp.float32)
    # Lane-dense padded output head: zero weight cols, -1e30 bias in padding so
    # the in-kernel softmax over A_PAD lanes is exact for the real actions.
    w3_p = jnp.zeros((hidden_dim, A_PAD), jnp.float32).at[:, :action_dim].set(w3)
    b3_p = jnp.full((1, A_PAD), NEG_BIG, jnp.float32).at[:, :action_dim].set(b3)
    return {
        "w_ih": w_ih_p, "w_hh": w_hh_p, "b_lstm": b_p,
        "w1": w1_p, "b1": b1, "w2": w2, "b2": b2, "w3": w3_p, "b3": b3_p,
    }


# ---------------------------- pure-JAX reference ------------------------------

def reference_forward(obs, params, action_dim, lstm_hidden):
    B, T, F = obs.shape
    H = lstm_hidden
    wih = [params["w_ih"][:, k * GPAD:k * GPAD + H] for k in range(4)]
    whh = [params["w_hh"][:H, k * GPAD:k * GPAD + H] for k in range(4)]
    bg = [params["b_lstm"][:, k * GPAD:k * GPAD + H] for k in range(4)]
    h = jnp.zeros((B, H), jnp.float32)
    c = jnp.zeros((B, H), jnp.float32)
    hs = []
    for t in range(T):
        x_t = obs[:, t, :]
        g = [x_t @ wih[k] + h @ whh[k] + bg[k] for k in range(4)]
        i_g = jax.nn.sigmoid(g[0]); f_g = jax.nn.sigmoid(g[1])
        g_g = jnp.tanh(g[2]);       o_g = jax.nn.sigmoid(g[3])
        c = f_g * c + i_g * g_g
        h = o_g * jnp.tanh(c)
        hs.append(h)
    flat = jnp.concatenate(hs, axis=1)                       # == x.view(B, -1)
    w1 = params["w1"][:, :H, :].reshape(T * H, -1)
    h1 = jax.nn.relu(flat @ w1 + params["b1"])
    h2 = jax.nn.relu(h1 @ params["w2"] + params["b2"])
    logits = h2 @ params["w3"][:, :action_dim] + params["b3"][:, :action_dim]
    return jax.nn.softmax(logits, axis=-1)


# ----------------------------------- main --------------------------------------

if __name__ == "__main__":
    B = 2          # batch
    T = 5          # window_size
    F = 16         # per-step observation feature dim
    H_LSTM = 10    # ObsProcessor hidden_size
    HIDDEN = 32    # MLPAllocator hidden_dim (small for test)
    ACTION = 4     # action_dim

    key = jax.random.PRNGKey(0)
    k_obs, k_par = jax.random.split(key)
    obs = jax.random.normal(k_obs, (B, T, F), jnp.float32)
    params = init_params(k_par, F, T, H_LSTM, HIDDEN, ACTION)

    out = alloc_actor2_forward(obs, params, action_dim=ACTION)
    jax.block_until_ready(out)

    ref = reference_forward(obs, params, ACTION, H_LSTM)
    assert out.shape == (B, ACTION)
    # bf16 output store + approx reciprocal: rows sum to ~1 within bf16/EUP tolerance.
    assert jnp.allclose(jnp.sum(out, axis=-1), 1.0, atol=2e-2)
    assert jnp.allclose(out, ref, atol=1e-2, rtol=1e-2)
    print("KERNEL_OK")
</pallas_src>

<mosaic_0001>
module attributes {stable_mosaic.version = 11 : i64} {
  func.func @alloc_actor2_kernel(%arg0: i32, %arg1: memref<5x8x16xf32, #tpu.memory_space<vmem>>, %arg2: memref<16x512xf32, #tpu.memory_space<vmem>>, %arg3: memref<128x512xf32, #tpu.memory_space<vmem>>, %arg4: memref<1x512xf32, #tpu.memory_space<vmem>>, %arg5: memref<5x128x32xf32, #tpu.memory_space<vmem>>, %arg6: memref<1x32xf32, #tpu.memory_space<vmem>>, %arg7: memref<32x32xf32, #tpu.memory_space<vmem>>, %arg8: memref<1x32xf32, #tpu.memory_space<vmem>>, %arg9: memref<32x128xf32, #tpu.memory_space<vmem>>, %arg10: memref<1x128xf32, #tpu.memory_space<vmem>>, %arg11: memref<8x128xbf16, #tpu.memory_space<vmem>>, %arg12: memref<5x8x512xf32, #tpu.memory_space<vmem>>, %arg13: memref<5x8x128xf32, #tpu.memory_space<vmem>>) attributes {dimension_semantics = [#tpu.dimension_semantics<parallel>], iteration_bounds = array<i64: 2>, scalar_prefetch = 0 : i64, scratch_operands = 2 : i64, tpu.core_type = #tpu.core_type<tc>, window_params = [{transform_indices = @transform_0, window_bounds = array<i64: 5, 8, 16>}, {pipeline_mode = #tpu.pipeline_mode<synchronous>, transform_indices = @transform_1, window_bounds = array<i64: 16, 512>}, {pipeline_mode = #tpu.pipeline_mode<synchronous>, transform_indices = @transform_2, window_bounds = array<i64: 128, 512>}, {pipeline_mode = #tpu.pipeline_mode<synchronous>, transform_indices = @transform_3, window_bounds = array<i64: 1, 512>}, {pipeline_mode = #tpu.pipeline_mode<synchronous>, transform_indices = @transform_4, window_bounds = array<i64: 5, 128, 32>}, {pipeline_mode = #tpu.pipeline_mode<synchronous>, transform_indices = @transform_5, window_bounds = array<i64: 1, 32>}, {pipeline_mode = #tpu.pipeline_mode<synchronous>, transform_indices = @transform_6, window_bounds = array<i64: 32, 32>}, {pipeline_mode = #tpu.pipeline_mode<synchronous>, transform_indices = @transform_7, window_bounds = array<i64: 1, 32>}, {pipeline_mode = #tpu.pipeline_mode<synchronous>, transform_indices = @transform_8, window_bounds = array<i64: 32, 128>}, {pipeline_mode = #tpu.pipeline_mode<synchronous>, transform_indices = @transform_9, window_bounds = array<i64: 1, 128>}, {transform_indices = @transform_10, window_bounds = array<i64: 8, 128>}]} {
    %c0 = arith.constant 0 : index
    %c0_0 = arith.constant 0 : index
    %0 = vector.load %arg2[%c0, %c0_0] : memref<16x512xf32, #tpu.memory_space<vmem>>, vector<16x512xf32>
    %c0_1 = arith.constant 0 : index
    %c0_2 = arith.constant 0 : index
    %1 = vector.load %arg4[%c0_1, %c0_2] : memref<1x512xf32, #tpu.memory_space<vmem>>, vector<1x512xf32>
    %2 = vector.shape_cast %1 : vector<1x512xf32> to vector<1x512xf32>
    %3 = vector.broadcast %2 : vector<1x512xf32> to vector<8x512xf32>
    %c0_3 = arith.constant 0 : index
    %c0_4 = arith.constant 0 : index
    %c0_5 = arith.constant 0 : index
    %4 = vector.load %arg1[%c0_3, %c0_4, %c0_5] : memref<5x8x16xf32, #tpu.memory_space<vmem>>, vector<1x8x16xf32>
    %5 = vector.shape_cast %4 : vector<1x8x16xf32> to vector<8x16xf32>
    %cst = arith.constant dense<0.000000e+00> : vector<8x512xf32>
    %6 = tpu.matmul %5, %0, %cst {dimension_numbers = #tpu.dot_dimension_numbers<[1], [0], [0], [1], [0, 0, 1, 1], [], []>} : vector<8x16xf32>, vector<16x512xf32>, vector<8x512xf32> -> vector<8x512xf32>
    %7 = arith.addf %6, %3 : vector<8x512xf32>
    %c0_6 = arith.constant 0 : index
    %c0_7 = arith.constant 0 : index
    %c0_8 = arith.constant 0 : index
    %8 = vector.load %arg12[%c0_6, %c0_7, %c0_8] : memref<5x8x512xf32, #tpu.memory_space<vmem>>, vector<1x8x512xf32>
    %9 = vector.shape_cast %8 : vector<1x8x512xf32> to vector<8x512xf32>
    %10 = vector.shape_cast %7 : vector<8x512xf32> to vector<1x8x512xf32>
    tpu.vector_store %arg12[%c0_6, %c0_7, %c0_8], %10 {strides = array<i32>} : memref<5x8x512xf32, #tpu.memory_space<vmem>>, vector<1x8x512xf32>,
    %c1 = arith.constant 1 : index
    %c0_9 = arith.constant 0 : index
    %c0_10 = arith.constant 0 : index
    %11 = vector.load %arg1[%c1, %c0_9, %c0_10] : memref<5x8x16xf32, #tpu.memory_space<vmem>>, vector<1x8x16xf32>
    %12 = vector.shape_cast %11 : vector<1x8x16xf32> to vector<8x16xf32>
    %cst_11 = arith.constant dense<0.000000e+00> : vector<8x512xf32>
    %13 = tpu.matmul %12, %0, %cst_11 {dimension_numbers = #tpu.dot_dimension_numbers<[1], [0], [0], [1], [0, 0, 1, 1], [], []>} : vector<8x16xf32>, vector<16x512xf32>, vector<8x512xf32> -> vector<8x512xf32>
    %14 = arith.addf %13, %3 : vector<8x512xf32>
    %c1_12 = arith.constant 1 : index
    %c0_13 = arith.constant 0 : index
    %c0_14 = arith.constant 0 : index
    %15 = vector.load %arg12[%c1_12, %c0_13, %c0_14] : memref<5x8x512xf32, #tpu.memory_space<vmem>>, vector<1x8x512xf32>
    %16 = vector.shape_cast %15 : vector<1x8x512xf32> to vector<8x512xf32>
    %17 = vector.shape_cast %14 : vector<8x512xf32> to vector<1x8x512xf32>
    tpu.vector_store %arg12[%c1_12, %c0_13, %c0_14], %17 {strides = array<i32>} : memref<5x8x512xf32, #tpu.memory_space<vmem>>, vector<1x8x512xf32>,
    %c2 = arith.constant 2 : index
    %c0_15 = arith.constant 0 : index
    %c0_16 = arith.constant 0 : index
    %18 = vector.load %arg1[%c2, %c0_15, %c0_16] : memref<5x8x16xf32, #tpu.memory_space<vmem>>, vector<1x8x16xf32>
    %19 = vector.shape_cast %18 : vector<1x8x16xf32> to vector<8x16xf32>
    %cst_17 = arith.constant dense<0.000000e+00> : vector<8x512xf32>
    %20 = tpu.matmul %19, %0, %cst_17 {dimension_numbers = #tpu.dot_dimension_numbers<[1], [0], [0], [1], [0, 0, 1, 1], [], []>} : vector<8x16xf32>, vector<16x512xf32>, vector<8x512xf32> -> vector<8x512xf32>
    %21 = arith.addf %20, %3 : vector<8x512xf32>
    %c2_18 = arith.constant 2 : index
    %c0_19 = arith.constant 0 : index
    %c0_20 = arith.constant 0 : index
    %22 = vector.load %arg12[%c2_18, %c0_19, %c0_20] : memref<5x8x512xf32, #tpu.memory_space<vmem>>, vector<1x8x512xf32>
    %23 = vector.shape_cast %22 : vector<1x8x512xf32> to vector<8x512xf32>
    %24 = vector.shape_cast %21 : vector<8x512xf32> to vector<1x8x512xf32>
    tpu.vector_store %arg12[%c2_18, %c0_19, %c0_20], %24 {strides = array<i32>} : memref<5x8x512xf32, #tpu.memory_space<vmem>>, vector<1x8x512xf32>,
    %c3 = arith.constant 3 : index
    %c0_21 = arith.constant 0 : index
    %c0_22 = arith.constant 0 : index
    %25 = vector.load %arg1[%c3, %c0_21, %c0_22] : memref<5x8x16xf32, #tpu.memory_space<vmem>>, vector<1x8x16xf32>
    %26 = vector.shape_cast %25 : vector<1x8x16xf32> to vector<8x16xf32>
    %cst_23 = arith.constant dense<0.000000e+00> : vector<8x512xf32>
    %27 = tpu.matmul %26, %0, %cst_23 {dimension_numbers = #tpu.dot_dimension_numbers<[1], [0], [0], [1], [0, 0, 1, 1], [], []>} : vector<8x16xf32>, vector<16x512xf32>, vector<8x512xf32> -> vector<8x512xf32>
    %28 = arith.addf %27, %3 : vector<8x512xf32>
    %c3_24 = arith.constant 3 : index
    %c0_25 = arith.constant 0 : index
    %c0_26 = arith.constant 0 : index
    %29 = vector.load %arg12[%c3_24, %c0_25, %c0_26] : memref<5x8x512xf32, #tpu.memory_space<vmem>>, vector<1x8x512xf32>
    %30 = vector.shape_cast %29 : vector<1x8x512xf32> to vector<8x512xf32>
    %31 = vector.shape_cast %28 : vector<8x512xf32> to vector<1x8x512xf32>
    tpu.vector_store %arg12[%c3_24, %c0_25, %c0_26], %31 {strides = array<i32>} : memref<5x8x512xf32, #tpu.memory_space<vmem>>, vector<1x8x512xf32>,
    %c4 = arith.constant 4 : index
    %c0_27 = arith.constant 0 : index
    %c0_28 = arith.constant 0 : index
    %32 = vector.load %arg1[%c4, %c0_27, %c0_28] : memref<5x8x16xf32, #tpu.memory_space<vmem>>, vector<1x8x16xf32>
    %33 = vector.shape_cast %32 : vector<1x8x16xf32> to vector<8x16xf32>
    %cst_29 = arith.constant dense<0.000000e+00> : vector<8x512xf32>
    %34 = tpu.matmul %33, %0, %cst_29 {dimension_numbers = #tpu.dot_dimension_numbers<[1], [0], [0], [1], [0, 0, 1, 1], [], []>} : vector<8x16xf32>, vector<16x512xf32>, vector<8x512xf32> -> vector<8x512xf32>
    %35 = arith.addf %34, %3 : vector<8x512xf32>
    %c4_30 = arith.constant 4 : index
    %c0_31 = arith.constant 0 : index
    %c0_32 = arith.constant 0 : index
    %36 = vector.load %arg12[%c4_30, %c0_31, %c0_32] : memref<5x8x512xf32, #tpu.memory_space<vmem>>, vector<1x8x512xf32>
    %37 = vector.shape_cast %36 : vector<1x8x512xf32> to vector<8x512xf32>
    %38 = vector.shape_cast %35 : vector<8x512xf32> to vector<1x8x512xf32>
    tpu.vector_store %arg12[%c4_30, %c0_31, %c0_32], %38 {strides = array<i32>} : memref<5x8x512xf32, #tpu.memory_space<vmem>>, vector<1x8x512xf32>,
    %c0_33 = arith.constant 0 : index
    %c0_34 = arith.constant 0 : index
    %39 = vector.load %arg3[%c0_33, %c0_34] : memref<128x512xf32, #tpu.memory_space<vmem>>, vector<128x512xf32>
    %cst_35 = arith.constant 0.000000e+00 : f32
    %40 = vector.broadcast %cst_35 : f32 to vector<8x128xf32>
    %cst_36 = arith.constant 0.000000e+00 : f32
    %41 = vector.broadcast %cst_36 : f32 to vector<8x128xf32>
    %c0_37 = arith.constant 0 : index
    %c0_38 = arith.constant 0 : index
    %c0_39 = arith.constant 0 : index
    %42 = vector.load %arg12[%c0_37, %c0_38, %c0_39] : memref<5x8x512xf32, #tpu.memory_space<vmem>>, vector<1x8x512xf32>
    %43 = vector.shape_cast %42 : vector<1x8x512xf32> to vector<8x512xf32>
    %cst_40 = arith.constant dense<0.000000e+00> : vector<8x512xf32>
    %44 = tpu.matmul %40, %39, %cst_40 {dimension_numbers = #tpu.dot_dimension_numbers<[1], [0], [0], [1], [0, 0, 1, 1], [], []>} : vector<8x128xf32>, vector<128x512xf32>, vector<8x512xf32> -> vector<8x512xf32>
    %45 = arith.addf %43, %44 : vector<8x512xf32>
    %46 = vector.extract_strided_slice %45 {offsets = [0, 0], sizes = [8, 128], strides = [1, 1]} : vector<8x512xf32> to vector<8x128xf32>
    %47 = arith.negf %46 : vector<8x128xf32>
    %48 = math.exp %47 : vector<8x128xf32>
    %cst_41 = arith.constant 1.000000e+00 : f32
    %49 = vector.broadcast %cst_41 : f32 to vector<8x128xf32>
    %50 = arith.addf %49, %48 : vector<8x128xf32>
    %51 = arith.divf %49, %50 : vector<8x128xf32>
    %52 = vector.extract_strided_slice %45 {offsets = [0, 128], sizes = [8, 128], strides = [1, 1]} : vector<8x512xf32> to vector<8x128xf32>
    %53 = arith.negf %52 : vector<8x128xf32>
    %54 = math.exp %53 : vector<8x128xf32>
    %cst_42 = arith.constant 1.000000e+00 : f32
    %55 = vector.broadcast %cst_42 : f32 to vector<8x128xf32>
    %56 = arith.addf %55, %54 : vector<8x128xf32>
    %57 = arith.divf %55, %56 : vector<8x128xf32>
    %58 = vector.extract_strided_slice %45 {offsets = [0, 256], sizes = [8, 128], strides = [1, 1]} : vector<8x512xf32> to vector<8x128xf32>
    %59 = math.tanh %58 : vector<8x128xf32>
    %60 = vector.extract_strided_slice %45 {offsets = [0, 384], sizes = [8, 128], strides = [1, 1]} : vector<8x512xf32> to vector<8x128xf32>
    %61 = arith.negf %60 : vector<8x128xf32>
    %62 = math.exp %61 : vector<8x128xf32>
    %cst_43 = arith.constant 1.000000e+00 : f32
    %63 = vector.broadcast %cst_43 : f32 to vector<8x128xf32>
    %64 = arith.addf %63, %62 : vector<8x128xf32>
    %65 = arith.divf %63, %64 : vector<8x128xf32>
    %66 = arith.mulf %57, %41 : vector<8x128xf32>
    %67 = arith.mulf %51, %59 : vector<8x128xf32>
    %68 = arith.addf %66, %67 : vector<8x128xf32>
    %69 = math.tanh %68 : vector<8x128xf32>
    %70 = arith.mulf %65, %69 : vector<8x128xf32>
    %c0_44 = arith.constant 0 : index
    %c0_45 = arith.constant 0 : index
    %c0_46 = arith.constant 0 : index
    %71 = vector.load %arg13[%c0_44, %c0_45, %c0_46] : memref<5x8x128xf32, #tpu.memory_space<vmem>>, vector<1x8x128xf32>
    %72 = vector.shape_cast %71 : vector<1x8x128xf32> to vector<8x128xf32>
    %73 = vector.shape_cast %70 : vector<8x128xf32> to vector<1x8x128xf32>
    tpu.vector_store %arg13[%c0_44, %c0_45, %c0_46], %73 {strides = array<i32>} : memref<5x8x128xf32, #tpu.memory_space<vmem>>, vector<1x8x128xf32>,
    %c1_47 = arith.constant 1 : index
    %c0_48 = arith.constant 0 : index
    %c0_49 = arith.constant 0 : index
    %74 = vector.load %arg12[%c1_47, %c0_48, %c0_49] : memref<5x8x512xf32, #tpu.memory_space<vmem>>, vector<1x8x512xf32>
    %75 = vector.shape_cast %74 : vector<1x8x512xf32> to vector<8x512xf32>
    %cst_50 = arith.constant dense<0.000000e+00> : vector<8x512xf32>
    %76 = tpu.matmul %70, %39, %cst_50 {dimension_numbers = #tpu.dot_dimension_numbers<[1], [0], [0], [1], [0, 0, 1, 1], [], []>} : vector<8x128xf32>, vector<128x512xf32>, vector<8x512xf32> -> vector<8x512xf32>
    %77 = arith.addf %75, %76 : vector<8x512xf32>
    %78 = vector.extract_strided_slice %77 {offsets = [0, 0], sizes = [8, 128], strides = [1, 1]} : vector<8x512xf32> to vector<8x128xf32>
    %79 = arith.negf %78 : vector<8x128xf32>
    %80 = math.exp %79 : vector<8x128xf32>
    %cst_51 = arith.constant 1.000000e+00 : f32
    %81 = vector.broadcast %cst_51 : f32 to vector<8x128xf32>
    %82 = arith.addf %81, %80 : vector<8x128xf32>
    %83 = arith.divf %81, %82 : vector<8x128xf32>
    %84 = vector.extract_strided_slice %77 {offsets = [0, 128], sizes = [8, 128], strides = [1, 1]} : vector<8x512xf32> to vector<8x128xf32>
    %85 = arith.negf %84 : vector<8x128xf32>
    %86 = math.exp %85 : vector<8x128xf32>
    %cst_52 = arith.constant 1.000000e+00 : f32
    %87 = vector.broadcast %cst_52 : f32 to vector<8x128xf32>
    %88 = arith.addf %87, %86 : vector<8x128xf32>
    %89 = arith.divf %87, %88 : vector<8x128xf32>
    %90 = vector.extract_strided_slice %77 {offsets = [0, 256], sizes = [8, 128], strides = [1, 1]} : vector<8x512xf32> to vector<8x128xf32>
    %91 = math.tanh %90 : vector<8x128xf32>
    %92 = vector.extract_strided_slice %77 {offsets = [0, 384], sizes = [8, 128], strides = [1, 1]} : vector<8x512xf32> to vector<8x128xf32>
    %93 = arith.negf %92 : vector<8x128xf32>
    %94 = math.exp %93 : vector<8x128xf32>
    %cst_53 = arith.constant 1.000000e+00 : f32
    %95 = vector.broadcast %cst_53 : f32 to vector<8x128xf32>
    %96 = arith.addf %95, %94 : vector<8x128xf32>
    %97 = arith.divf %95, %96 : vector<8x128xf32>
    %98 = arith.mulf %89, %68 : vector<8x128xf32>
    %99 = arith.mulf %83, %91 : vector<8x128xf32>
    %100 = arith.addf %98, %99 : vector<8x128xf32>
    %101 = math.tanh %100 : vector<8x128xf32>
    %102 = arith.mulf %97, %101 : vector<8x128xf32>
    %c1_54 = arith.constant 1 : index
    %c0_55 = arith.constant 0 : index
    %c0_56 = arith.constant 0 : index
    %103 = vector.load %arg13[%c1_54, %c0_55, %c0_56] : memref<5x8x128xf32, #tpu.memory_space<vmem>>, vector<1x8x128xf32>
    %104 = vector.shape_cast %103 : vector<1x8x128xf32> to vector<8x128xf32>
    %105 = vector.shape_cast %102 : vector<8x128xf32> to vector<1x8x128xf32>
    tpu.vector_store %arg13[%c1_54, %c0_55, %c0_56], %105 {strides = array<i32>} : memref<5x8x128xf32, #tpu.memory_space<vmem>>, vector<1x8x128xf32>,
    %c2_57 = arith.constant 2 : index
    %c0_58 = arith.constant 0 : index
    %c0_59 = arith.constant 0 : index
    %106 = vector.load %arg12[%c2_57, %c0_58, %c0_59] : memref<5x8x512xf32, #tpu.memory_space<vmem>>, vector<1x8x512xf32>
    %107 = vector.shape_cast %106 : vector<1x8x512xf32> to vector<8x512xf32>
    %cst_60 = arith.constant dense<0.000000e+00> : vector<8x512xf32>
    %108 = tpu.matmul %102, %39, %cst_60 {dimension_numbers = #tpu.dot_dimension_numbers<[1], [0], [0], [1], [0, 0, 1, 1], [], []>} : vector<8x128xf32>, vector<128x512xf32>, vector<8x512xf32> -> vector<8x512xf32>
    %109 = arith.addf %107, %108 : vector<8x512xf32>
    %110 = vector.extract_strided_slice %109 {offsets = [0, 0], sizes = [8, 128], strides = [1, 1]} : vector<8x512xf32> to vector<8x128xf32>
    %111 = arith.negf %110 : vector<8x128xf32>
    %112 = math.exp %111 : vector<8x128xf32>
    %cst_61 = arith.constant 1.000000e+00 : f32
    %113 = vector.broadcast %cst_61 : f32 to vector<8x128xf32>
    %114 = arith.addf %113, %112 : vector<8x128xf32>
    %115 = arith.divf %113, %114 : vector<8x128xf32>
    %116 = vector.extract_strided_slice %109 {offsets = [0, 128], sizes = [8, 128], strides = [1, 1]} : vector<8x512xf32> to vector<8x128xf32>
    %117 = arith.negf %116 : vector<8x128xf32>
    %118 = math.exp %117 : vector<8x128xf32>
    %cst_62 = arith.constant 1.000000e+00 : f32
    %119 = vector.broadcast %cst_62 : f32 to vector<8x128xf32>
    %120 = arith.addf %119, %118 : vector<8x128xf32>
    %121 = arith.divf %119, %120 : vector<8x128xf32>
    %122 = vector.extract_strided_slice %109 {offsets = [0, 256], sizes = [8, 128], strides = [1, 1]} : vector<8x512xf32> to vector<8x128xf32>
    %123 = math.tanh %122 : vector<8x128xf32>
    %124 = vector.extract_strided_slice %109 {offsets = [0, 384], sizes = [8, 128], strides = [1, 1]} : vector<8x512xf32> to vector<8x128xf32>
    %125 = arith.negf %124 : vector<8x128xf32>
    %126 = math.exp %125 : vector<8x128xf32>
    %cst_63 = arith.constant 1.000000e+00 : f32
    %127 = vector.broadcast %cst_63 : f32 to vector<8x128xf32>
    %128 = arith.addf %127, %126 : vector<8x128xf32>
    %129 = arith.divf %127, %128 : vector<8x128xf32>
    %130 = arith.mulf %121, %100 : vector<8x128xf32>
    %131 = arith.mulf %115, %123 : vector<8x128xf32>
    %132 = arith.addf %130, %131 : vector<8x128xf32>
    %133 = math.tanh %132 : vector<8x128xf32>
    %134 = arith.mulf %129, %133 : vector<8x128xf32>
    %c2_64 = arith.constant 2 : index
    %c0_65 = arith.constant 0 : index
    %c0_66 = arith.constant 0 : index
    %135 = vector.load %arg13[%c2_64, %c0_65, %c0_66] : memref<5x8x128xf32, #tpu.memory_space<vmem>>, vector<1x8x128xf32>
    %136 = vector.shape_cast %135 : vector<1x8x128xf32> to vector<8x128xf32>
    %137 = vector.shape_cast %134 : vector<8x128xf32> to vector<1x8x128xf32>
    tpu.vector_store %arg13[%c2_64, %c0_65, %c0_66], %137 {strides = array<i32>} : memref<5x8x128xf32, #tpu.memory_space<vmem>>, vector<1x8x128xf32>,
    %c3_67 = arith.constant 3 : index
    %c0_68 = arith.constant 0 : index
    %c0_69 = arith.constant 0 : index
    %138 = vector.load %arg12[%c3_67, %c0_68, %c0_69] : memref<5x8x512xf32, #tpu.memory_space<vmem>>, vector<1x8x512xf32>
    %139 = vector.shape_cast %138 : vector<1x8x512xf32> to vector<8x512xf32>
    %cst_70 = arith.constant dense<0.000000e+00> : vector<8x512xf32>
    %140 = tpu.matmul %134, %39, %cst_70 {dimension_numbers = #tpu.dot_dimension_numbers<[1], [0], [0], [1], [0, 0, 1, 1], [], []>} : vector<8x128xf32>, vector<128x512xf32>, vector<8x512xf32> -> vector<8x512xf32>
    %141 = arith.addf %139, %140 : vector<8x512xf32>
    %142 = vector.extract_strided_slice %141 {offsets = [0, 0], sizes = [8, 128], strides = [1, 1]} : vector<8x512xf32> to vector<8x128xf32>
    %143 = arith.negf %142 : vector<8x128xf32>
    %144 = math.exp %143 : vector<8x128xf32>
    %cst_71 = arith.constant 1.000000e+00 : f32
    %145 = vector.broadcast %cst_71 : f32 to vector<8x128xf32>
    %146 = arith.addf %145, %144 : vector<8x128xf32>
    %147 = arith.divf %145, %146 : vector<8x128xf32>
    %148 = vector.extract_strided_slice %141 {offsets = [0, 128], sizes = [8, 128], strides = [1, 1]} : vector<8x512xf32> to vector<8x128xf32>
    %149 = arith.negf %148 : vector<8x128xf32>
    %150 = math.exp %149 : vector<8x128xf32>
    %cst_72 = arith.constant 1.000000e+00 : f32
    %151 = vector.broadcast %cst_72 : f32 to vector<8x128xf32>
    %152 = arith.addf %151, %150 : vector<8x128xf32>
    %153 = arith.divf %151, %152 : vector<8x128xf32>
    %154 = vector.extract_strided_slice %141 {offsets = [0, 256], sizes = [8, 128], strides = [1, 1]} : vector<8x512xf32> to vector<8x128xf32>
    %155 = math.tanh %154 : vector<8x128xf32>
    %156 = vector.extract_strided_slice %141 {offsets = [0, 384], sizes = [8, 128], strides = [1, 1]} : vector<8x512xf32> to vector<8x128xf32>
    %157 = arith.negf %156 : vector<8x128xf32>
    %158 = math.exp %157 : vector<8x128xf32>
    %cst_73 = arith.constant 1.000000e+00 : f32
    %159 = vector.broadcast %cst_73 : f32 to vector<8x128xf32>
    %160 = arith.addf %159, %158 : vector<8x128xf32>
    %161 = arith.divf %159, %160 : vector<8x128xf32>
    %162 = arith.mulf %153, %132 : vector<8x128xf32>
    %163 = arith.mulf %147, %155 : vector<8x128xf32>
    %164 = arith.addf %162, %163 : vector<8x128xf32>
    %165 = math.tanh %164 : vector<8x128xf32>
    %166 = arith.mulf %161, %165 : vector<8x128xf32>
    %c3_74 = arith.constant 3 : index
    %c0_75 = arith.constant 0 : index
    %c0_76 = arith.constant 0 : index
    %167 = vector.load %arg13[%c3_74, %c0_75, %c0_76] : memref<5x8x128xf32, #tpu.memory_space<vmem>>, vector<1x8x128xf32>
    %168 = vector.shape_cast %167 : vector<1x8x128xf32> to vector<8x128xf32>
    %169 = vector.shape_cast %166 : vector<8x128xf32> to vector<1x8x128xf32>
    tpu.vector_store %arg13[%c3_74, %c0_75, %c0_76], %169 {strides = array<i32>} : memref<5x8x128xf32, #tpu.memory_space<vmem>>, vector<1x8x128xf32>,
    %c4_77 = arith.constant 4 : index
    %c0_78 = arith.constant 0 : index
    %c0_79 = arith.constant 0 : index
    %170 = vector.load %arg12[%c4_77, %c0_78, %c0_79] : memref<5x8x512xf32, #tpu.memory_space<vmem>>, vector<1x8x512xf32>
    %171 = vector.shape_cast %170 : vector<1x8x512xf32> to vector<8x512xf32>
    %cst_80 = arith.constant dense<0.000000e+00> : vector<8x512xf32>
    %172 = tpu.matmul %166, %39, %cst_80 {dimension_numbers = #tpu.dot_dimension_numbers<[1], [0], [0], [1], [0, 0, 1, 1], [], []>} : vector<8x128xf32>, vector<128x512xf32>, vector<8x512xf32> -> vector<8x512xf32>
    %173 = arith.addf %171, %172 : vector<8x512xf32>
    %174 = vector.extract_strided_slice %173 {offsets = [0, 0], sizes = [8, 128], strides = [1, 1]} : vector<8x512xf32> to vector<8x128xf32>
    %175 = arith.negf %174 : vector<8x128xf32>
    %176 = math.exp %175 : vector<8x128xf32>
    %cst_81 = arith.constant 1.000000e+00 : f32
    %177 = vector.broadcast %cst_81 : f32 to vector<8x128xf32>
    %178 = arith.addf %177, %176 : vector<8x128xf32>
    %179 = arith.divf %177, %178 : vector<8x128xf32>
    %180 = vector.extract_strided_slice %173 {offsets = [0, 128], sizes = [8, 128], strides = [1, 1]} : vector<8x512xf32> to vector<8x128xf32>
    %181 = arith.negf %180 : vector<8x128xf32>
    %182 = math.exp %181 : vector<8x128xf32>
    %cst_82 = arith.constant 1.000000e+00 : f32
    %183 = vector.broadcast %cst_82 : f32 to vector<8x128xf32>
    %184 = arith.addf %183, %182 : vector<8x128xf32>
    %185 = arith.divf %183, %184 : vector<8x128xf32>
    %186 = vector.extract_strided_slice %173 {offsets = [0, 256], sizes = [8, 128], strides = [1, 1]} : vector<8x512xf32> to vector<8x128xf32>
    %187 = math.tanh %186 : vector<8x128xf32>
    %188 = vector.extract_strided_slice %173 {offsets = [0, 384], sizes = [8, 128], strides = [1, 1]} : vector<8x512xf32> to vector<8x128xf32>
    %189 = arith.negf %188 : vector<8x128xf32>
    %190 = math.exp %189 : vector<8x128xf32>
    %cst_83 = arith.constant 1.000000e+00 : f32
    %191 = vector.broadcast %cst_83 : f32 to vector<8x128xf32>
    %192 = arith.addf %191, %190 : vector<8x128xf32>
    %193 = arith.divf %191, %192 : vector<8x128xf32>
    %194 = arith.mulf %185, %164 : vector<8x128xf32>
    %195 = arith.mulf %179, %187 : vector<8x128xf32>
    %196 = arith.addf %194, %195 : vector<8x128xf32>
    %197 = math.tanh %196 : vector<8x128xf32>
    %198 = arith.mulf %193, %197 : vector<8x128xf32>
    %c4_84 = arith.constant 4 : index
    %c0_85 = arith.constant 0 : index
    %c0_86 = arith.constant 0 : index
    %199 = vector.load %arg13[%c4_84, %c0_85, %c0_86] : memref<5x8x128xf32, #tpu.memory_space<vmem>>, vector<1x8x128xf32>
    %200 = vector.shape_cast %199 : vector<1x8x128xf32> to vector<8x128xf32>
    %201 = vector.shape_cast %198 : vector<8x128xf32> to vector<1x8x128xf32>
    tpu.vector_store %arg13[%c4_84, %c0_85, %c0_86], %201 {strides = array<i32>} : memref<5x8x128xf32, #tpu.memory_space<vmem>>, vector<1x8x128xf32>,
    %c0_87 = arith.constant 0 : index
    %c0_88 = arith.constant 0 : index
    %202 = vector.load %arg6[%c0_87, %c0_88] : memref<1x32xf32, #tpu.memory_space<vmem>>, vector<1x32xf32>
    %203 = vector.shape_cast %202 : vector<1x32xf32> to vector<1x32xf32>
    %204 = vector.broadcast %203 : vector<1x32xf32> to vector<8x32xf32>
    %c0_89 = arith.constant 0 : index
    %c0_90 = arith.constant 0 : index
    %c0_91 = arith.constant 0 : index
    %205 = vector.load %arg13[%c0_89, %c0_90, %c0_91] : memref<5x8x128xf32, #tpu.memory_space<vmem>>, vector<1x8x128xf32>
    %206 = vector.shape_cast %205 : vector<1x8x128xf32> to vector<8x128xf32>
    %c0_92 = arith.constant 0 : index
    %c0_93 = arith.constant 0 : index
    %c0_94 = arith.constant 0 : index
    %207 = vector.load %arg5[%c0_92, %c0_93, %c0_94] : memref<5x128x32xf32, #tpu.memory_space<vmem>>, vector<1x128x32xf32>
    %208 = vector.shape_cast %207 : vector<1x128x32xf32> to vector<128x32xf32>
    %cst_95 = arith.constant dense<0.000000e+00> : vector<8x32xf32>
    %209 = tpu.matmul %206, %208, %cst_95 {dimension_numbers = #tpu.dot_dimension_numbers<[1], [0], [0], [1], [0, 0, 1, 1], [], []>} : vector<8x128xf32>, vector<128x32xf32>, vector<8x32xf32> -> vector<8x32xf32>
    %210 = arith.addf %204, %209 : vector<8x32xf32>
    %c1_96 = arith.constant 1 : index
    %c0_97 = arith.constant 0 : index
    %c0_98 = arith.constant 0 : index
    %211 = vector.load %arg13[%c1_96, %c0_97, %c0_98] : memref<5x8x128xf32, #tpu.memory_space<vmem>>, vector<1x8x128xf32>
    %212 = vector.shape_cast %211 : vector<1x8x128xf32> to vector<8x128xf32>
    %c1_99 = arith.constant 1 : index
    %c0_100 = arith.constant 0 : index
    %c0_101 = arith.constant 0 : index
    %213 = vector.load %arg5[%c1_99, %c0_100, %c0_101] : memref<5x128x32xf32, #tpu.memory_space<vmem>>, vector<1x128x32xf32>
    %214 = vector.shape_cast %213 : vector<1x128x32xf32> to vector<128x32xf32>
    %cst_102 = arith.constant dense<0.000000e+00> : vector<8x32xf32>
    %215 = tpu.matmul %212, %214, %cst_102 {dimension_numbers = #tpu.dot_dimension_numbers<[1], [0], [0], [1], [0, 0, 1, 1], [], []>} : vector<8x128xf32>, vector<128x32xf32>, vector<8x32xf32> -> vector<8x32xf32>
    %216 = arith.addf %210, %215 : vector<8x32xf32>
    %c2_103 = arith.constant 2 : index
    %c0_104 = arith.constant 0 : index
    %c0_105 = arith.constant 0 : index
    %217 = vector.load %arg13[%c2_103, %c0_104, %c0_105] : memref<5x8x128xf32, #tpu.memory_space<vmem>>, vector<1x8x128xf32>
    %218 = vector.shape_cast %217 : vector<1x8x128xf32> to vector<8x128xf32>
    %c2_106 = arith.constant 2 : index
    %c0_107 = arith.constant 0 : index
    %c0_108 = arith.constant 0 : index
    %219 = vector.load %arg5[%c2_106, %c0_107, %c0_108] : memref<5x128x32xf32, #tpu.memory_space<vmem>>, vector<1x128x32xf32>
    %220 = vector.shape_cast %219 : vector<1x128x32xf32> to vector<128x32xf32>
    %cst_109 = arith.constant dense<0.000000e+00> : vector<8x32xf32>
    %221 = tpu.matmul %218, %220, %cst_109 {dimension_numbers = #tpu.dot_dimension_numbers<[1], [0], [0], [1], [0, 0, 1, 1], [], []>} : vector<8x128xf32>, vector<128x32xf32>, vector<8x32xf32> -> vector<8x32xf32>
    %222 = arith.addf %216, %221 : vector<8x32xf32>
    %c3_110 = arith.constant 3 : index
    %c0_111 = arith.constant 0 : index
    %c0_112 = arith.constant 0 : index
    %223 = vector.load %arg13[%c3_110, %c0_111, %c0_112] : memref<5x8x128xf32, #tpu.memory_space<vmem>>, vector<1x8x128xf32>
    %224 = vector.shape_cast %223 : vector<1x8x128xf32> to vector<8x128xf32>
    %c3_113 = arith.constant 3 : index
    %c0_114 = arith.constant 0 : index
    %c0_115 = arith.constant 0 : index
    %225 = vector.load %arg5[%c3_113, %c0_114, %c0_115] : memref<5x128x32xf32, #tpu.memory_space<vmem>>, vector<1x128x32xf32>
    %226 = vector.shape_cast %225 : vector<1x128x32xf32> to vector<128x32xf32>
    %cst_116 = arith.constant dense<0.000000e+00> : vector<8x32xf32>
    %227 = tpu.matmul %224, %226, %cst_116 {dimension_numbers = #tpu.dot_dimension_numbers<[1], [0], [0], [1], [0, 0, 1, 1], [], []>} : vector<8x128xf32>, vector<128x32xf32>, vector<8x32xf32> -> vector<8x32xf32>
    %228 = arith.addf %222, %227 : vector<8x32xf32>
    %c4_117 = arith.constant 4 : index
    %c0_118 = arith.constant 0 : index
    %c0_119 = arith.constant 0 : index
    %229 = vector.load %arg13[%c4_117, %c0_118, %c0_119] : memref<5x8x128xf32, #tpu.memory_space<vmem>>, vector<1x8x128xf32>
    %230 = vector.shape_cast %229 : vector<1x8x128xf32> to vector<8x128xf32>
    %c4_120 = arith.constant 4 : index
    %c0_121 = arith.constant 0 : index
    %c0_122 = arith.constant 0 : index
    %231 = vector.load %arg5[%c4_120, %c0_121, %c0_122] : memref<5x128x32xf32, #tpu.memory_space<vmem>>, vector<1x128x32xf32>
    %232 = vector.shape_cast %231 : vector<1x128x32xf32> to vector<128x32xf32>
    %cst_123 = arith.constant dense<0.000000e+00> : vector<8x32xf32>
    %233 = tpu.matmul %230, %232, %cst_123 {dimension_numbers = #tpu.dot_dimension_numbers<[1], [0], [0], [1], [0, 0, 1, 1], [], []>} : vector<8x128xf32>, vector<128x32xf32>, vector<8x32xf32> -> vector<8x32xf32>
    %234 = arith.addf %228, %233 : vector<8x32xf32>
    %cst_124 = arith.constant 0.000000e+00 : f32
    %235 = vector.broadcast %cst_124 : f32 to vector<8x32xf32>
    %236 = arith.maximumf %234, %235 : vector<8x32xf32>
    %c0_125 = arith.constant 0 : index
    %c0_126 = arith.constant 0 : index
    %237 = vector.load %arg7[%c0_125, %c0_126] : memref<32x32xf32, #tpu.memory_space<vmem>>, vector<32x32xf32>
    %cst_127 = arith.constant dense<0.000000e+00> : vector<8x32xf32>
    %238 = tpu.matmul %236, %237, %cst_127 {dimension_numbers = #tpu.dot_dimension_numbers<[1], [0], [0], [1], [0, 0, 1, 1], [], []>} : vector<8x32xf32>, vector<32x32xf32>, vector<8x32xf32> -> vector<8x32xf32>
    %c0_128 = arith.constant 0 : index
    %c0_129 = arith.constant 0 : index
    %239 = vector.load %arg8[%c0_128, %c0_129] : memref<1x32xf32, #tpu.memory_space<vmem>>, vector<1x32xf32>
    %240 = vector.broadcast %239 : vector<1x32xf32> to vector<8x32xf32>
    %241 = arith.addf %238, %240 : vector<8x32xf32>
    %cst_130 = arith.constant 0.000000e+00 : f32
    %242 = vector.broadcast %cst_130 : f32 to vector<8x32xf32>
    %243 = arith.maximumf %241, %242 : vector<8x32xf32>
    %c0_131 = arith.constant 0 : index
    %c0_132 = arith.constant 0 : index
    %244 = vector.load %arg9[%c0_131, %c0_132] : memref<32x128xf32, #tpu.memory_space<vmem>>, vector<32x128xf32>
    %cst_133 = arith.constant dense<0.000000e+00> : vector<8x128xf32>
    %245 = tpu.matmul %243, %244, %cst_133 {dimension_numbers = #tpu.dot_dimension_numbers<[1], [0], [0], [1], [0, 0, 1, 1], [], []>} : vector<8x32xf32>, vector<32x128xf32>, vector<8x128xf32> -> vector<8x128xf32>
    %c0_134 = arith.constant 0 : index
    %c0_135 = arith.constant 0 : index
    %246 = vector.load %arg10[%c0_134, %c0_135] : memref<1x128xf32, #tpu.memory_space<vmem>>, vector<1x128xf32>
    %247 = vector.broadcast %246 : vector<1x128xf32> to vector<8x128xf32>
    %248 = arith.addf %245, %247 : vector<8x128xf32>
    %cst_136 = arith.constant dense<0xFF800000> : vector<8xf32>
    %249 = vector.multi_reduction <maximumf>, %248, %cst_136 [1] : vector<8x128xf32> to vector<8xf32>
    %250 = vector.shape_cast %249 : vector<8xf32> to vector<8x1xf32>
    %251 = vector.broadcast %250 : vector<8x1xf32> to vector<8x128xf32>
    %252 = arith.subf %248, %251 : vector<8x128xf32>
    %253 = math.exp %252 : vector<8x128xf32>
    %cst_137 = arith.constant dense<0.000000e+00> : vector<8xf32>
    %254 = vector.multi_reduction <add>, %253, %cst_137 [1] : vector<8x128xf32> to vector<8xf32>
    %255 = vector.shape_cast %254 : vector<8xf32> to vector<8x1xf32>
    %256 = tpu.reciprocal %255 {approx = true} : vector<8x1xf32> -> vector<8x1xf32>
    %257 = vector.broadcast %256 : vector<8x1xf32> to vector<8x128xf32>
    %258 = arith.mulf %253, %257 : vector<8x128xf32>
    %259 = arith.truncf %258 : vector<8x128xf32> to vector<8x128xbf16>
    %c0_138 = arith.constant 0 : index
    %c0_139 = arith.constant 0 : index
    %260 = vector.load %arg11[%c0_138, %c0_139] : memref<8x128xbf16, #tpu.memory_space<vmem>>, vector<8x128xbf16>
    tpu.vector_store %arg11[%c0_138, %c0_139], %259 {strides = array<i32>} : memref<8x128xbf16, #tpu.memory_space<vmem>>, vector<8x128xbf16>,
    return
  }
  func.func @transform_0(%arg0: i32) -> (i32, i32, i32) {
    %c0_i32 = arith.constant 0 : i32
    %c0_i32_0 = arith.constant 0 : i32
    %c0_i32_1 = arith.constant 0 : i32
    return %c0_i32, %arg0, %c0_i32_0 : i32, i32, i32
  }
  func.func @transform_1(%arg0: i32) -> (i32, i32) {
    %c0_i32 = arith.constant 0 : i32
    %c0_i32_0 = arith.constant 0 : i32
    %c0_i32_1 = arith.constant 0 : i32
    return %c0_i32, %c0_i32_0 : i32, i32
  }
  func.func @transform_2(%arg0: i32) -> (i32, i32) {
    %c0_i32 = arith.constant 0 : i32
    %c0_i32_0 = arith.constant 0 : i32
    %c0_i32_1 = arith.constant 0 : i32
    return %c0_i32, %c0_i32_0 : i32, i32
  }
  func.func @transform_3(%arg0: i32) -> (i32, i32) {
    %c0_i32 = arith.constant 0 : i32
    %c0_i32_0 = arith.constant 0 : i32
    %c0_i32_1 = arith.constant 0 : i32
    return %c0_i32, %c0_i32_0 : i32, i32
  }
  func.func @transform_4(%arg0: i32) -> (i32, i32, i32) {
    %c0_i32 = arith.constant 0 : i32
    %c0_i32_0 = arith.constant 0 : i32
    %c0_i32_1 = arith.constant 0 : i32
    %c0_i32_2 = arith.constant 0 : i32
    return %c0_i32, %c0_i32_0, %c0_i32_1 : i32, i32, i32
  }
  func.func @transform_5(%arg0: i32) -> (i32, i32) {
    %c0_i32 = arith.constant 0 : i32
    %c0_i32_0 = arith.constant 0 : i32
    %c0_i32_1 = arith.constant 0 : i32
    return %c0_i32, %c0_i32_0 : i32, i32
  }
  func.func @transform_6(%arg0: i32) -> (i32, i32) {
    %c0_i32 = arith.constant 0 : i32
    %c0_i32_0 = arith.constant 0 : i32
    %c0_i32_1 = arith.constant 0 : i32
    return %c0_i32, %c0_i32_0 : i32, i32
  }
  func.func @transform_7(%arg0: i32) -> (i32, i32) {
    %c0_i32 = arith.constant 0 : i32
    %c0_i32_0 = arith.constant 0 : i32
    %c0_i32_1 = arith.constant 0 : i32
    return %c0_i32, %c0_i32_0 : i32, i32
  }
  func.func @transform_8(%arg0: i32) -> (i32, i32) {
    %c0_i32 = arith.constant 0 : i32
    %c0_i32_0 = arith.constant 0 : i32
    %c0_i32_1 = arith.constant 0 : i32
    return %c0_i32, %c0_i32_0 : i32, i32
  }
  func.func @transform_9(%arg0: i32) -> (i32, i32) {
    %c0_i32 = arith.constant 0 : i32
    %c0_i32_0 = arith.constant 0 : i32
    %c0_i32_1 = arith.constant 0 : i32
    return %c0_i32, %c0_i32_0 : i32, i32
  }
  func.func @transform_10(%arg0: i32) -> (i32, i32) {
    %c0_i32 = arith.constant 0 : i32
    %c0_i32_0 = arith.constant 0 : i32
    return %arg0, %c0_i32 : i32, i32
  }
}

</mosaic_0001>

<llo_original>
// kernel: alloc_actor2_forward.1
$region0: #{alloc_actor2_forward.1}
  #allocation0 [shape = 'u32[]', space=smem, size = 0x4, offset = 0x4, fixed_abs, tag = 'smem constant byte address 0x4 - core index']
  #allocation1 [shape = 'u32[144,128]{1,0:T(1,128)}', space=vmem, size = 0x12000, scoped, tag = 'internal scratch']
  #allocation2 [shape = 'f32[5,8,512]{2,1,0:T(8,128)}', space=vmem, size = 0x14000, scoped, tag = 'scratch operand']
  #allocation3 [shape = 'f32[5,8,128]{2,1,0:T(8,128)}', space=vmem, size = 0x5000, scoped, tag = 'scratch operand']
  %s0 = inlined_call_operand.vmem [shape: f32[5,16,16], index: 0, kind: input, shape index: {}]
  %s1 = inlined_call_operand.vmem [shape: f32[16,512], index: 1, kind: input, shape index: {}]
  %s2 = inlined_call_operand.vmem [shape: f32[128,512], index: 2, kind: input, shape index: {}]
  %s3 = inlined_call_operand.vmem [shape: f32[1,512], index: 3, kind: input, shape index: {}]
  %s4 = inlined_call_operand.vmem [shape: f32[5,128,32], index: 4, kind: input, shape index: {}]
  %s5 = inlined_call_operand.vmem [shape: f32[1,32], index: 5, kind: input, shape index: {}]
  %s6 = inlined_call_operand.vmem [shape: f32[32,32], index: 6, kind: input, shape index: {}]
  %s7 = inlined_call_operand.vmem [shape: f32[1,32], index: 7, kind: input, shape index: {}]
  %s8 = inlined_call_operand.vmem [shape: f32[32,128], index: 8, kind: input, shape index: {}]
  %s9 = inlined_call_operand.vmem [shape: f32[1,128], index: 9, kind: input, shape index: {}]
  %s10 = inlined_call_operand.vmem [shape: bf16[16,128], index: 10, kind: output, shape index: {}]
  %s11 = sld [smem:[#allocation0]]
  $region111: #{alloc_actor2_forward.1} parent=0
    _
  %s13 = ssub.s32 1, %s11
  %s14 = scalar_select 0, %s13, %s11
  $region1: #{alloc_actor2_forward.1} parent=0
    #allocation4 [shape = 'u8[40960]{0}', space=vmem, size = 0xa000, scoped, tag = 'input window, operand 0']
    loop: start=0, step=1, limit=4
    $region2: #{alloc_actor2_forward.1} parent=1 // loop_pre_header
      _
    $region3: #{alloc_actor2_forward.1} parent=1 // loop_header
      %s16 = sphi 0, %s20
      %p17 = scmp.ge.s32.totalorder %s16, 4
      %s26 = sphi 0, %s28
      %s29 = sphi 0, %s26
      %s30 = sphi 0, %s29
      %s46 = sphi 0, %s30
      %s50 = sphi 0, %s50
      %s52 = sphi 0, %s50
      %s53 = sphi 0, %s52
      %s67 = sphi 0, %s53
      %s71 = sphi 0, %s71
      %s73 = sphi 0, %s71
      %s74 = sphi 0, %s73
      %s88 = sphi 0, %s74
      %s92 = sphi 0, %s92
      %s94 = sphi 0, %s92
      %s95 = sphi 0, %s94
      %s109 = sphi 0, %s95
      %s113 = sphi 0, %s113
      %s115 = sphi 0, %s113
      %s116 = sphi 0, %s115
      %s130 = sphi 0, %s116
      %s134 = sphi 0, %s134
      %s136 = sphi 0, %s134
      %s137 = sphi 0, %s136
      %s151 = sphi 0, %s137
      %s155 = sphi 0, %s155
      %s157 = sphi 0, %s155
      %s158 = sphi 0, %s157
      %s172 = sphi 0, %s158
      %s176 = sphi 0, %s176
      %s178 = sphi 0, %s176
      %s179 = sphi 0, %s178
      %s193 = sphi 0, %s179
      %s197 = sphi 0, %s197
      %s199 = sphi 0, %s197
      %s200 = sphi 0, %s199
      %s214 = sphi 0, %s200
      %s218 = sphi 0, %s218
      %s220 = sphi 0, %s218
      %s221 = sphi 0, %s220
      %s235 = sphi 0, %s221
      %s241 = sphi 0, %s243
      %s244 = sphi 0, %s241
      %s245 = sphi 0, %s244
      %s261 = sphi 0, %s245
    $region4: #{alloc_actor2_forward.1} parent=1 // loop_header_branch
      %19 = sbr.rel (%p17) target = $region8
    $region5: #{alloc_actor2_forward.1} parent=1 // loop_body
      %s21 = ssub.s32 %s16, 1
      %s22 = ssub.s32 %s16, 2
      %s23 = sadd.s32 %s16, 1
      %s24 = ssub.s32 %s16, %s23
      %p25 = scmp.eq.s32.totalorder %s24, 0
      %s27 = sadd.s32 %s26, 1
      %s28 = scalar_select %p25, %s26, %s27
      %p31 = pneg %p25
      %p32 = scmp.eq.s32.totalorder %s16, 1
      %p33 = por %p31, %p32
      %p34 = scmp.ne.s32.totalorder %s26, %s29
      %p35 = scmp.eq.s32.totalorder %s16, 0
      %p36 = por %p34, %p35
      %p37 = scmp.ne.s32.totalorder %s26, %s29
      %p38 = scmp.eq.s32.totalorder %s21, 1
      %p39 = por %p37, %p38
      %p40 = scmp.ne.s32.totalorder %s29, %s30
      %p41 = scmp.eq.s32.totalorder %s21, 0
      %p42 = por %p40, %p41
      %p43 = scmp.ne.s32.totalorder %s29, %s30
      %p44 = scmp.eq.s32.totalorder %s22, 1
      %p45 = por %p43, %p44
      %p47 = scmp.ne.s32.totalorder %s30, %s46
      %p48 = scmp.eq.s32.totalorder %s22, 0
      %p49 = por %p47, %p48
      %s51 = sadd.s32 %s50, 1
      %p54 = scmp.eq.s32.totalorder %s16, 1
      %p55 = scmp.ne.s32.totalorder %s50, %s52
      %p56 = scmp.eq.s32.totalorder %s16, 0
      %p57 = por %p55, %p56
      %p58 = scmp.ne.s32.totalorder %s50, %s52
      %p59 = scmp.eq.s32.totalorder %s21, 1
      %p60 = por %p58, %p59
      %p61 = scmp.ne.s32.totalorder %s52, %s53
      %p62 = scmp.eq.s32.totalorder %s21, 0
      %p63 = por %p61, %p62
      %p64 = scmp.ne.s32.totalorder %s52, %s53
      %p65 = scmp.eq.s32.totalorder %s22, 1
      %p66 = por %p64, %p65
      %p68 = scmp.ne.s32.totalorder %s53, %s67
      %p69 = scmp.eq.s32.totalorder %s22, 0
      %p70 = por %p68, %p69
      %s72 = sadd.s32 %s71, 1
      %p75 = scmp.eq.s32.totalorder %s16, 1
      %p76 = scmp.ne.s32.totalorder %s71, %s73
      %p77 = scmp.eq.s32.totalorder %s16, 0
      %p78 = por %p76, %p77
      %p79 = scmp.ne.s32.totalorder %s71, %s73
      %p80 = scmp.eq.s32.totalorder %s21, 1
      %p81 = por %p79, %p80
      %p82 = scmp.ne.s32.totalorder %s73, %s74
      %p83 = scmp.eq.s32.totalorder %s21, 0
      %p84 = por %p82, %p83
      %p85 = scmp.ne.s32.totalorder %s73, %s74
      %p86 = scmp.eq.s32.totalorder %s22, 1
      %p87 = por %p85, %p86
      %p89 = scmp.ne.s32.totalorder %s74, %s88
      %p90 = scmp.eq.s32.totalorder %s22, 0
      %p91 = por %p89, %p90
      %s93 = sadd.s32 %s92, 1
      %p96 = scmp.eq.s32.totalorder %s16, 1
      %p97 = scmp.ne.s32.totalorder %s92, %s94
      %p98 = scmp.eq.s32.totalorder %s16, 0
      %p99 = por %p97, %p98
      %p100 = scmp.ne.s32.totalorder %s92, %s94
      %p101 = scmp.eq.s32.totalorder %s21, 1
      %p102 = por %p100, %p101
      %p103 = scmp.ne.s32.totalorder %s94, %s95
      %p104 = scmp.eq.s32.totalorder %s21, 0
      %p105 = por %p103, %p104
      %p106 = scmp.ne.s32.totalorder %s94, %s95
      %p107 = scmp.eq.s32.totalorder %s22, 1
      %p108 = por %p106, %p107
      %p110 = scmp.ne.s32.totalorder %s95, %s109
      %p111 = scmp.eq.s32.totalorder %s22, 0
      %p112 = por %p110, %p111
      %s114 = sadd.s32 %s113, 1
      %p117 = scmp.eq.s32.totalorder %s16, 1
      %p118 = scmp.ne.s32.totalorder %s113, %s115
      %p119 = scmp.eq.s32.totalorder %s16, 0
      %p120 = por %p118, %p119
      %p121 = scmp.ne.s32.totalorder %s113, %s115
      %p122 = scmp.eq.s32.totalorder %s21, 1
      %p123 = por %p121, %p122
      %p124 = scmp.ne.s32.totalorder %s115, %s116
      %p125 = scmp.eq.s32.totalorder %s21, 0
      %p126 = por %p124, %p125
      %p127 = scmp.ne.s32.totalorder %s115, %s116
      %p128 = scmp.eq.s32.totalorder %s22, 1
      %p129 = por %p127, %p128
      %p131 = scmp.ne.s32.totalorder %s116, %s130
      %p132 = scmp.eq.s32.totalorder %s22, 0
      %p133 = por %p131, %p132
      %s135 = sadd.s32 %s134, 1
      %p138 = scmp.eq.s32.totalorder %s16, 1
      %p139 = scmp.ne.s32.totalorder %s134, %s136
      %p140 = scmp.eq.s32.totalorder %s16, 0
      %p141 = por %p139, %p140
      %p142 = scmp.ne.s32.totalorder %s134, %s136
      %p143 = scmp.eq.s32.totalorder %s21, 1
      %p144 = por %p142, %p143
      %p145 = scmp.ne.s32.totalorder %s136, %s137
      %p146 = scmp.eq.s32.totalorder %s21, 0
      %p147 = por %p145, %p146
      %p148 = scmp.ne.s32.totalorder %s136, %s137
      %p149 = scmp.eq.s32.totalorder %s22, 1
      %p150 = por %p148, %p149
      %p152 = scmp.ne.s32.totalorder %s137, %s151
      %p153 = scmp.eq.s32.totalorder %s22, 0
      %p154 = por %p152, %p153
      %s156 = sadd.s32 %s155, 1
      %p159 = scmp.eq.s32.totalorder %s16, 1
      %p160 = scmp.ne.s32.totalorder %s155, %s157
      %p161 = scmp.eq.s32.totalorder %s16, 0
      %p162 = por %p160, %p161
      %p163 = scmp.ne.s32.totalorder %s155, %s157
      %p164 = scmp.eq.s32.totalorder %s21, 1
      %p165 = por %p163, %p164
      %p166 = scmp.ne.s32.totalorder %s157, %s158
      %p167 = scmp.eq.s32.totalorder %s21, 0
      %p168 = por %p166, %p167
      %p169 = scmp.ne.s32.totalorder %s157, %s158
      %p170 = scmp.eq.s32.totalorder %s22, 1
      %p171 = por %p169, %p170
      %p173 = scmp.ne.s32.totalorder %s158, %s172
      %p174 = scmp.eq.s32.totalorder %s22, 0
      %p175 = por %p173, %p174
      %s177 = sadd.s32 %s176, 1
      %p180 = scmp.eq.s32.totalorder %s16, 1
      %p181 = scmp.ne.s32.totalorder %s176, %s178
      %p182 = scmp.eq.s32.totalorder %s16, 0
      %p183 = por %p181, %p182
      %p184 = scmp.ne.s32.totalorder %s176, %s178
      %p185 = scmp.eq.s32.totalorder %s21, 1
      %p186 = por %p184, %p185
      %p187 = scmp.ne.s32.totalorder %s178, %s179
      %p188 = scmp.eq.s32.totalorder %s21, 0
      %p189 = por %p187, %p188
      %p190 = scmp.ne.s32.totalorder %s178, %s179
      %p191 = scmp.eq.s32.totalorder %s22, 1
      %p192 = por %p190, %p191
      %p194 = scmp.ne.s32.totalorder %s179, %s193
      %p195 = scmp.eq.s32.totalorder %s22, 0
      %p196 = por %p194, %p195
      %s198 = sadd.s32 %s197, 1
      %p201 = scmp.eq.s32.totalorder %s16, 1
      %p202 = scmp.ne.s32.totalorder %s197, %s199
      %p203 = scmp.eq.s32.totalorder %s16, 0
      %p204 = por %p202, %p203
      %p205 = scmp.ne.s32.totalorder %s197, %s199
      %p206 = scmp.eq.s32.totalorder %s21, 1
      %p207 = por %p205, %p206
      %p208 = scmp.ne.s32.totalorder %s199, %s200
      %p209 = scmp.eq.s32.totalorder %s21, 0
      %p210 = por %p208, %p209
      %p211 = scmp.ne.s32.totalorder %s199, %s200
      %p212 = scmp.eq.s32.totalorder %s22, 1
      %p213 = por %p211, %p212
      %p215 = scmp.ne.s32.totalorder %s200, %s214
      %p216 = scmp.eq.s32.totalorder %s22, 0
      %p217 = por %p215, %p216
      %s219 = sadd.s32 %s218, 1
      %p222 = scmp.eq.s32.totalorder %s16, 1
      %p223 = scmp.ne.s32.totalorder %s218, %s220
      %p224 = scmp.eq.s32.totalorder %s16, 0
      %p225 = por %p223, %p224
      %p226 = scmp.ne.s32.totalorder %s218, %s220
      %p227 = scmp.eq.s32.totalorder %s21, 1
      %p228 = por %p226, %p227
      %p229 = scmp.ne.s32.totalorder %s220, %s221
      %p230 = scmp.eq.s32.totalorder %s21, 0
      %p231 = por %p229, %p230
      %p232 = scmp.ne.s32.totalorder %s220, %s221
      %p233 = scmp.eq.s32.totalorder %s22, 1
      %p234 = por %p232, %p233
      %p236 = scmp.ne.s32.totalorder %s221, %s235
      %p237 = scmp.eq.s32.totalorder %s22, 0
      %p238 = por %p236, %p237
      %s239 = ssub.s32 %s16, %s23
      %p240 = scmp.eq.s32.totalorder %s239, 0
      %s242 = sadd.s32 %s241, 1
      %s243 = scalar_select %p240, %s241, %s242
      %p246 = pneg %p240
      %p247 = scmp.eq.s32.totalorder %s16, 1
      %p248 = por %p246, %p247
      %p249 = scmp.ne.s32.totalorder %s241, %s244
      %p250 = scmp.eq.s32.totalorder %s16, 0
      %p251 = por %p249, %p250
      %p252 = scmp.ne.s32.totalorder %s241, %s244
      %p253 = scmp.eq.s32.totalorder %s21, 1
      %p254 = por %p252, %p253
      %p255 = scmp.ne.s32.totalorder %s244, %s245
      %p256 = scmp.eq.s32.totalorder %s21, 0
      %p257 = por %p255, %p256
      %p258 = scmp.ne.s32.totalorder %s244, %s245
      %p259 = scmp.eq.s32.totalorder %s22, 1
      %p260 = por %p258, %p259
      %p262 = scmp.ne.s32.totalorder %s245, %s261
      %p263 = scmp.eq.s32.totalorder %s22, 0
      %p264 = por %p262, %p263
      %p265 = scmp.le.s32.totalorder 1, %s16
      %p266 = scmp.lt.s32.totalorder %s16, 3
      %p267 = pnand %p265, %p266
      %p268 = pneg %p267
      // Predicated region
      $region9: #{alloc_actor2_forward.1} parent=5 // pred_check
        _
      $region10: #{alloc_actor2_forward.1} parent=5 // pred_check_branch
        %270 = sbr.rel (%p267) target = $region12
      $region11: #{alloc_actor2_forward.1} parent=5 // pred_region
        %s271 = ssub.s32 %s16, 1
        // Predicated region
        $region13: #{alloc_actor2_forward.1} parent=11 // pred_check
          %p272 = pneg %p63
        $region14: #{alloc_actor2_forward.1} parent=11 // pred_check_branch
          %274 = sbr.rel (%p272) target = $region16
        $region15: #{alloc_actor2_forward.1} parent=11 // pred_region
          _
        $region16: #{alloc_actor2_forward.1} parent=11 // pred_fallthru
          _
        // Predicated region
        $region17: #{alloc_actor2_forward.1} parent=11 // pred_check
          %p275 = pneg %p84
        $region18: #{alloc_actor2_forward.1} parent=11 // pred_check_branch
          %277 = sbr.rel (%p275) target = $region20
        $region19: #{alloc_actor2_forward.1} parent=11 // pred_region
          _
        $region20: #{alloc_actor2_forward.1} parent=11 // pred_fallthru
          _
        // Predicated region
        $region21: #{alloc_actor2_forward.1} parent=11 // pred_check
          %p278 = pneg %p105
        $region22: #{alloc_actor2_forward.1} parent=11 // pred_check_branch
          %280 = sbr.rel (%p278) target = $region24
        $region23: #{alloc_actor2_forward.1} parent=11 // pred_region
          _
        $region24: #{alloc_actor2_forward.1} parent=11 // pred_fallthru
          _
        // Predicated region
        $region25: #{alloc_actor2_forward.1} parent=11 // pred_check
          %p281 = pneg %p126
        $region26: #{alloc_actor2_forward.1} parent=11 // pred_check_branch
          %283 = sbr.rel (%p281) target = $region28
        $region27: #{alloc_actor2_forward.1} parent=11 // pred_region
          _
        $region28: #{alloc_actor2_forward.1} parent=11 // pred_fallthru
          _
        // Predicated region
        $region29: #{alloc_actor2_forward.1} parent=11 // pred_check
          %p284 = pneg %p147
        $region30: #{alloc_actor2_forward.1} parent=11 // pred_check_branch
          %286 = sbr.rel (%p284) target = $region32
        $region31: #{alloc_actor2_forward.1} parent=11 // pred_region
          _
        $region32: #{alloc_actor2_forward.1} parent=11 // pred_fallthru
          _
        // Predicated region
        $region33: #{alloc_actor2_forward.1} parent=11 // pred_check
          %p287 = pneg %p168
        $region34: #{alloc_actor2_forward.1} parent=11 // pred_check_branch
          %289 = sbr.rel (%p287) target = $region36
        $region35: #{alloc_actor2_forward.1} parent=11 // pred_region
          _
        $region36: #{alloc_actor2_forward.1} parent=11 // pred_fallthru
          _
        // Predicated region
        $region37: #{alloc_actor2_forward.1} parent=11 // pred_check
          %p290 = pneg %p189
        $region38: #{alloc_actor2_forward.1} parent=11 // pred_check_branch
          %292 = sbr.rel (%p290) target = $region40
        $region39: #{alloc_actor2_forward.1} parent=11 // pred_region
          _
        $region40: #{alloc_actor2_forward.1} parent=11 // pred_fallthru
          _
        // Predicated region
        $region41: #{alloc_actor2_forward.1} parent=11 // pred_check
          %p293 = pneg %p210
        $region42: #{alloc_actor2_forward.1} parent=11 // pred_check_branch
          %295 = sbr.rel (%p293) target = $region44
        $region43: #{alloc_actor2_forward.1} parent=11 // pred_region
          _
        $region44: #{alloc_actor2_forward.1} parent=11 // pred_fallthru
          _
        // Predicated region
        $region45: #{alloc_actor2_forward.1} parent=11 // pred_check
          %p296 = pneg %p231
        $region46: #{alloc_actor2_forward.1} parent=11 // pred_check_branch
          %298 = sbr.rel (%p296) target = $region48
        $region47: #{alloc_actor2_forward.1} parent=11 // pred_region
          _
        $region48: #{alloc_actor2_forward.1} parent=11 // pred_fallthru
          _
      $region12: #{alloc_actor2_forward.1} parent=5 // pred_fallthru
        _
      %p299 = scmp.lt.s32.totalorder %s16, 2
      // Predicated region
      $region49: #{alloc_actor2_forward.1} parent=5 // pred_check
        %p300 = pneg %p299
      $region50: #{alloc_actor2_forward.1} parent=5 // pred_check_branch
        %302 = sbr.rel (%p300) target = $region52
      $region51: #{alloc_actor2_forward.1} parent=5 // pred_region
        // Predicated region
        $region53: #{alloc_actor2_forward.1} parent=51 // pred_check
          %p303 = pneg %p36
        $region54: #{alloc_actor2_forward.1} parent=51 // pred_check_branch
          %305 = sbr.rel (%p303) target = $region56
        $region55: #{alloc_actor2_forward.1} parent=51 // pred_region
          %s306 = sand.u32 %s26, 1
          %s307 = sand.u32 %s26, 1
          %s308 = smul.addr %s307, 40
          %s309 = scalar_lea.vmem [#allocation4], %s308
          %s310 = smul.addr %s16, 8
          %s311 = scalar_lea.vmem %s0, %s310
          // Predicated region
          $region57: #{alloc_actor2_forward.1} parent=55 // pred_check
            _
          $region58: #{alloc_actor2_forward.1} parent=55 // pred_check_branch
            %313 = sbr.rel (0) target = $region60
          $region59: #{alloc_actor2_forward.1} parent=55 // pred_region
            // Predicated region
            $region61: #{alloc_actor2_forward.1} parent=59 // pred_check
              _
            $region62: #{alloc_actor2_forward.1} parent=59 // pred_check_branch
              %315 = sbr.rel (0) target = $region64
            $region63: #{alloc_actor2_forward.1} parent=59 // pred_region
              // Predicated region
              $region76: #{alloc_actor2_forward.1} parent=63 // pred_check
                _
              $region77: #{alloc_actor2_forward.1} parent=63 // pred_check_branch
                %339 = sbr.rel (0) target = $region79
              $region78: #{alloc_actor2_forward.1} parent=63 // pred_region
                loop: start=0, step=1, limit=1
                $region80: #{alloc_actor2_forward.1} parent=78 // loop_pre_header
                  _
                $region81: #{alloc_actor2_forward.1} parent=78 // loop_header
                  %s341 = sphi 0, %s345
                  %p342 = scmp.ge.s32.totalorder %s341, 1
                  %s346 = sphi %s311, %s311
                  %s347 = sphi %s309, %s309
                $region82: #{alloc_actor2_forward.1} parent=78 // loop_header_branch
                  %344 = sbr.rel (%p342) target = $region86
                $region83: #{alloc_actor2_forward.1} parent=78 // loop_body
                  %v348 = vld [vmem:[%s346] sm:$0xff]
                  %349 = vst [vmem:[%s347] sm:$0xff] %v348
                  %v350 = vld [vmem:[%s346 + $0x10] sm:$0xff]
                  %351 = vst [vmem:[%s347 + $0x8] sm:$0xff] %v350
                  %v352 = vld [vmem:[%s346 + $0x20] sm:$0xff]
                  %353 = vst [vmem:[%s347 + $0x10] sm:$0xff] %v352
                  %v354 = vld [vmem:[%s346 + $0x30] sm:$0xff]
                  %355 = vst [vmem:[%s347 + $0x18] sm:$0xff] %v354
                  %v356 = vld [vmem:[%s346 + $0x40] sm:$0xff]
                  %357 = vst [vmem:[%s347 + $0x20] sm:$0xff] %v356
                $region84: #{alloc_actor2_forward.1} parent=78 // loop_footer
                  %s345 = sadd.s32 1, %s341
                $region85: #{alloc_actor2_forward.1} parent=78 // loop_footer_branch
                  %340 = sbr.rel target = $region81
                $region86: #{alloc_actor2_forward.1} parent=78 // loop_exit
                  _
              $region79: #{alloc_actor2_forward.1} parent=63 // pred_fallthru
                _
              // Predicated region
              $region87: #{alloc_actor2_forward.1} parent=63 // pred_check
                _
              $region88: #{alloc_actor2_forward.1} parent=63 // pred_check_branch
                %359 = sbr.rel target = $region90
              $region89: #{alloc_actor2_forward.1} parent=63 // pred_region
                _
              $region90: #{alloc_actor2_forward.1} parent=63 // pred_fallthru
                _
            $region64: #{alloc_actor2_forward.1} parent=59 // pred_fallthru
              _
            // Predicated region
            $region65: #{alloc_actor2_forward.1} parent=59 // pred_check
              _
            $region66: #{alloc_actor2_forward.1} parent=59 // pred_check_branch
              %317 = sbr.rel target = $region68
            $region67: #{alloc_actor2_forward.1} parent=59 // pred_region
              %s319 = ssub.s32 256, 1
              loop: start=0, step=1, limit=1
              $region69: #{alloc_actor2_forward.1} parent=67 // loop_pre_header
                _
              $region70: #{alloc_actor2_forward.1} parent=67 // loop_header
                %s321 = sphi 0, %s325
                %p322 = scmp.ge.s32.totalorder %s321, 1
                %s326 = sphi %s311, %s311
                %s327 = sphi %s309, %s309
              $region71: #{alloc_actor2_forward.1} parent=67 // loop_header_branch
                %324 = sbr.rel (%p322) target = $region75
              $region72: #{alloc_actor2_forward.1} parent=67 // loop_body
                %v328 = vld [vmem:[%s326] sm:%s319]
                %329 = vst [vmem:[%s327] sm:%s319] %v328
                %v330 = vld [vmem:[%s326 + $0x10] sm:%s319]
                %331 = vst [vmem:[%s327 + $0x8] sm:%s319] %v330
                %v332 = vld [vmem:[%s326 + $0x20] sm:%s319]
                %333 = vst [vmem:[%s327 + $0x10] sm:%s319] %v332
                %v334 = vld [vmem:[%s326 + $0x30] sm:%s319]
                %335 = vst [vmem:[%s327 + $0x18] sm:%s319] %v334
                %v336 = vld [vmem:[%s326 + $0x40] sm:%s319]
                %337 = vst [vmem:[%s327 + $0x20] sm:%s319] %v336
              $region73: #{alloc_actor2_forward.1} parent=67 // loop_footer
                %s325 = sadd.s32 1, %s321
              $region74: #{alloc_actor2_forward.1} parent=67 // loop_footer_branch
                %320 = sbr.rel target = $region70
              $region75: #{alloc_actor2_forward.1} parent=67 // loop_exit
                _
            $region68: #{alloc_actor2_forward.1} parent=59 // pred_fallthru
              _
          $region60: #{alloc_actor2_forward.1} parent=55 // pred_fallthru
            _
          %360 = vnop
        $region56: #{alloc_actor2_forward.1} parent=51 // pred_fallthru
          _
      $region52: #{alloc_actor2_forward.1} parent=5 // pred_fallthru
        _
      %p361 = scmp.le.s32.totalorder 1, %s16
      %p362 = scmp.lt.s32.totalorder %s16, 3
      %p363 = pnand %p361, %p362
      %p364 = pneg %p363
      // Predicated region
      $region91: #{alloc_actor2_forward.1} parent=5 // pred_check
        _
      $region92: #{alloc_actor2_forward.1} parent=5 // pred_check_branch
        %366 = sbr.rel (%p363) target = $region94
      $region93: #{alloc_actor2_forward.1} parent=5 // pred_region
        %s367 = ssub.s32 %s16, 1
        %s368 = sand.u32 %s29, 1
        %s369 = sand.u32 %s29, 1
        %s370 = smul.addr %s369, 40
        %s371 = scalar_lea.vmem [#allocation4], %s370
        // Predicated region
        $region95: #{alloc_actor2_forward.1} parent=93 // pred_check
          %p372 = pneg %p42
        $region96: #{alloc_actor2_forward.1} parent=93 // pred_check_branch
          %374 = sbr.rel (%p372) target = $region98
        $region97: #{alloc_actor2_forward.1} parent=93 // pred_region
          _
        $region98: #{alloc_actor2_forward.1} parent=93 // pred_fallthru
          _
        %s375 = sand.u32 %s29, 1
        %s376 = sand.u32 %s29, 1
        %s377 = smul.addr %s376, 40
        %s378 = scalar_lea.vmem [#allocation4], %s377
        %p379 = pneg %p42
        %p380 = pneg %p39
        %p381 = pneg %p63
        %p382 = pneg %p60
        %p383 = pneg %p84
        %p384 = pneg %p81
        %p385 = pneg %p105
        %p386 = pneg %p102
        %p387 = pneg %p126
        %p388 = pneg %p123
        %p389 = pneg %p147
        %p390 = pneg %p144
        %p391 = pneg %p168
        %p392 = pneg %p165
        %p393 = pneg %p189
        %p394 = pneg %p186
        %p395 = pneg %p210
        %p396 = pneg %p207
        %p397 = pneg %p231
        %p398 = pneg %p228
        %p399 = pneg %p257
        %p400 = pneg %p254
        %p401 = scmp.lt.s32.totalorder %s21, 1
        %s402 = scalar_select %p401, %s21, 1
        %s403 = smul.addr %s402, 4
        %s404 = scalar_lea.vmem %s10, %s403
        %p405 = scmp.lt.s32.totalorder %s21, 1
        %s406 = scalar_select %p405, %s21, 1
        %s407 = smul.addr %s406, 4
        %s408 = scalar_lea.vmem %s10, %s407
        %v409 = vld [vmem:[%s1] sm:$0xff]
        %v410 = vld [vmem:[%s1 + $0x8] sm:$0xff]
        %v411 = vld [vmem:[%s1 + $0x10] sm:$0xff]
        %v412 = vld [vmem:[%s1 + $0x18] sm:$0xff]
        %v413 = vld [vmem:[%s1 + $0x20] sm:$0xff]
        %v414 = vld [vmem:[%s1 + $0x28] sm:$0xff]
        %v415 = vld [vmem:[%s1 + $0x30] sm:$0xff]
        %v416 = vld [vmem:[%s1 + $0x38] sm:$0xff]
        %v417 = vld [vmem:[%s3] sm:$0xf]
        %v419 = vlaneseq
        %v420 = vshrl.u32 %v419, 7
        %v421 = vsub.s32 0, %v420
        %v422 = vrot.slane %v417, %v421
        %v423 = vlaneseq
        %v424 = vshrl.u32 %v423, 7
        %v425 = vsub.s32 1, %v424
        %v426 = vrot.slane %v417, %v425
        %v427 = vlaneseq
        %v428 = vshrl.u32 %v427, 7
        %v429 = vsub.s32 2, %v428
        %v430 = vrot.slane %v417, %v429
        %v431 = vlaneseq
        %v432 = vshrl.u32 %v431, 7
        %v433 = vsub.s32 3, %v432
        %v434 = vrot.slane %v417, %v433
        %v439 = vld [vmem:[%s371] sm:$0xff]
        %vm440 = vcmask 130048
        %v442 = vsel %vm440, %v439, 0
        %444 = vmatprep.subr.mxu0 0.0
        %445 = vmatpush1.msra.mxu0 0.0
        %446 = vmatprep.subr.mxu0 0.0
        %447 = vmatpush1.msra.mxu0 0.0
        %448 = vmatprep.subr.mxu0 0.0
        %449 = vmatpush1.msra.mxu0 0.0
        %450 = vmatprep.subr.mxu0 0.0
        %451 = vmatpush1.msra.mxu0 0.0
        %452 = vmatprep.subr.mxu0 0.0
        %453 = vmatpush1.msra.mxu0 0.0
        %454 = vmatprep.subr.mxu0 0.0
        %455 = vmatpush1.msra.mxu0 0.0
        %456 = vmatprep.subr.mxu0 0.0
        %457 = vmatpush1.msra.mxu0 0.0
        %458 = vmatprep.subr.mxu0 0.0
        %459 = vmatpush1.msra.mxu0 0.0
        %460 = vmatprep.subr.mxu0 0.0
        %461 = vmatpush1.msra.mxu0 0.0
        %462 = vmatprep.subr.mxu0 0.0
        %463 = vmatpush1.msra.mxu0 0.0
        %464 = vmatprep.subr.mxu0 0.0
        %465 = vmatpush1.msra.mxu0 0.0
        %466 = vmatprep.subr.mxu0 0.0
        %467 = vmatpush1.msra.mxu0 0.0
        %468 = vmatprep.subr.mxu0 0.0
        %469 = vmatpush1.msra.mxu0 0.0
        %470 = vmatprep.subr.mxu0 0.0
        %471 = vmatpush1.msra.mxu0 0.0
        %472 = vmatprep.subr.mxu0 %v414
        %473 = vmatpush1.msra.mxu0 %v413
        %474 = vmatprep.subr.mxu0 %v410
        %475 = vmatpush1.msra.mxu0 %v409
        %476 = vmatprep.subr.mxu0 0.0
        %477 = vmatpush2.msra.mxu0 0.0
        %478 = vmatprep.subr.mxu0 0.0
        %479 = vmatpush2.msra.mxu0 0.0
        %480 = vmatprep.subr.mxu0 0.0
        %481 = vmatpush2.msra.mxu0 0.0
        %482 = vmatprep.subr.mxu0 0.0
        %483 = vmatpush2.msra.mxu0 0.0
        %484 = vmatprep.subr.mxu0 0.0
        %485 = vmatpush2.msra.mxu0 0.0
        %486 = vmatprep.subr.mxu0 0.0
        %487 = vmatpush2.msra.mxu0 0.0
        %488 = vmatprep.subr.mxu0 0.0
        %489 = vmatpush2.msra.mxu0 0.0
        %490 = vmatprep.subr.mxu0 0.0
        %491 = vmatpush2.msra.mxu0 0.0
        %492 = vmatprep.subr.mxu0 0.0
        %493 = vmatpush2.msra.mxu0 0.0
        %494 = vmatprep.subr.mxu0 0.0
        %495 = vmatpush2.msra.mxu0 0.0
        %496 = vmatprep.subr.mxu0 0.0
        %497 = vmatpush2.msra.mxu0 0.0
        %498 = vmatprep.subr.mxu0 0.0
        %499 = vmatpush2.msra.mxu0 0.0
        %500 = vmatprep.subr.mxu0 0.0
        %501 = vmatpush2.msra.mxu0 0.0
        %502 = vmatprep.subr.mxu0 0.0
        %503 = vmatpush2.msra.mxu0 0.0
        %504 = vmatprep.subr.mxu0 0.0
        %505 = vmatpush2.msra.mxu0 0.0
        %506 = vmatprep.subr.mxu0 0.0
        %507 = vmatpush2.msra.mxu0 0.0
        %508 = vmatprep.mubr.f32.mxu0 0.0
        %509 = vmatmul.mubr.f32.gmra.mxu0 %v442
        %v510 = vpop.f32.mrf.mxu0
        %v511 = vadd.f32 %v422, %v510
        %v512 = vpop.f32.mrf.mxu0
        %v513 = vadd.f32 %v426, %v512
        %514 = vdwg.mxu0
        %515 = vmatprep.subr.mxu0 0.0
        %516 = vmatpush1.msra.mxu0 0.0
        %517 = vmatprep.subr.mxu0 0.0
        %518 = vmatpush1.msra.mxu0 0.0
        %519 = vmatprep.subr.mxu0 0.0
        %520 = vmatpush1.msra.mxu0 0.0
        %521 = vmatprep.subr.mxu0 0.0
        %522 = vmatpush1.msra.mxu0 0.0
        %523 = vmatprep.subr.mxu0 0.0
        %524 = vmatpush1.msra.mxu0 0.0
        %525 = vmatprep.subr.mxu0 0.0
        %526 = vmatpush1.msra.mxu0 0.0
        %527 = vmatprep.subr.mxu0 0.0
        %528 = vmatpush1.msra.mxu0 0.0
        %529 = vmatprep.subr.mxu0 0.0
        %530 = vmatpush1.msra.mxu0 0.0
        %531 = vmatprep.subr.mxu0 0.0
        %532 = vmatpush1.msra.mxu0 0.0
        %533 = vmatprep.subr.mxu0 0.0
        %534 = vmatpush1.msra.mxu0 0.0
        %535 = vmatprep.subr.mxu0 0.0
        %536 = vmatpush1.msra.mxu0 0.0
        %537 = vmatprep.subr.mxu0 0.0
        %538 = vmatpush1.msra.mxu0 0.0
        %539 = vmatprep.subr.mxu0 0.0
        %540 = vmatpush1.msra.mxu0 0.0
        %541 = vmatprep.subr.mxu0 0.0
        %542 = vmatpush1.msra.mxu0 0.0
        %543 = vmatprep.subr.mxu0 %v416
        %544 = vmatpush1.msra.mxu0 %v415
        %545 = vmatprep.subr.mxu0 %v412
        %546 = vmatpush1.msra.mxu0 %v411
        %547 = vmatprep.subr.mxu0 0.0
        %548 = vmatpush2.msra.mxu0 0.0
        %549 = vmatprep.subr.mxu0 0.0
        %550 = vmatpush2.msra.mxu0 0.0
        %551 = vmatprep.subr.mxu0 0.0
        %552 = vmatpush2.msra.mxu0 0.0
        %553 = vmatprep.subr.mxu0 0.0
        %554 = vmatpush2.msra.mxu0 0.0
        %555 = vmatprep.subr.mxu0 0.0
        %556 = vmatpush2.msra.mxu0 0.0
        %557 = vmatprep.subr.mxu0 0.0
        %558 = vmatpush2.msra.mxu0 0.0
        %559 = vmatprep.subr.mxu0 0.0
        %560 = vmatpush2.msra.mxu0 0.0
        %561 = vmatprep.subr.mxu0 0.0
        %562 = vmatpush2.msra.mxu0 0.0
        %563 = vmatprep.subr.mxu0 0.0
        %564 = vmatpush2.msra.mxu0 0.0
        %565 = vmatprep.subr.mxu0 0.0
        %566 = vmatpush2.msra.mxu0 0.0
        %567 = vmatprep.subr.mxu0 0.0
        %568 = vmatpush2.msra.mxu0 0.0
        %569 = vmatprep.subr.mxu0 0.0
        %570 = vmatpush2.msra.mxu0 0.0
        %571 = vmatprep.subr.mxu0 0.0
        %572 = vmatpush2.msra.mxu0 0.0
        %573 = vmatprep.subr.mxu0 0.0
        %574 = vmatpush2.msra.mxu0 0.0
        %575 = vmatprep.subr.mxu0 0.0
        %576 = vmatpush2.msra.mxu0 0.0
        %577 = vmatprep.subr.mxu0 0.0
        %578 = vmatpush2.msra.mxu0 0.0
        %579 = vmatprep.mubr.f32.mxu0 0.0
        %580 = vmatmul.mubr.f32.gmra.mxu0 %v442
        %v581 = vpop.f32.mrf.mxu0
        %v582 = vadd.f32 %v430, %v581
        %v583 = vpop.f32.mrf.mxu0
        %v584 = vadd.f32 %v434, %v583
        %585 = vdwg.mxu0
        %586 = vst [vmem:[#allocation2] sm:$0xff] %v511
        %587 = vst [vmem:[#allocation2 + $0x8] sm:$0xff] %v513
        %588 = vst [vmem:[#allocation2 + $0x10] sm:$0xff] %v582
        %589 = vst [vmem:[#allocation2 + $0x18] sm:$0xff] %v584
        %s590 = scalar_lea.vmem %s371, 8 [#allocation4]
        %v591 = vld [vmem:[%s590] sm:$0xff]
        %v593 = vsel %vm440, %v591, 0
        %595 = vmatprep.subr.mxu0 0.0
        %596 = vmatpush1.msra.mxu0 0.0
        %597 = vmatprep.subr.mxu0 0.0
        %598 = vmatpush1.msra.mxu0 0.0
        %599 = vmatprep.subr.mxu0 0.0
        %600 = vmatpush1.msra.mxu0 0.0
        %601 = vmatprep.subr.mxu0 0.0
        %602 = vmatpush1.msra.mxu0 0.0
        %603 = vmatprep.subr.mxu0 0.0
        %604 = vmatpush1.msra.mxu0 0.0
        %605 = vmatprep.subr.mxu0 0.0
        %606 = vmatpush1.msra.mxu0 0.0
        %607 = vmatprep.subr.mxu0 0.0
        %608 = vmatpush1.msra.mxu0 0.0
        %609 = vmatprep.subr.mxu0 0.0
        %610 = vmatpush1.msra.mxu0 0.0
        %611 = vmatprep.subr.mxu0 0.0
        %612 = vmatpush1.msra.mxu0 0.0
        %613 = vmatprep.subr.mxu0 0.0
        %614 = vmatpush1.msra.mxu0 0.0
        %615 = vmatprep.subr.mxu0 0.0
        %616 = vmatpush1.msra.mxu0 0.0
        %617 = vmatprep.subr.mxu0 0.0
        %618 = vmatpush1.msra.mxu0 0.0
        %619 = vmatprep.subr.mxu0 0.0
        %620 = vmatpush1.msra.mxu0 0.0
        %621 = vmatprep.subr.mxu0 0.0
        %622 = vmatpush1.msra.mxu0 0.0
        %623 = vmatprep.subr.mxu0 %v414
        %624 = vmatpush1.msra.mxu0 %v413
        %625 = vmatprep.subr.mxu0 %v410
        %626 = vmatpush1.msra.mxu0 %v409
        %627 = vmatprep.subr.mxu0 0.0
        %628 = vmatpush2.msra.mxu0 0.0
        %629 = vmatprep.subr.mxu0 0.0
        %630 = vmatpush2.msra.mxu0 0.0
        %631 = vmatprep.subr.mxu0 0.0
        %632 = vmatpush2.msra.mxu0 0.0
        %633 = vmatprep.subr.mxu0 0.0
        %634 = vmatpush2.msra.mxu0 0.0
        %635 = vmatprep.subr.mxu0 0.0
        %636 = vmatpush2.msra.mxu0 0.0
        %637 = vmatprep.subr.mxu0 0.0
        %638 = vmatpush2.msra.mxu0 0.0
        %639 = vmatprep.subr.mxu0 0.0
        %640 = vmatpush2.msra.mxu0 0.0
        %641 = vmatprep.subr.mxu0 0.0
        %642 = vmatpush2.msra.mxu0 0.0
        %643 = vmatprep.subr.mxu0 0.0
        %644 = vmatpush2.msra.mxu0 0.0
        %645 = vmatprep.subr.mxu0 0.0
        %646 = vmatpush2.msra.mxu0 0.0
        %647 = vmatprep.subr.mxu0 0.0
        %648 = vmatpush2.msra.mxu0 0.0
        %649 = vmatprep.subr.mxu0 0.0
        %650 = vmatpush2.msra.mxu0 0.0
        %651 = vmatprep.subr.mxu0 0.0
        %652 = vmatpush2.msra.mxu0 0.0
        %653 = vmatprep.subr.mxu0 0.0
        %654 = vmatpush2.msra.mxu0 0.0
        %655 = vmatprep.subr.mxu0 0.0
        %656 = vmatpush2.msra.mxu0 0.0
        %657 = vmatprep.subr.mxu0 0.0
        %658 = vmatpush2.msra.mxu0 0.0
        %659 = vmatprep.mubr.f32.mxu0 0.0
        %660 = vmatmul.mubr.f32.gmra.mxu0 %v593
        %v661 = vpop.f32.mrf.mxu0
        %v662 = vadd.f32 %v422, %v661
        %v663 = vpop.f32.mrf.mxu0
        %v664 = vadd.f32 %v426, %v663
        %665 = vdwg.mxu0
        %666 = vmatprep.subr.mxu0 0.0
        %667 = vmatpush1.msra.mxu0 0.0
        %668 = vmatprep.subr.mxu0 0.0
        %669 = vmatpush1.msra.mxu0 0.0
        %670 = vmatprep.subr.mxu0 0.0
        %671 = vmatpush1.msra.mxu0 0.0
        %672 = vmatprep.subr.mxu0 0.0
        %673 = vmatpush1.msra.mxu0 0.0
        %674 = vmatprep.subr.mxu0 0.0
        %675 = vmatpush1.msra.mxu0 0.0
        %676 = vmatprep.subr.mxu0 0.0
        %677 = vmatpush1.msra.mxu0 0.0
        %678 = vmatprep.subr.mxu0 0.0
        %679 = vmatpush1.msra.mxu0 0.0
        %680 = vmatprep.subr.mxu0 0.0
        %681 = vmatpush1.msra.mxu0 0.0
        %682 = vmatprep.subr.mxu0 0.0
        %683 = vmatpush1.msra.mxu0 0.0
        %684 = vmatprep.subr.mxu0 0.0
        %685 = vmatpush1.msra.mxu0 0.0
        %686 = vmatprep.subr.mxu0 0.0
        %687 = vmatpush1.msra.mxu0 0.0
        %688 = vmatprep.subr.mxu0 0.0
        %689 = vmatpush1.msra.mxu0 0.0
        %690 = vmatprep.subr.mxu0 0.0
        %691 = vmatpush1.msra.mxu0 0.0
        %692 = vmatprep.subr.mxu0 0.0
        %693 = vmatpush1.msra.mxu0 0.0
        %694 = vmatprep.subr.mxu0 %v416
        %695 = vmatpush1.msra.mxu0 %v415
        %696 = vmatprep.subr.mxu0 %v412
        %697 = vmatpush1.msra.mxu0 %v411
        %698 = vmatprep.subr.mxu0 0.0
        %699 = vmatpush2.msra.mxu0 0.0
        %700 = vmatprep.subr.mxu0 0.0
        %701 = vmatpush2.msra.mxu0 0.0
        %702 = vmatprep.subr.mxu0 0.0
        %703 = vmatpush2.msra.mxu0 0.0
        %704 = vmatprep.subr.mxu0 0.0
        %705 = vmatpush2.msra.mxu0 0.0
        %706 = vmatprep.subr.mxu0 0.0
        %707 = vmatpush2.msra.mxu0 0.0
        %708 = vmatprep.subr.mxu0 0.0
        %709 = vmatpush2.msra.mxu0 0.0
        %710 = vmatprep.subr.mxu0 0.0
        %711 = vmatpush2.msra.mxu0 0.0
        %712 = vmatprep.subr.mxu0 0.0
        %713 = vmatpush2.msra.mxu0 0.0
        %714 = vmatprep.subr.mxu0 0.0
        %715 = vmatpush2.msra.mxu0 0.0
        %716 = vmatprep.subr.mxu0 0.0
        %717 = vmatpush2.msra.mxu0 0.0
        %718 = vmatprep.subr.mxu0 0.0
        %719 = vmatpush2.msra.mxu0 0.0
        %720 = vmatprep.subr.mxu0 0.0
        %721 = vmatpush2.msra.mxu0 0.0
        %722 = vmatprep.subr.mxu0 0.0
        %723 = vmatpush2.msra.mxu0 0.0
        %724 = vmatprep.subr.mxu0 0.0
        %725 = vmatpush2.msra.mxu0 0.0
        %726 = vmatprep.subr.mxu0 0.0
        %727 = vmatpush2.msra.mxu0 0.0
        %728 = vmatprep.subr.mxu0 0.0
        %729 = vmatpush2.msra.mxu0 0.0
        %730 = vmatprep.mubr.f32.mxu0 0.0
        %731 = vmatmul.mubr.f32.gmra.mxu0 %v593
        %v732 = vpop.f32.mrf.mxu0
        %v733 = vadd.f32 %v430, %v732
        %v734 = vpop.f32.mrf.mxu0
        %v735 = vadd.f32 %v434, %v734
        %736 = vdwg.mxu0
        %s737 = scalar_lea.vmem [#allocation2], 32
        %738 = vst [vmem:[%s737] sm:$0xff] %v662
        %739 = vst [vmem:[%s737 + $0x8] sm:$0xff] %v664
        %740 = vst [vmem:[%s737 + $0x10] sm:$0xff] %v733
        %741 = vst [vmem:[%s737 + $0x18] sm:$0xff] %v735
        %s742 = scalar_lea.vmem %s371, 16 [#allocation4]
        %v743 = vld [vmem:[%s742] sm:$0xff]
        %v745 = vsel %vm440, %v743, 0
        %747 = vmatprep.subr.mxu0 0.0
        %748 = vmatpush1.msra.mxu0 0.0
        %749 = vmatprep.subr.mxu0 0.0
        %750 = vmatpush1.msra.mxu0 0.0
        %751 = vmatprep.subr.mxu0 0.0
        %752 = vmatpush1.msra.mxu0 0.0
        %753 = vmatprep.subr.mxu0 0.0
        %754 = vmatpush1.msra.mxu0 0.0
        %755 = vmatprep.subr.mxu0 0.0
        %756 = vmatpush1.msra.mxu0 0.0
        %757 = vmatprep.subr.mxu0 0.0
        %758 = vmatpush1.msra.mxu0 0.0
        %759 = vmatprep.subr.mxu0 0.0
        %760 = vmatpush1.msra.mxu0 0.0
        %761 = vmatprep.subr.mxu0 0.0
        %762 = vmatpush1.msra.mxu0 0.0
        %763 = vmatprep.subr.mxu0 0.0
        %764 = vmatpush1.msra.mxu0 0.0
        %765 = vmatprep.subr.mxu0 0.0
        %766 = vmatpush1.msra.mxu0 0.0
        %767 = vmatprep.subr.mxu0 0.0
        %768 = vmatpush1.msra.mxu0 0.0
        %769 = vmatprep.subr.mxu0 0.0
        %770 = vmatpush1.msra.mxu0 0.0
        %771 = vmatprep.subr.mxu0 0.0
        %772 = vmatpush1.msra.mxu0 0.0
        %773 = vmatprep.subr.mxu0 0.0
        %774 = vmatpush1.msra.mxu0 0.0
        %775 = vmatprep.subr.mxu0 %v414
        %776 = vmatpush1.msra.mxu0 %v413
        %777 = vmatprep.subr.mxu0 %v410
        %778 = vmatpush1.msra.mxu0 %v409
        %779 = vmatprep.subr.mxu0 0.0
        %780 = vmatpush2.msra.mxu0 0.0
        %781 = vmatprep.subr.mxu0 0.0
        %782 = vmatpush2.msra.mxu0 0.0
        %783 = vmatprep.subr.mxu0 0.0
        %784 = vmatpush2.msra.mxu0 0.0
        %785 = vmatprep.subr.mxu0 0.0
        %786 = vmatpush2.msra.mxu0 0.0
        %787 = vmatprep.subr.mxu0 0.0
        %788 = vmatpush2.msra.mxu0 0.0
        %789 = vmatprep.subr.mxu0 0.0
        %790 = vmatpush2.msra.mxu0 0.0
        %791 = vmatprep.subr.mxu0 0.0
        %792 = vmatpush2.msra.mxu0 0.0
        %793 = vmatprep.subr.mxu0 0.0
        %794 = vmatpush2.msra.mxu0 0.0
        %795 = vmatprep.subr.mxu0 0.0
        %796 = vmatpush2.msra.mxu0 0.0
        %797 = vmatprep.subr.mxu0 0.0
        %798 = vmatpush2.msra.mxu0 0.0
        %799 = vmatprep.subr.mxu0 0.0
        %800 = vmatpush2.msra.mxu0 0.0
        %801 = vmatprep.subr.mxu0 0.0
        %802 = vmatpush2.msra.mxu0 0.0
        %803 = vmatprep.subr.mxu0 0.0
        %804 = vmatpush2.msra.mxu0 0.0
        %805 = vmatprep.subr.mxu0 0.0
        %806 = vmatpush2.msra.mxu0 0.0
        %807 = vmatprep.subr.mxu0 0.0
        %808 = vmatpush2.msra.mxu0 0.0
        %809 = vmatprep.subr.mxu0 0.0
        %810 = vmatpush2.msra.mxu0 0.0
        %811 = vmatprep.mubr.f32.mxu0 0.0
        %812 = vmatmul.mubr.f32.gmra.mxu0 %v745
        %v813 = vpop.f32.mrf.mxu0
        %v814 = vadd.f32 %v422, %v813
        %v815 = vpop.f32.mrf.mxu0
        %v816 = vadd.f32 %v426, %v815
        %817 = vdwg.mxu0
        %818 = vmatprep.subr.mxu0 0.0
        %819 = vmatpush1.msra.mxu0 0.0
        %820 = vmatprep.subr.mxu0 0.0
        %821 = vmatpush1.msra.mxu0 0.0
        %822 = vmatprep.subr.mxu0 0.0
        %823 = vmatpush1.msra.mxu0 0.0
        %824 = vmatprep.subr.mxu0 0.0
        %825 = vmatpush1.msra.mxu0 0.0
        %826 = vmatprep.subr.mxu0 0.0
        %827 = vmatpush1.msra.mxu0 0.0
        %828 = vmatprep.subr.mxu0 0.0
        %829 = vmatpush1.msra.mxu0 0.0
        %830 = vmatprep.subr.mxu0 0.0
        %831 = vmatpush1.msra.mxu0 0.0
        %832 = vmatprep.subr.mxu0 0.0
        %833 = vmatpush1.msra.mxu0 0.0
        %834 = vmatprep.subr.mxu0 0.0
        %835 = vmatpush1.msra.mxu0 0.0
        %836 = vmatprep.subr.mxu0 0.0
        %837 = vmatpush1.msra.mxu0 0.0
        %838 = vmatprep.subr.mxu0 0.0
        %839 = vmatpush1.msra.mxu0 0.0
        %840 = vmatprep.subr.mxu0 0.0
        %841 = vmatpush1.msra.mxu0 0.0
        %842 = vmatprep.subr.mxu0 0.0
        %843 = vmatpush1.msra.mxu0 0.0
        %844 = vmatprep.subr.mxu0 0.0
        %845 = vmatpush1.msra.mxu0 0.0
        %846 = vmatprep.subr.mxu0 %v416
        %847 = vmatpush1.msra.mxu0 %v415
        %848 = vmatprep.subr.mxu0 %v412
        %849 = vmatpush1.msra.mxu0 %v411
        %850 = vmatprep.subr.mxu0 0.0
        %851 = vmatpush2.msra.mxu0 0.0
        %852 = vmatprep.subr.mxu0 0.0
        %853 = vmatpush2.msra.mxu0 0.0
        %854 = vmatprep.subr.mxu0 0.0
        %855 = vmatpush2.msra.mxu0 0.0
        %856 = vmatprep.subr.mxu0 0.0
        %857 = vmatpush2.msra.mxu0 0.0
        %858 = vmatprep.subr.mxu0 0.0
        %859 = vmatpush2.msra.mxu0 0.0
        %860 = vmatprep.subr.mxu0 0.0
        %861 = vmatpush2.msra.mxu0 0.0
        %862 = vmatprep.subr.mxu0 0.0
        %863 = vmatpush2.msra.mxu0 0.0
        %864 = vmatprep.subr.mxu0 0.0
        %865 = vmatpush2.msra.mxu0 0.0
        %866 = vmatprep.subr.mxu0 0.0
        %867 = vmatpush2.msra.mxu0 0.0
        %868 = vmatprep.subr.mxu0 0.0
        %869 = vmatpush2.msra.mxu0 0.0
        %870 = vmatprep.subr.mxu0 0.0
        %871 = vmatpush2.msra.mxu0 0.0
        %872 = vmatprep.subr.mxu0 0.0
        %873 = vmatpush2.msra.mxu0 0.0
        %874 = vmatprep.subr.mxu0 0.0
        %875 = vmatpush2.msra.mxu0 0.0
        %876 = vmatprep.subr.mxu0 0.0
        %877 = vmatpush2.msra.mxu0 0.0
        %878 = vmatprep.subr.mxu0 0.0
        %879 = vmatpush2.msra.mxu0 0.0
        %880 = vmatprep.subr.mxu0 0.0
        %881 = vmatpush2.msra.mxu0 0.0
        %882 = vmatprep.mubr.f32.mxu0 0.0
        %883 = vmatmul.mubr.f32.gmra.mxu0 %v745
        %v884 = vpop.f32.mrf.mxu0
        %v885 = vadd.f32 %v430, %v884
        %v886 = vpop.f32.mrf.mxu0
        %v887 = vadd.f32 %v434, %v886
        %888 = vdwg.mxu0
        %s889 = scalar_lea.vmem [#allocation2], 64
        %890 = vst [vmem:[%s889] sm:$0xff] %v814
        %891 = vst [vmem:[%s889 + $0x8] sm:$0xff] %v816
        %892 = vst [vmem:[%s889 + $0x10] sm:$0xff] %v885
        %893 = vst [vmem:[%s889 + $0x18] sm:$0xff] %v887
        %s894 = scalar_lea.vmem %s371, 24 [#allocation4]
        %v895 = vld [vmem:[%s894] sm:$0xff]
        %v897 = vsel %vm440, %v895, 0
        %899 = vmatprep.subr.mxu0 0.0
        %900 = vmatpush1.msra.mxu0 0.0
        %901 = vmatprep.subr.mxu0 0.0
        %902 = vmatpush1.msra.mxu0 0.0
        %903 = vmatprep.subr.mxu0 0.0
        %904 = vmatpush1.msra.mxu0 0.0
        %905 = vmatprep.subr.mxu0 0.0
        %906 = vmatpush1.msra.mxu0 0.0
        %907 = vmatprep.subr.mxu0 0.0
        %908 = vmatpush1.msra.mxu0 0.0
        %909 = vmatprep.subr.mxu0 0.0
        %910 = vmatpush1.msra.mxu0 0.0
        %911 = vmatprep.subr.mxu0 0.0
        %912 = vmatpush1.msra.mxu0 0.0
        %913 = vmatprep.subr.mxu0 0.0
        %914 = vmatpush1.msra.mxu0 0.0
        %915 = vmatprep.subr.mxu0 0.0
        %916 = vmatpush1.msra.mxu0 0.0
        %917 = vmatprep.subr.mxu0 0.0
        %918 = vmatpush1.msra.mxu0 0.0
        %919 = vmatprep.subr.mxu0 0.0
        %920 = vmatpush1.msra.mxu0 0.0
        %921 = vmatprep.subr.mxu0 0.0
        %922 = vmatpush1.msra.mxu0 0.0
        %923 = vmatprep.subr.mxu0 0.0
        %924 = vmatpush1.msra.mxu0 0.0
        %925 = vmatprep.subr.mxu0 0.0
        %926 = vmatpush1.msra.mxu0 0.0
        %927 = vmatprep.subr.mxu0 %v414
        %928 = vmatpush1.msra.mxu0 %v413
        %929 = vmatprep.subr.mxu0 %v410
        %930 = vmatpush1.msra.mxu0 %v409
        %931 = vmatprep.subr.mxu0 0.0
        %932 = vmatpush2.msra.mxu0 0.0
        %933 = vmatprep.subr.mxu0 0.0
        %934 = vmatpush2.msra.mxu0 0.0
        %935 = vmatprep.subr.mxu0 0.0
        %936 = vmatpush2.msra.mxu0 0.0
        %937 = vmatprep.subr.mxu0 0.0
        %938 = vmatpush2.msra.mxu0 0.0
        %939 = vmatprep.subr.mxu0 0.0
        %940 = vmatpush2.msra.mxu0 0.0
        %941 = vmatprep.subr.mxu0 0.0
        %942 = vmatpush2.msra.mxu0 0.0
        %943 = vmatprep.subr.mxu0 0.0
        %944 = vmatpush2.msra.mxu0 0.0
        %945 = vmatprep.subr.mxu0 0.0
        %946 = vmatpush2.msra.mxu0 0.0
        %947 = vmatprep.subr.mxu0 0.0
        %948 = vmatpush2.msra.mxu0 0.0
        %949 = vmatprep.subr.mxu0 0.0
        %950 = vmatpush2.msra.mxu0 0.0
        %951 = vmatprep.subr.mxu0 0.0
        %952 = vmatpush2.msra.mxu0 0.0
        %953 = vmatprep.subr.mxu0 0.0
        %954 = vmatpush2.msra.mxu0 0.0
        %955 = vmatprep.subr.mxu0 0.0
        %956 = vmatpush2.msra.mxu0 0.0
        %957 = vmatprep.subr.mxu0 0.0
        %958 = vmatpush2.msra.mxu0 0.0
        %959 = vmatprep.subr.mxu0 0.0
        %960 = vmatpush2.msra.mxu0 0.0
        %961 = vmatprep.subr.mxu0 0.0
        %962 = vmatpush2.msra.mxu0 0.0
        %963 = vmatprep.mubr.f32.mxu0 0.0
        %964 = vmatmul.mubr.f32.gmra.mxu0 %v897
        %v965 = vpop.f32.mrf.mxu0
        %v966 = vadd.f32 %v422, %v965
        %v967 = vpop.f32.mrf.mxu0
        %v968 = vadd.f32 %v426, %v967
        %969 = vdwg.mxu0
        %970 = vmatprep.subr.mxu0 0.0
        %971 = vmatpush1.msra.mxu0 0.0
        %972 = vmatprep.subr.mxu0 0.0
        %973 = vmatpush1.msra.mxu0 0.0
        %974 = vmatprep.subr.mxu0 0.0
        %975 = vmatpush1.msra.mxu0 0.0
        %976 = vmatprep.subr.mxu0 0.0
        %977 = vmatpush1.msra.mxu0 0.0
        %978 = vmatprep.subr.mxu0 0.0
        %979 = vmatpush1.msra.mxu0 0.0
        %980 = vmatprep.subr.mxu0 0.0
        %981 = vmatpush1.msra.mxu0 0.0
        %982 = vmatprep.subr.mxu0 0.0
        %983 = vmatpush1.msra.mxu0 0.0
        %984 = vmatprep.subr.mxu0 0.0
        %985 = vmatpush1.msra.mxu0 0.0
        %986 = vmatprep.subr.mxu0 0.0
        %987 = vmatpush1.msra.mxu0 0.0
        %988 = vmatprep.subr.mxu0 0.0
        %989 = vmatpush1.msra.mxu0 0.0
        %990 = vmatprep.subr.mxu0 0.0
        %991 = vmatpush1.msra.mxu0 0.0
        %992 = vmatprep.subr.mxu0 0.0
        %993 = vmatpush1.msra.mxu0 0.0
        %994 = vmatprep.subr.mxu0 0.0
        %995 = vmatpush1.msra.mxu0 0.0
        %996 = vmatprep.subr.mxu0 0.0
        %997 = vmatpush1.msra.mxu0 0.0
        %998 = vmatprep.subr.mxu0 %v416
        %999 = vmatpush1.msra.mxu0 %v415
        %1000 = vmatprep.subr.mxu0 %v412
        %1001 = vmatpush1.msra.mxu0 %v411
        %1002 = vmatprep.subr.mxu0 0.0
        %1003 = vmatpush2.msra.mxu0 0.0
        %1004 = vmatprep.subr.mxu0 0.0
        %1005 = vmatpush2.msra.mxu0 0.0
        %1006 = vmatprep.subr.mxu0 0.0
        %1007 = vmatpush2.msra.mxu0 0.0
        %1008 = vmatprep.subr.mxu0 0.0
        %1009 = vmatpush2.msra.mxu0 0.0
        %1010 = vmatprep.subr.mxu0 0.0
        %1011 = vmatpush2.msra.mxu0 0.0
        %1012 = vmatprep.subr.mxu0 0.0
        %1013 = vmatpush2.msra.mxu0 0.0
        %1014 = vmatprep.subr.mxu0 0.0
        %1015 = vmatpush2.msra.mxu0 0.0
        %1016 = vmatprep.subr.mxu0 0.0
        %1017 = vmatpush2.msra.mxu0 0.0
        %1018 = vmatprep.subr.mxu0 0.0
        %1019 = vmatpush2.msra.mxu0 0.0
        %1020 = vmatprep.subr.mxu0 0.0
        %1021 = vmatpush2.msra.mxu0 0.0
        %1022 = vmatprep.subr.mxu0 0.0
        %1023 = vmatpush2.msra.mxu0 0.0
        %1024 = vmatprep.subr.mxu0 0.0
        %1025 = vmatpush2.msra.mxu0 0.0
        %1026 = vmatprep.subr.mxu0 0.0
        %1027 = vmatpush2.msra.mxu0 0.0
        %1028 = vmatprep.subr.mxu0 0.0
        %1029 = vmatpush2.msra.mxu0 0.0
        %1030 = vmatprep.subr.mxu0 0.0
        %1031 = vmatpush2.msra.mxu0 0.0
        %1032 = vmatprep.subr.mxu0 0.0
        %1033 = vmatpush2.msra.mxu0 0.0
        %1034 = vmatprep.mubr.f32.mxu0 0.0
        %1035 = vmatmul.mubr.f32.gmra.mxu0 %v897
        %v1036 = vpop.f32.mrf.mxu0
        %v1037 = vadd.f32 %v430, %v1036
        %v1038 = vpop.f32.mrf.mxu0
        %v1039 = vadd.f32 %v434, %v1038
        %1040 = vdwg.mxu0
        %s1041 = scalar_lea.vmem [#allocation2], 96
        %1042 = vst [vmem:[%s1041] sm:$0xff] %v966
        %1043 = vst [vmem:[%s1041 + $0x8] sm:$0xff] %v968
        %1044 = vst [vmem:[%s1041 + $0x10] sm:$0xff] %v1037
        %1045 = vst [vmem:[%s1041 + $0x18] sm:$0xff] %v1039
        %s1046 = scalar_lea.vmem %s371, 32 [#allocation4]
        %v1047 = vld [vmem:[%s1046] sm:$0xff]
        %v1049 = vsel %vm440, %v1047, 0
        %1051 = vmatprep.subr.mxu0 0.0
        %1052 = vmatpush1.msra.mxu0 0.0
        %1053 = vmatprep.subr.mxu0 0.0
        %1054 = vmatpush1.msra.mxu0 0.0
        %1055 = vmatprep.subr.mxu0 0.0
        %1056 = vmatpush1.msra.mxu0 0.0
        %1057 = vmatprep.subr.mxu0 0.0
        %1058 = vmatpush1.msra.mxu0 0.0
        %1059 = vmatprep.subr.mxu0 0.0
        %1060 = vmatpush1.msra.mxu0 0.0
        %1061 = vmatprep.subr.mxu0 0.0
        %1062 = vmatpush1.msra.mxu0 0.0
        %1063 = vmatprep.subr.mxu0 0.0
        %1064 = vmatpush1.msra.mxu0 0.0
        %1065 = vmatprep.subr.mxu0 0.0
        %1066 = vmatpush1.msra.mxu0 0.0
        %1067 = vmatprep.subr.mxu0 0.0
        %1068 = vmatpush1.msra.mxu0 0.0
        %1069 = vmatprep.subr.mxu0 0.0
        %1070 = vmatpush1.msra.mxu0 0.0
        %1071 = vmatprep.subr.mxu0 0.0
        %1072 = vmatpush1.msra.mxu0 0.0
        %1073 = vmatprep.subr.mxu0 0.0
        %1074 = vmatpush1.msra.mxu0 0.0
        %1075 = vmatprep.subr.mxu0 0.0
        %1076 = vmatpush1.msra.mxu0 0.0
        %1077 = vmatprep.subr.mxu0 0.0
        %1078 = vmatpush1.msra.mxu0 0.0
        %1079 = vmatprep.subr.mxu0 %v414
        %1080 = vmatpush1.msra.mxu0 %v413
        %1081 = vmatprep.subr.mxu0 %v410
        %1082 = vmatpush1.msra.mxu0 %v409
        %1083 = vmatprep.subr.mxu0 0.0
        %1084 = vmatpush2.msra.mxu0 0.0
        %1085 = vmatprep.subr.mxu0 0.0
        %1086 = vmatpush2.msra.mxu0 0.0
        %1087 = vmatprep.subr.mxu0 0.0
        %1088 = vmatpush2.msra.mxu0 0.0
        %1089 = vmatprep.subr.mxu0 0.0
        %1090 = vmatpush2.msra.mxu0 0.0
        %1091 = vmatprep.subr.mxu0 0.0
        %1092 = vmatpush2.msra.mxu0 0.0
        %1093 = vmatprep.subr.mxu0 0.0
        %1094 = vmatpush2.msra.mxu0 0.0
        %1095 = vmatprep.subr.mxu0 0.0
        %1096 = vmatpush2.msra.mxu0 0.0
        %1097 = vmatprep.subr.mxu0 0.0
        %1098 = vmatpush2.msra.mxu0 0.0
        %1099 = vmatprep.subr.mxu0 0.0
        %1100 = vmatpush2.msra.mxu0 0.0
        %1101 = vmatprep.subr.mxu0 0.0
        %1102 = vmatpush2.msra.mxu0 0.0
        %1103 = vmatprep.subr.mxu0 0.0
        %1104 = vmatpush2.msra.mxu0 0.0
        %1105 = vmatprep.subr.mxu0 0.0
        %1106 = vmatpush2.msra.mxu0 0.0
        %1107 = vmatprep.subr.mxu0 0.0
        %1108 = vmatpush2.msra.mxu0 0.0
        %1109 = vmatprep.subr.mxu0 0.0
        %1110 = vmatpush2.msra.mxu0 0.0
        %1111 = vmatprep.subr.mxu0 0.0
        %1112 = vmatpush2.msra.mxu0 0.0
        %1113 = vmatprep.subr.mxu0 0.0
        %1114 = vmatpush2.msra.mxu0 0.0
        %1115 = vmatprep.mubr.f32.mxu0 0.0
        %1116 = vmatmul.mubr.f32.gmra.mxu0 %v1049
        %v1117 = vpop.f32.mrf.mxu0
        %v1118 = vadd.f32 %v422, %v1117
        %v1119 = vpop.f32.mrf.mxu0
        %v1120 = vadd.f32 %v426, %v1119
        %1121 = vdwg.mxu0
        %1122 = vmatprep.subr.mxu0 0.0
        %1123 = vmatpush1.msra.mxu0 0.0
        %1124 = vmatprep.subr.mxu0 0.0
        %1125 = vmatpush1.msra.mxu0 0.0
        %1126 = vmatprep.subr.mxu0 0.0
        %1127 = vmatpush1.msra.mxu0 0.0
        %1128 = vmatprep.subr.mxu0 0.0
        %1129 = vmatpush1.msra.mxu0 0.0
        %1130 = vmatprep.subr.mxu0 0.0
        %1131 = vmatpush1.msra.mxu0 0.0
        %1132 = vmatprep.subr.mxu0 0.0
        %1133 = vmatpush1.msra.mxu0 0.0
        %1134 = vmatprep.subr.mxu0 0.0
        %1135 = vmatpush1.msra.mxu0 0.0
        %1136 = vmatprep.subr.mxu0 0.0
        %1137 = vmatpush1.msra.mxu0 0.0
        %1138 = vmatprep.subr.mxu0 0.0
        %1139 = vmatpush1.msra.mxu0 0.0
        %1140 = vmatprep.subr.mxu0 0.0
        %1141 = vmatpush1.msra.mxu0 0.0
        %1142 = vmatprep.subr.mxu0 0.0
        %1143 = vmatpush1.msra.mxu0 0.0
        %1144 = vmatprep.subr.mxu0 0.0
        %1145 = vmatpush1.msra.mxu0 0.0
        %1146 = vmatprep.subr.mxu0 0.0
        %1147 = vmatpush1.msra.mxu0 0.0
        %1148 = vmatprep.subr.mxu0 0.0
        %1149 = vmatpush1.msra.mxu0 0.0
        %1150 = vmatprep.subr.mxu0 %v416
        %1151 = vmatpush1.msra.mxu0 %v415
        %1152 = vmatprep.subr.mxu0 %v412
        %1153 = vmatpush1.msra.mxu0 %v411
        %1154 = vmatprep.subr.mxu0 0.0
        %1155 = vmatpush2.msra.mxu0 0.0
        %1156 = vmatprep.subr.mxu0 0.0
        %1157 = vmatpush2.msra.mxu0 0.0
        %1158 = vmatprep.subr.mxu0 0.0
        %1159 = vmatpush2.msra.mxu0 0.0
        %1160 = vmatprep.subr.mxu0 0.0
        %1161 = vmatpush2.msra.mxu0 0.0
        %1162 = vmatprep.subr.mxu0 0.0
        %1163 = vmatpush2.msra.mxu0 0.0
        %1164 = vmatprep.subr.mxu0 0.0
        %1165 = vmatpush2.msra.mxu0 0.0
        %1166 = vmatprep.subr.mxu0 0.0
        %1167 = vmatpush2.msra.mxu0 0.0
        %1168 = vmatprep.subr.mxu0 0.0
        %1169 = vmatpush2.msra.mxu0 0.0
        %1170 = vmatprep.subr.mxu0 0.0
        %1171 = vmatpush2.msra.mxu0 0.0
        %1172 = vmatprep.subr.mxu0 0.0
        %1173 = vmatpush2.msra.mxu0 0.0
        %1174 = vmatprep.subr.mxu0 0.0
        %1175 = vmatpush2.msra.mxu0 0.0
        %1176 = vmatprep.subr.mxu0 0.0
        %1177 = vmatpush2.msra.mxu0 0.0
        %1178 = vmatprep.subr.mxu0 0.0
        %1179 = vmatpush2.msra.mxu0 0.0
        %1180 = vmatprep.subr.mxu0 0.0
        %1181 = vmatpush2.msra.mxu0 0.0
        %1182 = vmatprep.subr.mxu0 0.0
        %1183 = vmatpush2.msra.mxu0 0.0
        %1184 = vmatprep.subr.mxu0 0.0
        %1185 = vmatpush2.msra.mxu0 0.0
        %1186 = vmatprep.mubr.f32.mxu0 0.0
        %1187 = vmatmul.mubr.f32.gmra.mxu0 %v1049
        %v1188 = vpop.f32.mrf.mxu0
        %v1189 = vadd.f32 %v430, %v1188
        %v1190 = vpop.f32.mrf.mxu0
        %v1191 = vadd.f32 %v434, %v1190
        %1192 = vdwg.mxu0
        %s1193 = scalar_lea.vmem [#allocation2], 128
        %1194 = vst [vmem:[%s1193] sm:$0xff] %v1118
        %1195 = vst [vmem:[%s1193 + $0x8] sm:$0xff] %v1120
        %1196 = vst [vmem:[%s1193 + $0x10] sm:$0xff] %v1189
        %1197 = vst [vmem:[%s1193 + $0x18] sm:$0xff] %v1191
        %v1198 = vld [vmem:[%s2] sm:$0xff]
        %v1199 = vld [vmem:[%s2 + $0x8] sm:$0xff]
        %v1200 = vld [vmem:[%s2 + $0x10] sm:$0xff]
        %v1201 = vld [vmem:[%s2 + $0x18] sm:$0xff]
        %v1202 = vld [vmem:[%s2 + $0x20] sm:$0xff]
        %v1203 = vld [vmem:[%s2 + $0x28] sm:$0xff]
        %v1204 = vld [vmem:[%s2 + $0x30] sm:$0xff]
        %v1205 = vld [vmem:[%s2 + $0x38] sm:$0xff]
        %v1206 = vld [vmem:[%s2 + $0x40] sm:$0xff]
        %v1207 = vld [vmem:[%s2 + $0x48] sm:$0xff]
        %v1208 = vld [vmem:[%s2 + $0x50] sm:$0xff]
        %v1209 = vld [vmem:[%s2 + $0x58] sm:$0xff]
        %v1210 = vld [vmem:[%s2 + $0x60] sm:$0xff]
        %v1211 = vld [vmem:[%s2 + $0x68] sm:$0xff]
        %v1212 = vld [vmem:[%s2 + $0x70] sm:$0xff]
        %v1213 = vld [vmem:[%s2 + $0x78] sm:$0xff]
        %v1214 = vld [vmem:[%s2 + $0x80] sm:$0xff]
        %v1215 = vld [vmem:[%s2 + $0x88] sm:$0xff]
        %v1216 = vld [vmem:[%s2 + $0x90] sm:$0xff]
        %v1217 = vld [vmem:[%s2 + $0x98] sm:$0xff]
        %v1218 = vld [vmem:[%s2 + $0xa0] sm:$0xff]
        %v1219 = vld [vmem:[%s2 + $0xa8] sm:$0xff]
        %v1220 = vld [vmem:[%s2 + $0xb0] sm:$0xff]
        %v1221 = vld [vmem:[%s2 + $0xb8] sm:$0xff]
        %v1222 = vld [vmem:[%s2 + $0xc0] sm:$0xff]
        %v1223 = vld [vmem:[%s2 + $0xc8] sm:$0xff]
        %v1224 = vld [vmem:[%s2 + $0xd0] sm:$0xff]
        %v1225 = vld [vmem:[%s2 + $0xd8] sm:$0xff]
        %v1226 = vld [vmem:[%s2 + $0xe0] sm:$0xff]
        %v1227 = vld [vmem:[%s2 + $0xe8] sm:$0xff]
        %v1228 = vld [vmem:[%s2 + $0xf0] sm:$0xff]
        %v1229 = vld [vmem:[%s2 + $0xf8] sm:$0xff]
        %v1230 = vld [vmem:[%s2 + $0x100] sm:$0xff]
        %v1231 = vld [vmem:[%s2 + $0x108] sm:$0xff]
        %v1232 = vld [vmem:[%s2 + $0x110] sm:$0xff]
        %v1233 = vld [vmem:[%s2 + $0x118] sm:$0xff]
        %v1234 = vld [vmem:[%s2 + $0x120] sm:$0xff]
        %v1235 = vld [vmem:[%s2 + $0x128] sm:$0xff]
        %v1236 = vld [vmem:[%s2 + $0x130] sm:$0xff]
        %v1237 = vld [vmem:[%s2 + $0x138] sm:$0xff]
        %v1238 = vld [vmem:[%s2 + $0x140] sm:$0xff]
        %v1239 = vld [vmem:[%s2 + $0x148] sm:$0xff]
        %v1240 = vld [vmem:[%s2 + $0x150] sm:$0xff]
        %v1241 = vld [vmem:[%s2 + $0x158] sm:$0xff]
        %v1242 = vld [vmem:[%s2 + $0x160] sm:$0xff]
        %v1243 = vld [vmem:[%s2 + $0x168] sm:$0xff]
        %v1244 = vld [vmem:[%s2 + $0x170] sm:$0xff]
        %v1245 = vld [vmem:[%s2 + $0x178] sm:$0xff]
        %v1246 = vld [vmem:[%s2 + $0x180] sm:$0xff]
        %v1247 = vld [vmem:[%s2 + $0x188] sm:$0xff]
        %v1248 = vld [vmem:[%s2 + $0x190] sm:$0xff]
        %v1249 = vld [vmem:[%s2 + $0x198] sm:$0xff]
        %v1250 = vld [vmem:[%s2 + $0x1a0] sm:$0xff]
        %v1251 = vld [vmem:[%s2 + $0x1a8] sm:$0xff]
        %v1252 = vld [vmem:[%s2 + $0x1b0] sm:$0xff]
        %v1253 = vld [vmem:[%s2 + $0x1b8] sm:$0xff]
        %v1254 = vld [vmem:[%s2 + $0x1c0] sm:$0xff]
        %v1255 = vld [vmem:[%s2 + $0x1c8] sm:$0xff]
        %v1256 = vld [vmem:[%s2 + $0x1d0] sm:$0xff]
        %v1257 = vld [vmem:[%s2 + $0x1d8] sm:$0xff]
        %v1258 = vld [vmem:[%s2 + $0x1e0] sm:$0xff]
        %v1259 = vld [vmem:[%s2 + $0x1e8] sm:$0xff]
        %v1260 = vld [vmem:[%s2 + $0x1f0] sm:$0xff]
        %v1261 = vld [vmem:[%s2 + $0x1f8] sm:$0xff]
        %v1262 = vld [vmem:[#allocation2] sm:$0xff]
        %v1263 = vld [vmem:[#allocation2 + $0x8] sm:$0xff]
        %v1264 = vld [vmem:[#allocation2 + $0x10] sm:$0xff]
        %v1265 = vld [vmem:[#allocation2 + $0x18] sm:$0xff]
        %1266 = vmatprep.subr.mxu0 %v1259
        %1267 = vmatpush1.msra.mxu0 %v1258
        %1268 = vmatprep.subr.mxu0 %v1255
        %1269 = vmatpush1.msra.mxu0 %v1254
        %1270 = vmatprep.subr.mxu0 %v1251
        %1271 = vmatpush1.msra.mxu0 %v1250
        %1272 = vmatprep.subr.mxu0 %v1247
        %1273 = vmatpush1.msra.mxu0 %v1246
        %1274 = vmatprep.subr.mxu0 %v1243
        %1275 = vmatpush1.msra.mxu0 %v1242
        %1276 = vmatprep.subr.mxu0 %v1239
        %1277 = vmatpush1.msra.mxu0 %v1238
        %1278 = vmatprep.subr.mxu0 %v1235
        %1279 = vmatpush1.msra.mxu0 %v1234
        %1280 = vmatprep.subr.mxu0 %v1231
        %1281 = vmatpush1.msra.mxu0 %v1230
        %1282 = vmatprep.subr.mxu0 %v1227
        %1283 = vmatpush1.msra.mxu0 %v1226
        %1284 = vmatprep.subr.mxu0 %v1223
        %1285 = vmatpush1.msra.mxu0 %v1222
        %1286 = vmatprep.subr.mxu0 %v1219
        %1287 = vmatpush1.msra.mxu0 %v1218
        %1288 = vmatprep.subr.mxu0 %v1215
        %1289 = vmatpush1.msra.mxu0 %v1214
        %1290 = vmatprep.subr.mxu0 %v1211
        %1291 = vmatpush1.msra.mxu0 %v1210
        %1292 = vmatprep.subr.mxu0 %v1207
        %1293 = vmatpush1.msra.mxu0 %v1206
        %1294 = vmatprep.subr.mxu0 %v1203
        %1295 = vmatpush1.msra.mxu0 %v1202
        %1296 = vmatprep.subr.mxu0 %v1199
        %1297 = vmatpush1.msra.mxu0 %v1198
        %1298 = vmatprep.subr.mxu0 0.0
        %1299 = vmatpush2.msra.mxu0 0.0
        %1300 = vmatprep.subr.mxu0 0.0
        %1301 = vmatpush2.msra.mxu0 0.0
        %1302 = vmatprep.subr.mxu0 0.0
        %1303 = vmatpush2.msra.mxu0 0.0
        %1304 = vmatprep.subr.mxu0 0.0
        %1305 = vmatpush2.msra.mxu0 0.0
        %1306 = vmatprep.subr.mxu0 0.0
        %1307 = vmatpush2.msra.mxu0 0.0
        %1308 = vmatprep.subr.mxu0 0.0
        %1309 = vmatpush2.msra.mxu0 0.0
        %1310 = vmatprep.subr.mxu0 0.0
        %1311 = vmatpush2.msra.mxu0 0.0
        %1312 = vmatprep.subr.mxu0 0.0
        %1313 = vmatpush2.msra.mxu0 0.0
        %1314 = vmatprep.subr.mxu0 0.0
        %1315 = vmatpush2.msra.mxu0 0.0
        %1316 = vmatprep.subr.mxu0 0.0
        %1317 = vmatpush2.msra.mxu0 0.0
        %1318 = vmatprep.subr.mxu0 0.0
        %1319 = vmatpush2.msra.mxu0 0.0
        %1320 = vmatprep.subr.mxu0 0.0
        %1321 = vmatpush2.msra.mxu0 0.0
        %1322 = vmatprep.subr.mxu0 0.0
        %1323 = vmatpush2.msra.mxu0 0.0
        %1324 = vmatprep.subr.mxu0 0.0
        %1325 = vmatpush2.msra.mxu0 0.0
        %1326 = vmatprep.subr.mxu0 0.0
        %1327 = vmatpush2.msra.mxu0 0.0
        %1328 = vmatprep.subr.mxu0 0.0
        %1329 = vmatpush2.msra.mxu0 0.0
        %1330 = vmatprep.mubr.f32.mxu0 0.0
        %1331 = vmatmul.mubr.f32.gmra.mxu0 0.0
        %v1332 = vpop.f32.mrf.mxu0
        %v1333 = vadd.f32 0.0, %v1332
        %v1334 = vpop.f32.mrf.mxu0
        %v1335 = vadd.f32 0.0, %v1334
        %1336 = vdwg.mxu0
        %1337 = vmatprep.subr.mxu0 %v1261
        %1338 = vmatpush1.msra.mxu0 %v1260
        %1339 = vmatprep.subr.mxu0 %v1257
        %1340 = vmatpush1.msra.mxu0 %v1256
        %1341 = vmatprep.subr.mxu0 %v1253
        %1342 = vmatpush1.msra.mxu0 %v1252
        %1343 = vmatprep.subr.mxu0 %v1249
        %1344 = vmatpush1.msra.mxu0 %v1248
        %1345 = vmatprep.subr.mxu0 %v1245
        %1346 = vmatpush1.msra.mxu0 %v1244
        %1347 = vmatprep.subr.mxu0 %v1241
        %1348 = vmatpush1.msra.mxu0 %v1240
        %1349 = vmatprep.subr.mxu0 %v1237
        %1350 = vmatpush1.msra.mxu0 %v1236
        %1351 = vmatprep.subr.mxu0 %v1233
        %1352 = vmatpush1.msra.mxu0 %v1232
        %1353 = vmatprep.subr.mxu0 %v1229
        %1354 = vmatpush1.msra.mxu0 %v1228
        %1355 = vmatprep.subr.mxu0 %v1225
        %1356 = vmatpush1.msra.mxu0 %v1224
        %1357 = vmatprep.subr.mxu0 %v1221
        %1358 = vmatpush1.msra.mxu0 %v1220
        %1359 = vmatprep.subr.mxu0 %v1217
        %1360 = vmatpush1.msra.mxu0 %v1216
        %1361 = vmatprep.subr.mxu0 %v1213
        %1362 = vmatpush1.msra.mxu0 %v1212
        %1363 = vmatprep.subr.mxu0 %v1209
        %1364 = vmatpush1.msra.mxu0 %v1208
        %1365 = vmatprep.subr.mxu0 %v1205
        %1366 = vmatpush1.msra.mxu0 %v1204
        %1367 = vmatprep.subr.mxu0 %v1201
        %1368 = vmatpush1.msra.mxu0 %v1200
        %1369 = vmatprep.subr.mxu0 0.0
        %1370 = vmatpush2.msra.mxu0 0.0
        %1371 = vmatprep.subr.mxu0 0.0
        %1372 = vmatpush2.msra.mxu0 0.0
        %1373 = vmatprep.subr.mxu0 0.0
        %1374 = vmatpush2.msra.mxu0 0.0
        %1375 = vmatprep.subr.mxu0 0.0
        %1376 = vmatpush2.msra.mxu0 0.0
        %1377 = vmatprep.subr.mxu0 0.0
        %1378 = vmatpush2.msra.mxu0 0.0
        %1379 = vmatprep.subr.mxu0 0.0
        %1380 = vmatpush2.msra.mxu0 0.0
        %1381 = vmatprep.subr.mxu0 0.0
        %1382 = vmatpush2.msra.mxu0 0.0
        %1383 = vmatprep.subr.mxu0 0.0
        %1384 = vmatpush2.msra.mxu0 0.0
        %1385 = vmatprep.subr.mxu0 0.0
        %1386 = vmatpush2.msra.mxu0 0.0
        %1387 = vmatprep.subr.mxu0 0.0
        %1388 = vmatpush2.msra.mxu0 0.0
        %1389 = vmatprep.subr.mxu0 0.0
        %1390 = vmatpush2.msra.mxu0 0.0
        %1391 = vmatprep.subr.mxu0 0.0
        %1392 = vmatpush2.msra.mxu0 0.0
        %1393 = vmatprep.subr.mxu0 0.0
        %1394 = vmatpush2.msra.mxu0 0.0
        %1395 = vmatprep.subr.mxu0 0.0
        %1396 = vmatpush2.msra.mxu0 0.0
        %1397 = vmatprep.subr.mxu0 0.0
        %1398 = vmatpush2.msra.mxu0 0.0
        %1399 = vmatprep.subr.mxu0 0.0
        %1400 = vmatpush2.msra.mxu0 0.0
        %1401 = vmatprep.mubr.f32.mxu0 0.0
        %1402 = vmatmul.mubr.f32.gmra.mxu0 0.0
        %v1403 = vpop.f32.mrf.mxu0
        %v1404 = vadd.f32 0.0, %v1403
        %v1405 = vpop.f32.mrf.mxu0
        %v1406 = vadd.f32 0.0, %v1405
        %1407 = vdwg.mxu0
        %v1408 = vadd.f32 %v1262, %v1333
        %v1409 = vadd.f32 %v1263, %v1335
        %v1410 = vadd.f32 %v1264, %v1404
        %v1411 = vadd.f32 %v1265, %v1406
        %v1412 = vxor.u32 %v1408, 2147483648
        %v1413 = vmul.f32 %v1412, 1.442695
        %v1414 = vpow.pop %v1413
        %v1415 = vadd.f32 %v1414, 1.0
        %v1416 = vrcp.pop %v1415
        %v1417 = vmul.f32 1.0, %v1416
        %v1418 = vxor.u32 %v1409, 2147483648
        %v1419 = vmul.f32 %v1418, 1.442695
        %v1420 = vpow.pop %v1419
        %v1421 = vadd.f32 %v1420, 1.0
        %v1422 = vrcp.pop %v1421
        %v1423 = vmul.f32 1.0, %v1422
        %v1424 = vtanh.pop %v1410
        %v1425 = vxor.u32 %v1411, 2147483648
        %v1426 = vmul.f32 %v1425, 1.442695
        %v1427 = vpow.pop %v1426
        %v1428 = vadd.f32 %v1427, 1.0
        %v1429 = vrcp.pop %v1428
        %v1430 = vmul.f32 1.0, %v1429
        %v1431 = vmul.f32 %v1423, 0.0
        %v1432 = vmul.f32 %v1417, %v1424
        %v1433 = vadd.f32 %v1431, %v1432
        %v1434 = vtanh.pop %v1433
        %v1435 = vmul.f32 %v1430, %v1434
        %1436 = vst [vmem:[#allocation3] sm:$0xff] %v1435
        %v1437 = vld [vmem:[%s737] sm:$0xff]
        %v1438 = vld [vmem:[%s737 + $0x8] sm:$0xff]
        %v1439 = vld [vmem:[%s737 + $0x10] sm:$0xff]
        %v1440 = vld [vmem:[%s737 + $0x18] sm:$0xff]
        %1441 = vmatprep.subr.mxu0 %v1259
        %1442 = vmatpush1.msra.mxu0 %v1258
        %1443 = vmatprep.subr.mxu0 %v1255
        %1444 = vmatpush1.msra.mxu0 %v1254
        %1445 = vmatprep.subr.mxu0 %v1251
        %1446 = vmatpush1.msra.mxu0 %v1250
        %1447 = vmatprep.subr.mxu0 %v1247
        %1448 = vmatpush1.msra.mxu0 %v1246
        %1449 = vmatprep.subr.mxu0 %v1243
        %1450 = vmatpush1.msra.mxu0 %v1242
        %1451 = vmatprep.subr.mxu0 %v1239
        %1452 = vmatpush1.msra.mxu0 %v1238
        %1453 = vmatprep.subr.mxu0 %v1235
        %1454 = vmatpush1.msra.mxu0 %v1234
        %1455 = vmatprep.subr.mxu0 %v1231
        %1456 = vmatpush1.msra.mxu0 %v1230
        %1457 = vmatprep.subr.mxu0 %v1227
        %1458 = vmatpush1.msra.mxu0 %v1226
        %1459 = vmatprep.subr.mxu0 %v1223
        %1460 = vmatpush1.msra.mxu0 %v1222
        %1461 = vmatprep.subr.mxu0 %v1219
        %1462 = vmatpush1.msra.mxu0 %v1218
        %1463 = vmatprep.subr.mxu0 %v1215
        %1464 = vmatpush1.msra.mxu0 %v1214
        %1465 = vmatprep.subr.mxu0 %v1211
        %1466 = vmatpush1.msra.mxu0 %v1210
        %1467 = vmatprep.subr.mxu0 %v1207
        %1468 = vmatpush1.msra.mxu0 %v1206
        %1469 = vmatprep.subr.mxu0 %v1203
        %1470 = vmatpush1.msra.mxu0 %v1202
        %1471 = vmatprep.subr.mxu0 %v1199
        %1472 = vmatpush1.msra.mxu0 %v1198
        %1473 = vmatprep.subr.mxu0 0.0
        %1474 = vmatpush2.msra.mxu0 0.0
        %1475 = vmatprep.subr.mxu0 0.0
        %1476 = vmatpush2.msra.mxu0 0.0
        %1477 = vmatprep.subr.mxu0 0.0
        %1478 = vmatpush2.msra.mxu0 0.0
        %1479 = vmatprep.subr.mxu0 0.0
        %1480 = vmatpush2.msra.mxu0 0.0
        %1481 = vmatprep.subr.mxu0 0.0
        %1482 = vmatpush2.msra.mxu0 0.0
        %1483 = vmatprep.subr.mxu0 0.0
        %1484 = vmatpush2.msra.mxu0 0.0
        %1485 = vmatprep.subr.mxu0 0.0
        %1486 = vmatpush2.msra.mxu0 0.0
        %1487 = vmatprep.subr.mxu0 0.0
        %1488 = vmatpush2.msra.mxu0 0.0
        %1489 = vmatprep.subr.mxu0 0.0
        %1490 = vmatpush2.msra.mxu0 0.0
        %1491 = vmatprep.subr.mxu0 0.0
        %1492 = vmatpush2.msra.mxu0 0.0
        %1493 = vmatprep.subr.mxu0 0.0
        %1494 = vmatpush2.msra.mxu0 0.0
        %1495 = vmatprep.subr.mxu0 0.0
        %1496 = vmatpush2.msra.mxu0 0.0
        %1497 = vmatprep.subr.mxu0 0.0
        %1498 = vmatpush2.msra.mxu0 0.0
        %1499 = vmatprep.subr.mxu0 0.0
        %1500 = vmatpush2.msra.mxu0 0.0
        %1501 = vmatprep.subr.mxu0 0.0
        %1502 = vmatpush2.msra.mxu0 0.0
        %1503 = vmatprep.subr.mxu0 0.0
        %1504 = vmatpush2.msra.mxu0 0.0
        %1505 = vmatprep.mubr.f32.mxu0 0.0
        %1506 = vmatmul.mubr.f32.gmra.mxu0 %v1435
        %v1507 = vpop.f32.mrf.mxu0
        %v1508 = vadd.f32 0.0, %v1507
        %v1509 = vpop.f32.mrf.mxu0
        %v1510 = vadd.f32 0.0, %v1509
        %1511 = vdwg.mxu0
        %1512 = vmatprep.subr.mxu0 %v1261
        %1513 = vmatpush1.msra.mxu0 %v1260
        %1514 = vmatprep.subr.mxu0 %v1257
        %1515 = vmatpush1.msra.mxu0 %v1256
        %1516 = vmatprep.subr.mxu0 %v1253
        %1517 = vmatpush1.msra.mxu0 %v1252
        %1518 = vmatprep.subr.mxu0 %v1249
        %1519 = vmatpush1.msra.mxu0 %v1248
        %1520 = vmatprep.subr.mxu0 %v1245
        %1521 = vmatpush1.msra.mxu0 %v1244
        %1522 = vmatprep.subr.mxu0 %v1241
        %1523 = vmatpush1.msra.mxu0 %v1240
        %1524 = vmatprep.subr.mxu0 %v1237
        %1525 = vmatpush1.msra.mxu0 %v1236
        %1526 = vmatprep.subr.mxu0 %v1233
        %1527 = vmatpush1.msra.mxu0 %v1232
        %1528 = vmatprep.subr.mxu0 %v1229
        %1529 = vmatpush1.msra.mxu0 %v1228
        %1530 = vmatprep.subr.mxu0 %v1225
        %1531 = vmatpush1.msra.mxu0 %v1224
        %1532 = vmatprep.subr.mxu0 %v1221
        %1533 = vmatpush1.msra.mxu0 %v1220
        %1534 = vmatprep.subr.mxu0 %v1217
        %1535 = vmatpush1.msra.mxu0 %v1216
        %1536 = vmatprep.subr.mxu0 %v1213
        %1537 = vmatpush1.msra.mxu0 %v1212
        %1538 = vmatprep.subr.mxu0 %v1209
        %1539 = vmatpush1.msra.mxu0 %v1208
        %1540 = vmatprep.subr.mxu0 %v1205
        %1541 = vmatpush1.msra.mxu0 %v1204
        %1542 = vmatprep.subr.mxu0 %v1201
        %1543 = vmatpush1.msra.mxu0 %v1200
        %1544 = vmatprep.subr.mxu0 0.0
        %1545 = vmatpush2.msra.mxu0 0.0
        %1546 = vmatprep.subr.mxu0 0.0
        %1547 = vmatpush2.msra.mxu0 0.0
        %1548 = vmatprep.subr.mxu0 0.0
        %1549 = vmatpush2.msra.mxu0 0.0
        %1550 = vmatprep.subr.mxu0 0.0
        %1551 = vmatpush2.msra.mxu0 0.0
        %1552 = vmatprep.subr.mxu0 0.0
        %1553 = vmatpush2.msra.mxu0 0.0
        %1554 = vmatprep.subr.mxu0 0.0
        %1555 = vmatpush2.msra.mxu0 0.0
        %1556 = vmatprep.subr.mxu0 0.0
        %1557 = vmatpush2.msra.mxu0 0.0
        %1558 = vmatprep.subr.mxu0 0.0
        %1559 = vmatpush2.msra.mxu0 0.0
        %1560 = vmatprep.subr.mxu0 0.0
        %1561 = vmatpush2.msra.mxu0 0.0
        %1562 = vmatprep.subr.mxu0 0.0
        %1563 = vmatpush2.msra.mxu0 0.0
        %1564 = vmatprep.subr.mxu0 0.0
        %1565 = vmatpush2.msra.mxu0 0.0
        %1566 = vmatprep.subr.mxu0 0.0
        %1567 = vmatpush2.msra.mxu0 0.0
        %1568 = vmatprep.subr.mxu0 0.0
        %1569 = vmatpush2.msra.mxu0 0.0
        %1570 = vmatprep.subr.mxu0 0.0
        %1571 = vmatpush2.msra.mxu0 0.0
        %1572 = vmatprep.subr.mxu0 0.0
        %1573 = vmatpush2.msra.mxu0 0.0
        %1574 = vmatprep.subr.mxu0 0.0
        %1575 = vmatpush2.msra.mxu0 0.0
        %1576 = vmatprep.mubr.f32.mxu0 0.0
        %1577 = vmatmul.mubr.f32.gmra.mxu0 %v1435
        %v1578 = vpop.f32.mrf.mxu0
        %v1579 = vadd.f32 0.0, %v1578
        %v1580 = vpop.f32.mrf.mxu0
        %v1581 = vadd.f32 0.0, %v1580
        %1582 = vdwg.mxu0
        %v1583 = vadd.f32 %v1437, %v1508
        %v1584 = vadd.f32 %v1438, %v1510
        %v1585 = vadd.f32 %v1439, %v1579
        %v1586 = vadd.f32 %v1440, %v1581
        %v1587 = vxor.u32 %v1583, 2147483648
        %v1588 = vmul.f32 %v1587, 1.442695
        %v1589 = vpow.pop %v1588
        %v1590 = vadd.f32 %v1589, 1.0
        %v1591 = vrcp.pop %v1590
        %v1592 = vmul.f32 1.0, %v1591
        %v1593 = vxor.u32 %v1584, 2147483648
        %v1594 = vmul.f32 %v1593, 1.442695
        %v1595 = vpow.pop %v1594
        %v1596 = vadd.f32 %v1595, 1.0
        %v1597 = vrcp.pop %v1596
        %v1598 = vmul.f32 1.0, %v1597
        %v1599 = vtanh.pop %v1585
        %v1600 = vxor.u32 %v1586, 2147483648
        %v1601 = vmul.f32 %v1600, 1.442695
        %v1602 = vpow.pop %v1601
        %v1603 = vadd.f32 %v1602, 1.0
        %v1604 = vrcp.pop %v1603
        %v1605 = vmul.f32 1.0, %v1604
        %v1606 = vmul.f32 %v1598, %v1433
        %v1607 = vmul.f32 %v1592, %v1599
        %v1608 = vadd.f32 %v1606, %v1607
        %v1609 = vtanh.pop %v1608
        %v1610 = vmul.f32 %v1605, %v1609
        %s1611 = scalar_lea.vmem [#allocation3], 8
        %1612 = vst [vmem:[%s1611] sm:$0xff] %v1610
        %v1613 = vld [vmem:[%s889] sm:$0xff]
        %v1614 = vld [vmem:[%s889 + $0x8] sm:$0xff]
        %v1615 = vld [vmem:[%s889 + $0x10] sm:$0xff]
        %v1616 = vld [vmem:[%s889 + $0x18] sm:$0xff]
        %1617 = vmatprep.subr.mxu0 %v1259
        %1618 = vmatpush1.msra.mxu0 %v1258
        %1619 = vmatprep.subr.mxu0 %v1255
        %1620 = vmatpush1.msra.mxu0 %v1254
        %1621 = vmatprep.subr.mxu0 %v1251
        %1622 = vmatpush1.msra.mxu0 %v1250
        %1623 = vmatprep.subr.mxu0 %v1247
        %1624 = vmatpush1.msra.mxu0 %v1246
        %1625 = vmatprep.subr.mxu0 %v1243
        %1626 = vmatpush1.msra.mxu0 %v1242
        %1627 = vmatprep.subr.mxu0 %v1239
        %1628 = vmatpush1.msra.mxu0 %v1238
        %1629 = vmatprep.subr.mxu0 %v1235
        %1630 = vmatpush1.msra.mxu0 %v1234
        %1631 = vmatprep.subr.mxu0 %v1231
        %1632 = vmatpush1.msra.mxu0 %v1230
        %1633 = vmatprep.subr.mxu0 %v1227
        %1634 = vmatpush1.msra.mxu0 %v1226
        %1635 = vmatprep.subr.mxu0 %v1223
        %1636 = vmatpush1.msra.mxu0 %v1222
        %1637 = vmatprep.subr.mxu0 %v1219
        %1638 = vmatpush1.msra.mxu0 %v1218
        %1639 = vmatprep.subr.mxu0 %v1215
        %1640 = vmatpush1.msra.mxu0 %v1214
        %1641 = vmatprep.subr.mxu0 %v1211
        %1642 = vmatpush1.msra.mxu0 %v1210
        %1643 = vmatprep.subr.mxu0 %v1207
        %1644 = vmatpush1.msra.mxu0 %v1206
        %1645 = vmatprep.subr.mxu0 %v1203
        %1646 = vmatpush1.msra.mxu0 %v1202
        %1647 = vmatprep.subr.mxu0 %v1199
        %1648 = vmatpush1.msra.mxu0 %v1198
        %1649 = vmatprep.subr.mxu0 0.0
        %1650 = vmatpush2.msra.mxu0 0.0
        %1651 = vmatprep.subr.mxu0 0.0
        %1652 = vmatpush2.msra.mxu0 0.0
        %1653 = vmatprep.subr.mxu0 0.0
        %1654 = vmatpush2.msra.mxu0 0.0
        %1655 = vmatprep.subr.mxu0 0.0
        %1656 = vmatpush2.msra.mxu0 0.0
        %1657 = vmatprep.subr.mxu0 0.0
        %1658 = vmatpush2.msra.mxu0 0.0
        %1659 = vmatprep.subr.mxu0 0.0
        %1660 = vmatpush2.msra.mxu0 0.0
        %1661 = vmatprep.subr.mxu0 0.0
        %1662 = vmatpush2.msra.mxu0 0.0
        %1663 = vmatprep.subr.mxu0 0.0
        %1664 = vmatpush2.msra.mxu0 0.0
        %1665 = vmatprep.subr.mxu0 0.0
        %1666 = vmatpush2.msra.mxu0 0.0
        %1667 = vmatprep.subr.mxu0 0.0
        %1668 = vmatpush2.msra.mxu0 0.0
        %1669 = vmatprep.subr.mxu0 0.0
        %1670 = vmatpush2.msra.mxu0 0.0
        %1671 = vmatprep.subr.mxu0 0.0
        %1672 = vmatpush2.msra.mxu0 0.0
        %1673 = vmatprep.subr.mxu0 0.0
        %1674 = vmatpush2.msra.mxu0 0.0
        %1675 = vmatprep.subr.mxu0 0.0
        %1676 = vmatpush2.msra.mxu0 0.0
        %1677 = vmatprep.subr.mxu0 0.0
        %1678 = vmatpush2.msra.mxu0 0.0
        %1679 = vmatprep.subr.mxu0 0.0
        %1680 = vmatpush2.msra.mxu0 0.0
        %1681 = vmatprep.mubr.f32.mxu0 0.0
        %1682 = vmatmul.mubr.f32.gmra.mxu0 %v1610
        %v1683 = vpop.f32.mrf.mxu0
        %v1684 = vadd.f32 0.0, %v1683
        %v1685 = vpop.f32.mrf.mxu0
        %v1686 = vadd.f32 0.0, %v1685
        %1687 = vdwg.mxu0
        %1688 = vmatprep.subr.mxu0 %v1261
        %1689 = vmatpush1.msra.mxu0 %v1260
        %1690 = vmatprep.subr.mxu0 %v1257
        %1691 = vmatpush1.msra.mxu0 %v1256
        %1692 = vmatprep.subr.mxu0 %v1253
        %1693 = vmatpush1.msra.mxu0 %v1252
        %1694 = vmatprep.subr.mxu0 %v1249
        %1695 = vmatpush1.msra.mxu0 %v1248
        %1696 = vmatprep.subr.mxu0 %v1245
        %1697 = vmatpush1.msra.mxu0 %v1244
        %1698 = vmatprep.subr.mxu0 %v1241
        %1699 = vmatpush1.msra.mxu0 %v1240
        %1700 = vmatprep.subr.mxu0 %v1237
        %1701 = vmatpush1.msra.mxu0 %v1236
        %1702 = vmatprep.subr.mxu0 %v1233
        %1703 = vmatpush1.msra.mxu0 %v1232
        %1704 = vmatprep.subr.mxu0 %v1229
        %1705 = vmatpush1.msra.mxu0 %v1228
        %1706 = vmatprep.subr.mxu0 %v1225
        %1707 = vmatpush1.msra.mxu0 %v1224
        %1708 = vmatprep.subr.mxu0 %v1221
        %1709 = vmatpush1.msra.mxu0 %v1220
        %1710 = vmatprep.subr.mxu0 %v1217
        %1711 = vmatpush1.msra.mxu0 %v1216
        %1712 = vmatprep.subr.mxu0 %v1213
        %1713 = vmatpush1.msra.mxu0 %v1212
        %1714 = vmatprep.subr.mxu0 %v1209
        %1715 = vmatpush1.msra.mxu0 %v1208
        %1716 = vmatprep.subr.mxu0 %v1205
        %1717 = vmatpush1.msra.mxu0 %v1204
        %1718 = vmatprep.subr.mxu0 %v1201
        %1719 = vmatpush1.msra.mxu0 %v1200
        %1720 = vmatprep.subr.mxu0 0.0
        %1721 = vmatpush2.msra.mxu0 0.0
        %1722 = vmatprep.subr.mxu0 0.0
        %1723 = vmatpush2.msra.mxu0 0.0
        %1724 = vmatprep.subr.mxu0 0.0
        %1725 = vmatpush2.msra.mxu0 0.0
        %1726 = vmatprep.subr.mxu0 0.0
        %1727 = vmatpush2.msra.mxu0 0.0
        %1728 = vmatprep.subr.mxu0 0.0
        %1729 = vmatpush2.msra.mxu0 0.0
        %1730 = vmatprep.subr.mxu0 0.0
        %1731 = vmatpush2.msra.mxu0 0.0
        %1732 = vmatprep.subr.mxu0 0.0
        %1733 = vmatpush2.msra.mxu0 0.0
        %1734 = vmatprep.subr.mxu0 0.0
        %1735 = vmatpush2.msra.mxu0 0.0
        %1736 = vmatprep.subr.mxu0 0.0
        %1737 = vmatpush2.msra.mxu0 0.0
        %1738 = vmatprep.subr.mxu0 0.0
        %1739 = vmatpush2.msra.mxu0 0.0
        %1740 = vmatprep.subr.mxu0 0.0
        %1741 = vmatpush2.msra.mxu0 0.0
        %1742 = vmatprep.subr.mxu0 0.0
        %1743 = vmatpush2.msra.mxu0 0.0
        %1744 = vmatprep.subr.mxu0 0.0
        %1745 = vmatpush2.msra.mxu0 0.0
        %1746 = vmatprep.subr.mxu0 0.0
        %1747 = vmatpush2.msra.mxu0 0.0
        %1748 = vmatprep.subr.mxu0 0.0
        %1749 = vmatpush2.msra.mxu0 0.0
        %1750 = vmatprep.subr.mxu0 0.0
        %1751 = vmatpush2.msra.mxu0 0.0
        %1752 = vmatprep.mubr.f32.mxu0 0.0
        %1753 = vmatmul.mubr.f32.gmra.mxu0 %v1610
        %v1754 = vpop.f32.mrf.mxu0
        %v1755 = vadd.f32 0.0, %v1754
        %v1756 = vpop.f32.mrf.mxu0
        %v1757 = vadd.f32 0.0, %v1756
        %1758 = vdwg.mxu0
        %v1759 = vadd.f32 %v1613, %v1684
        %v1760 = vadd.f32 %v1614, %v1686
        %v1761 = vadd.f32 %v1615, %v1755
        %v1762 = vadd.f32 %v1616, %v1757
        %v1763 = vxor.u32 %v1759, 2147483648
        %v1764 = vmul.f32 %v1763, 1.442695
        %v1765 = vpow.pop %v1764
        %v1766 = vadd.f32 %v1765, 1.0
        %v1767 = vrcp.pop %v1766
        %v1768 = vmul.f32 1.0, %v1767
        %v1769 = vxor.u32 %v1760, 2147483648
        %v1770 = vmul.f32 %v1769, 1.442695
        %v1771 = vpow.pop %v1770
        %v1772 = vadd.f32 %v1771, 1.0
        %v1773 = vrcp.pop %v1772
        %v1774 = vmul.f32 1.0, %v1773
        %v1775 = vtanh.pop %v1761
        %v1776 = vxor.u32 %v1762, 2147483648
        %v1777 = vmul.f32 %v1776, 1.442695
        %v1778 = vpow.pop %v1777
        %v1779 = vadd.f32 %v1778, 1.0
        %v1780 = vrcp.pop %v1779
        %v1781 = vmul.f32 1.0, %v1780
        %v1782 = vmul.f32 %v1774, %v1608
        %v1783 = vmul.f32 %v1768, %v1775
        %v1784 = vadd.f32 %v1782, %v1783
        %v1785 = vtanh.pop %v1784
        %v1786 = vmul.f32 %v1781, %v1785
        %s1787 = scalar_lea.vmem [#allocation3], 16
        %1788 = vst [vmem:[%s1787] sm:$0xff] %v1786
        %v1789 = vld [vmem:[%s1041] sm:$0xff]
        %v1790 = vld [vmem:[%s1041 + $0x8] sm:$0xff]
        %v1791 = vld [vmem:[%s1041 + $0x10] sm:$0xff]
        %v1792 = vld [vmem:[%s1041 + $0x18] sm:$0xff]
        %1793 = vmatprep.subr.mxu0 %v1259
        %1794 = vmatpush1.msra.mxu0 %v1258
        %1795 = vmatprep.subr.mxu0 %v1255
        %1796 = vmatpush1.msra.mxu0 %v1254
        %1797 = vmatprep.subr.mxu0 %v1251
        %1798 = vmatpush1.msra.mxu0 %v1250
        %1799 = vmatprep.subr.mxu0 %v1247
        %1800 = vmatpush1.msra.mxu0 %v1246
        %1801 = vmatprep.subr.mxu0 %v1243
        %1802 = vmatpush1.msra.mxu0 %v1242
        %1803 = vmatprep.subr.mxu0 %v1239
        %1804 = vmatpush1.msra.mxu0 %v1238
        %1805 = vmatprep.subr.mxu0 %v1235
        %1806 = vmatpush1.msra.mxu0 %v1234
        %1807 = vmatprep.subr.mxu0 %v1231
        %1808 = vmatpush1.msra.mxu0 %v1230
        %1809 = vmatprep.subr.mxu0 %v1227
        %1810 = vmatpush1.msra.mxu0 %v1226
        %1811 = vmatprep.subr.mxu0 %v1223
        %1812 = vmatpush1.msra.mxu0 %v1222
        %1813 = vmatprep.subr.mxu0 %v1219
        %1814 = vmatpush1.msra.mxu0 %v1218
        %1815 = vmatprep.subr.mxu0 %v1215
        %1816 = vmatpush1.msra.mxu0 %v1214
        %1817 = vmatprep.subr.mxu0 %v1211
        %1818 = vmatpush1.msra.mxu0 %v1210
        %1819 = vmatprep.subr.mxu0 %v1207
        %1820 = vmatpush1.msra.mxu0 %v1206
        %1821 = vmatprep.subr.mxu0 %v1203
        %1822 = vmatpush1.msra.mxu0 %v1202
        %1823 = vmatprep.subr.mxu0 %v1199
        %1824 = vmatpush1.msra.mxu0 %v1198
        %1825 = vmatprep.subr.mxu0 0.0
        %1826 = vmatpush2.msra.mxu0 0.0
        %1827 = vmatprep.subr.mxu0 0.0
        %1828 = vmatpush2.msra.mxu0 0.0
        %1829 = vmatprep.subr.mxu0 0.0
        %1830 = vmatpush2.msra.mxu0 0.0
        %1831 = vmatprep.subr.mxu0 0.0
        %1832 = vmatpush2.msra.mxu0 0.0
        %1833 = vmatprep.subr.mxu0 0.0
        %1834 = vmatpush2.msra.mxu0 0.0
        %1835 = vmatprep.subr.mxu0 0.0
        %1836 = vmatpush2.msra.mxu0 0.0
        %1837 = vmatprep.subr.mxu0 0.0
        %1838 = vmatpush2.msra.mxu0 0.0
        %1839 = vmatprep.subr.mxu0 0.0
        %1840 = vmatpush2.msra.mxu0 0.0
        %1841 = vmatprep.subr.mxu0 0.0
        %1842 = vmatpush2.msra.mxu0 0.0
        %1843 = vmatprep.subr.mxu0 0.0
        %1844 = vmatpush2.msra.mxu0 0.0
        %1845 = vmatprep.subr.mxu0 0.0
        %1846 = vmatpush2.msra.mxu0 0.0
        %1847 = vmatprep.subr.mxu0 0.0
        %1848 = vmatpush2.msra.mxu0 0.0
        %1849 = vmatprep.subr.mxu0 0.0
        %1850 = vmatpush2.msra.mxu0 0.0
        %1851 = vmatprep.subr.mxu0 0.0
        %1852 = vmatpush2.msra.mxu0 0.0
        %1853 = vmatprep.subr.mxu0 0.0
        %1854 = vmatpush2.msra.mxu0 0.0
        %1855 = vmatprep.subr.mxu0 0.0
        %1856 = vmatpush2.msra.mxu0 0.0
        %1857 = vmatprep.mubr.f32.mxu0 0.0
        %1858 = vmatmul.mubr.f32.gmra.mxu0 %v1786
        %v1859 = vpop.f32.mrf.mxu0
        %v1860 = vadd.f32 0.0, %v1859
        %v1861 = vpop.f32.mrf.mxu0
        %v1862 = vadd.f32 0.0, %v1861
        %1863 = vdwg.mxu0
        %1864 = vmatprep.subr.mxu0 %v1261
        %1865 = vmatpush1.msra.mxu0 %v1260
        %1866 = vmatprep.subr.mxu0 %v1257
        %1867 = vmatpush1.msra.mxu0 %v1256
        %1868 = vmatprep.subr.mxu0 %v1253
        %1869 = vmatpush1.msra.mxu0 %v1252
        %1870 = vmatprep.subr.mxu0 %v1249
        %1871 = vmatpush1.msra.mxu0 %v1248
        %1872 = vmatprep.subr.mxu0 %v1245
        %1873 = vmatpush1.msra.mxu0 %v1244
        %1874 = vmatprep.subr.mxu0 %v1241
        %1875 = vmatpush1.msra.mxu0 %v1240
        %1876 = vmatprep.subr.mxu0 %v1237
        %1877 = vmatpush1.msra.mxu0 %v1236
        %1878 = vmatprep.subr.mxu0 %v1233
        %1879 = vmatpush1.msra.mxu0 %v1232
        %1880 = vmatprep.subr.mxu0 %v1229
        %1881 = vmatpush1.msra.mxu0 %v1228
        %1882 = vmatprep.subr.mxu0 %v1225
        %1883 = vmatpush1.msra.mxu0 %v1224
        %1884 = vmatprep.subr.mxu0 %v1221
        %1885 = vmatpush1.msra.mxu0 %v1220
        %1886 = vmatprep.subr.mxu0 %v1217
        %1887 = vmatpush1.msra.mxu0 %v1216
        %1888 = vmatprep.subr.mxu0 %v1213
        %1889 = vmatpush1.msra.mxu0 %v1212
        %1890 = vmatprep.subr.mxu0 %v1209
        %1891 = vmatpush1.msra.mxu0 %v1208
        %1892 = vmatprep.subr.mxu0 %v1205
        %1893 = vmatpush1.msra.mxu0 %v1204
        %1894 = vmatprep.subr.mxu0 %v1201
        %1895 = vmatpush1.msra.mxu0 %v1200
        %1896 = vmatprep.subr.mxu0 0.0
        %1897 = vmatpush2.msra.mxu0 0.0
        %1898 = vmatprep.subr.mxu0 0.0
        %1899 = vmatpush2.msra.mxu0 0.0
        %1900 = vmatprep.subr.mxu0 0.0
        %1901 = vmatpush2.msra.mxu0 0.0
        %1902 = vmatprep.subr.mxu0 0.0
        %1903 = vmatpush2.msra.mxu0 0.0
        %1904 = vmatprep.subr.mxu0 0.0
        %1905 = vmatpush2.msra.mxu0 0.0
        %1906 = vmatprep.subr.mxu0 0.0
        %1907 = vmatpush2.msra.mxu0 0.0
        %1908 = vmatprep.subr.mxu0 0.0
        %1909 = vmatpush2.msra.mxu0 0.0
        %1910 = vmatprep.subr.mxu0 0.0
        %1911 = vmatpush2.msra.mxu0 0.0
        %1912 = vmatprep.subr.mxu0 0.0
        %1913 = vmatpush2.msra.mxu0 0.0
        %1914 = vmatprep.subr.mxu0 0.0
        %1915 = vmatpush2.msra.mxu0 0.0
        %1916 = vmatprep.subr.mxu0 0.0
        %1917 = vmatpush2.msra.mxu0 0.0
        %1918 = vmatprep.subr.mxu0 0.0
        %1919 = vmatpush2.msra.mxu0 0.0
        %1920 = vmatprep.subr.mxu0 0.0
        %1921 = vmatpush2.msra.mxu0 0.0
        %1922 = vmatprep.subr.mxu0 0.0
        %1923 = vmatpush2.msra.mxu0 0.0
        %1924 = vmatprep.subr.mxu0 0.0
        %1925 = vmatpush2.msra.mxu0 0.0
        %1926 = vmatprep.subr.mxu0 0.0
        %1927 = vmatpush2.msra.mxu0 0.0
        %1928 = vmatprep.mubr.f32.mxu0 0.0
        %1929 = vmatmul.mubr.f32.gmra.mxu0 %v1786
        %v1930 = vpop.f32.mrf.mxu0
        %v1931 = vadd.f32 0.0, %v1930
        %v1932 = vpop.f32.mrf.mxu0
        %v1933 = vadd.f32 0.0, %v1932
        %1934 = vdwg.mxu0
        %v1935 = vadd.f32 %v1789, %v1860
        %v1936 = vadd.f32 %v1790, %v1862
        %v1937 = vadd.f32 %v1791, %v1931
        %v1938 = vadd.f32 %v1792, %v1933
        %v1939 = vxor.u32 %v1935, 2147483648
        %v1940 = vmul.f32 %v1939, 1.442695
        %v1941 = vpow.pop %v1940
        %v1942 = vadd.f32 %v1941, 1.0
        %v1943 = vrcp.pop %v1942
        %v1944 = vmul.f32 1.0, %v1943
        %v1945 = vxor.u32 %v1936, 2147483648
        %v1946 = vmul.f32 %v1945, 1.442695
        %v1947 = vpow.pop %v1946
        %v1948 = vadd.f32 %v1947, 1.0
        %v1949 = vrcp.pop %v1948
        %v1950 = vmul.f32 1.0, %v1949
        %v1951 = vtanh.pop %v1937
        %v1952 = vxor.u32 %v1938, 2147483648
        %v1953 = vmul.f32 %v1952, 1.442695
        %v1954 = vpow.pop %v1953
        %v1955 = vadd.f32 %v1954, 1.0
        %v1956 = vrcp.pop %v1955
        %v1957 = vmul.f32 1.0, %v1956
        %v1958 = vmul.f32 %v1950, %v1784
        %v1959 = vmul.f32 %v1944, %v1951
        %v1960 = vadd.f32 %v1958, %v1959
        %v1961 = vtanh.pop %v1960
        %v1962 = vmul.f32 %v1957, %v1961
        %s1963 = scalar_lea.vmem [#allocation3], 24
        %1964 = vst [vmem:[%s1963] sm:$0xff] %v1962
        %v1965 = vld [vmem:[%s1193] sm:$0xff]
        %v1966 = vld [vmem:[%s1193 + $0x8] sm:$0xff]
        %v1967 = vld [vmem:[%s1193 + $0x10] sm:$0xff]
        %v1968 = vld [vmem:[%s1193 + $0x18] sm:$0xff]
        %1969 = vmatprep.subr.mxu0 %v1259
        %1970 = vmatpush1.msra.mxu0 %v1258
        %1971 = vmatprep.subr.mxu0 %v1255
        %1972 = vmatpush1.msra.mxu0 %v1254
        %1973 = vmatprep.subr.mxu0 %v1251
        %1974 = vmatpush1.msra.mxu0 %v1250
        %1975 = vmatprep.subr.mxu0 %v1247
        %1976 = vmatpush1.msra.mxu0 %v1246
        %1977 = vmatprep.subr.mxu0 %v1243
        %1978 = vmatpush1.msra.mxu0 %v1242
        %1979 = vmatprep.subr.mxu0 %v1239
        %1980 = vmatpush1.msra.mxu0 %v1238
        %1981 = vmatprep.subr.mxu0 %v1235
        %1982 = vmatpush1.msra.mxu0 %v1234
        %1983 = vmatprep.subr.mxu0 %v1231
        %1984 = vmatpush1.msra.mxu0 %v1230
        %1985 = vmatprep.subr.mxu0 %v1227
        %1986 = vmatpush1.msra.mxu0 %v1226
        %1987 = vmatprep.subr.mxu0 %v1223
        %1988 = vmatpush1.msra.mxu0 %v1222
        %1989 = vmatprep.subr.mxu0 %v1219
        %1990 = vmatpush1.msra.mxu0 %v1218
        %1991 = vmatprep.subr.mxu0 %v1215
        %1992 = vmatpush1.msra.mxu0 %v1214
        %1993 = vmatprep.subr.mxu0 %v1211
        %1994 = vmatpush1.msra.mxu0 %v1210
        %1995 = vmatprep.subr.mxu0 %v1207
        %1996 = vmatpush1.msra.mxu0 %v1206
        %1997 = vmatprep.subr.mxu0 %v1203
        %1998 = vmatpush1.msra.mxu0 %v1202
        %1999 = vmatprep.subr.mxu0 %v1199
        %2000 = vmatpush1.msra.mxu0 %v1198
        %2001 = vmatprep.subr.mxu0 0.0
        %2002 = vmatpush2.msra.mxu0 0.0
        %2003 = vmatprep.subr.mxu0 0.0
        %2004 = vmatpush2.msra.mxu0 0.0
        %2005 = vmatprep.subr.mxu0 0.0
        %2006 = vmatpush2.msra.mxu0 0.0
        %2007 = vmatprep.subr.mxu0 0.0
        %2008 = vmatpush2.msra.mxu0 0.0
        %2009 = vmatprep.subr.mxu0 0.0
        %2010 = vmatpush2.msra.mxu0 0.0
        %2011 = vmatprep.subr.mxu0 0.0
        %2012 = vmatpush2.msra.mxu0 0.0
        %2013 = vmatprep.subr.mxu0 0.0
        %2014 = vmatpush2.msra.mxu0 0.0
        %2015 = vmatprep.subr.mxu0 0.0
        %2016 = vmatpush2.msra.mxu0 0.0
        %2017 = vmatprep.subr.mxu0 0.0
        %2018 = vmatpush2.msra.mxu0 0.0
        %2019 = vmatprep.subr.mxu0 0.0
        %2020 = vmatpush2.msra.mxu0 0.0
        %2021 = vmatprep.subr.mxu0 0.0
        %2022 = vmatpush2.msra.mxu0 0.0
        %2023 = vmatprep.subr.mxu0 0.0
        %2024 = vmatpush2.msra.mxu0 0.0
        %2025 = vmatprep.subr.mxu0 0.0
        %2026 = vmatpush2.msra.mxu0 0.0
        %2027 = vmatprep.subr.mxu0 0.0
        %2028 = vmatpush2.msra.mxu0 0.0
        %2029 = vmatprep.subr.mxu0 0.0
        %2030 = vmatpush2.msra.mxu0 0.0
        %2031 = vmatprep.subr.mxu0 0.0
        %2032 = vmatpush2.msra.mxu0 0.0
        %2033 = vmatprep.mubr.f32.mxu0 0.0
        %2034 = vmatmul.mubr.f32.gmra.mxu0 %v1962
        %v2035 = vpop.f32.mrf.mxu0
        %v2036 = vadd.f32 0.0, %v2035
        %v2037 = vpop.f32.mrf.mxu0
        %v2038 = vadd.f32 0.0, %v2037
        %2039 = vdwg.mxu0
        %2040 = vmatprep.subr.mxu0 %v1261
        %2041 = vmatpush1.msra.mxu0 %v1260
        %2042 = vmatprep.subr.mxu0 %v1257
        %2043 = vmatpush1.msra.mxu0 %v1256
        %2044 = vmatprep.subr.mxu0 %v1253
        %2045 = vmatpush1.msra.mxu0 %v1252
        %2046 = vmatprep.subr.mxu0 %v1249
        %2047 = vmatpush1.msra.mxu0 %v1248
        %2048 = vmatprep.subr.mxu0 %v1245
        %2049 = vmatpush1.msra.mxu0 %v1244
        %2050 = vmatprep.subr.mxu0 %v1241
        %2051 = vmatpush1.msra.mxu0 %v1240
        %2052 = vmatprep.subr.mxu0 %v1237
        %2053 = vmatpush1.msra.mxu0 %v1236
        %2054 = vmatprep.subr.mxu0 %v1233
        %2055 = vmatpush1.msra.mxu0 %v1232
        %2056 = vmatprep.subr.mxu0 %v1229
        %2057 = vmatpush1.msra.mxu0 %v1228
        %2058 = vmatprep.subr.mxu0 %v1225
        %2059 = vmatpush1.msra.mxu0 %v1224
        %2060 = vmatprep.subr.mxu0 %v1221
        %2061 = vmatpush1.msra.mxu0 %v1220
        %2062 = vmatprep.subr.mxu0 %v1217
        %2063 = vmatpush1.msra.mxu0 %v1216
        %2064 = vmatprep.subr.mxu0 %v1213
        %2065 = vmatpush1.msra.mxu0 %v1212
        %2066 = vmatprep.subr.mxu0 %v1209
        %2067 = vmatpush1.msra.mxu0 %v1208
        %2068 = vmatprep.subr.mxu0 %v1205
        %2069 = vmatpush1.msra.mxu0 %v1204
        %2070 = vmatprep.subr.mxu0 %v1201
        %2071 = vmatpush1.msra.mxu0 %v1200
        %2072 = vmatprep.subr.mxu0 0.0
        %2073 = vmatpush2.msra.mxu0 0.0
        %2074 = vmatprep.subr.mxu0 0.0
        %2075 = vmatpush2.msra.mxu0 0.0
        %2076 = vmatprep.subr.mxu0 0.0
        %2077 = vmatpush2.msra.mxu0 0.0
        %2078 = vmatprep.subr.mxu0 0.0
        %2079 = vmatpush2.msra.mxu0 0.0
        %2080 = vmatprep.subr.mxu0 0.0
        %2081 = vmatpush2.msra.mxu0 0.0
        %2082 = vmatprep.subr.mxu0 0.0
        %2083 = vmatpush2.msra.mxu0 0.0
        %2084 = vmatprep.subr.mxu0 0.0
        %2085 = vmatpush2.msra.mxu0 0.0
        %2086 = vmatprep.subr.mxu0 0.0
        %2087 = vmatpush2.msra.mxu0 0.0
        %2088 = vmatprep.subr.mxu0 0.0
        %2089 = vmatpush2.msra.mxu0 0.0
        %2090 = vmatprep.subr.mxu0 0.0
        %2091 = vmatpush2.msra.mxu0 0.0
        %2092 = vmatprep.subr.mxu0 0.0
        %2093 = vmatpush2.msra.mxu0 0.0
        %2094 = vmatprep.subr.mxu0 0.0
        %2095 = vmatpush2.msra.mxu0 0.0
        %2096 = vmatprep.subr.mxu0 0.0
        %2097 = vmatpush2.msra.mxu0 0.0
        %2098 = vmatprep.subr.mxu0 0.0
        %2099 = vmatpush2.msra.mxu0 0.0
        %2100 = vmatprep.subr.mxu0 0.0
        %2101 = vmatpush2.msra.mxu0 0.0
        %2102 = vmatprep.subr.mxu0 0.0
        %2103 = vmatpush2.msra.mxu0 0.0
        %2104 = vmatprep.mubr.f32.mxu0 0.0
        %2105 = vmatmul.mubr.f32.gmra.mxu0 %v1962
        %v2106 = vpop.f32.mrf.mxu0
        %v2107 = vadd.f32 0.0, %v2106
        %v2108 = vpop.f32.mrf.mxu0
        %v2109 = vadd.f32 0.0, %v2108
        %2110 = vdwg.mxu0
        %v2111 = vadd.f32 %v1965, %v2036
        %v2112 = vadd.f32 %v1966, %v2038
        %v2113 = vadd.f32 %v1967, %v2107
        %v2114 = vadd.f32 %v1968, %v2109
        %v2115 = vxor.u32 %v2111, 2147483648
        %v2116 = vmul.f32 %v2115, 1.442695
        %v2117 = vpow.pop %v2116
        %v2118 = vadd.f32 %v2117, 1.0
        %v2119 = vrcp.pop %v2118
        %v2120 = vmul.f32 1.0, %v2119
        %v2121 = vxor.u32 %v2112, 2147483648
        %v2122 = vmul.f32 %v2121, 1.442695
        %v2123 = vpow.pop %v2122
        %v2124 = vadd.f32 %v2123, 1.0
        %v2125 = vrcp.pop %v2124
        %v2126 = vmul.f32 1.0, %v2125
        %v2127 = vtanh.pop %v2113
        %v2128 = vxor.u32 %v2114, 2147483648
        %v2129 = vmul.f32 %v2128, 1.442695
        %v2130 = vpow.pop %v2129
        %v2131 = vadd.f32 %v2130, 1.0
        %v2132 = vrcp.pop %v2131
        %v2133 = vmul.f32 1.0, %v2132
        %v2134 = vmul.f32 %v2126, %v1960
        %v2135 = vmul.f32 %v2120, %v2127
        %v2136 = vadd.f32 %v2134, %v2135
        %v2137 = vtanh.pop %v2136
        %v2138 = vmul.f32 %v2133, %v2137
        %s2139 = scalar_lea.vmem [#allocation3], 32
        %2140 = vst [vmem:[%s2139] sm:$0xff] %v2138
        %v2141 = vld [vmem:[%s5] sm:$0x1]
        %v2143 = vlaneseq
        %v2144 = vshrl.u32 %v2143, 7
        %v2145 = vsub.s32 0, %v2144
        %v2146 = vrot.slane %v2141, %v2145
        %v2148 = vld [vmem:[#allocation3] sm:$0xff]
        %v2149 = vld [vmem:[%s4] sm:$0xff]
        %v2150 = vld [vmem:[%s4 + $0x8] sm:$0xff]
        %v2151 = vld [vmem:[%s4 + $0x10] sm:$0xff]
        %v2152 = vld [vmem:[%s4 + $0x18] sm:$0xff]
        %v2153 = vld [vmem:[%s4 + $0x20] sm:$0xff]
        %v2154 = vld [vmem:[%s4 + $0x28] sm:$0xff]
        %v2155 = vld [vmem:[%s4 + $0x30] sm:$0xff]
        %v2156 = vld [vmem:[%s4 + $0x38] sm:$0xff]
        %v2157 = vld [vmem:[%s4 + $0x40] sm:$0xff]
        %v2158 = vld [vmem:[%s4 + $0x48] sm:$0xff]
        %v2159 = vld [vmem:[%s4 + $0x50] sm:$0xff]
        %v2160 = vld [vmem:[%s4 + $0x58] sm:$0xff]
        %v2161 = vld [vmem:[%s4 + $0x60] sm:$0xff]
        %v2162 = vld [vmem:[%s4 + $0x68] sm:$0xff]
        %v2163 = vld [vmem:[%s4 + $0x70] sm:$0xff]
        %v2164 = vld [vmem:[%s4 + $0x78] sm:$0xff]
        %2165 = vmatprep.subr.mxu0 0.0
        %2166 = vmatpush1.msra.mxu0 %v2164
        %2167 = vmatprep.subr.mxu0 0.0
        %2168 = vmatpush1.msra.mxu0 %v2163
        %2169 = vmatprep.subr.mxu0 0.0
        %2170 = vmatpush1.msra.mxu0 %v2162
        %2171 = vmatprep.subr.mxu0 0.0
        %2172 = vmatpush1.msra.mxu0 %v2161
        %2173 = vmatprep.subr.mxu0 0.0
        %2174 = vmatpush1.msra.mxu0 %v2160
        %2175 = vmatprep.subr.mxu0 0.0
        %2176 = vmatpush1.msra.mxu0 %v2159
        %2177 = vmatprep.subr.mxu0 0.0
        %2178 = vmatpush1.msra.mxu0 %v2158
        %2179 = vmatprep.subr.mxu0 0.0
        %2180 = vmatpush1.msra.mxu0 %v2157
        %2181 = vmatprep.subr.mxu0 0.0
        %2182 = vmatpush1.msra.mxu0 %v2156
        %2183 = vmatprep.subr.mxu0 0.0
        %2184 = vmatpush1.msra.mxu0 %v2155
        %2185 = vmatprep.subr.mxu0 0.0
        %2186 = vmatpush1.msra.mxu0 %v2154
        %2187 = vmatprep.subr.mxu0 0.0
        %2188 = vmatpush1.msra.mxu0 %v2153
        %2189 = vmatprep.subr.mxu0 0.0
        %2190 = vmatpush1.msra.mxu0 %v2152
        %2191 = vmatprep.subr.mxu0 0.0
        %2192 = vmatpush1.msra.mxu0 %v2151
        %2193 = vmatprep.subr.mxu0 0.0
        %2194 = vmatpush1.msra.mxu0 %v2150
        %2195 = vmatprep.subr.mxu0 0.0
        %2196 = vmatpush1.msra.mxu0 %v2149
        %2197 = vmatprep.subr.mxu0 0.0
        %2198 = vmatpush2.msra.mxu0 0.0
        %2199 = vmatprep.subr.mxu0 0.0
        %2200 = vmatpush2.msra.mxu0 0.0
        %2201 = vmatprep.subr.mxu0 0.0
        %2202 = vmatpush2.msra.mxu0 0.0
        %2203 = vmatprep.subr.mxu0 0.0
        %2204 = vmatpush2.msra.mxu0 0.0
        %2205 = vmatprep.subr.mxu0 0.0
        %2206 = vmatpush2.msra.mxu0 0.0
        %2207 = vmatprep.subr.mxu0 0.0
        %2208 = vmatpush2.msra.mxu0 0.0
        %2209 = vmatprep.subr.mxu0 0.0
        %2210 = vmatpush2.msra.mxu0 0.0
        %2211 = vmatprep.subr.mxu0 0.0
        %2212 = vmatpush2.msra.mxu0 0.0
        %2213 = vmatprep.subr.mxu0 0.0
        %2214 = vmatpush2.msra.mxu0 0.0
        %2215 = vmatprep.subr.mxu0 0.0
        %2216 = vmatpush2.msra.mxu0 0.0
        %2217 = vmatprep.subr.mxu0 0.0
        %2218 = vmatpush2.msra.mxu0 0.0
        %2219 = vmatprep.subr.mxu0 0.0
        %2220 = vmatpush2.msra.mxu0 0.0
        %2221 = vmatprep.subr.mxu0 0.0
        %2222 = vmatpush2.msra.mxu0 0.0
        %2223 = vmatprep.subr.mxu0 0.0
        %2224 = vmatpush2.msra.mxu0 0.0
        %2225 = vmatprep.subr.mxu0 0.0
        %2226 = vmatpush2.msra.mxu0 0.0
        %2227 = vmatprep.subr.mxu0 0.0
        %2228 = vmatpush2.msra.mxu0 0.0
        %2229 = vmatprep.mubr.f32.mxu0 0.0
        %2230 = vmatmul.mubr.f32.gmra.mxu0 %v2148
        %v2231 = vpop.f32.mrf.mxu0
        %v2232 = vadd.f32 0.0, %v2231
        %v2233 = vpop.f32.mrf.mxu0
        %2234 = vdwg.mxu0
        %v2235 = vadd.f32 %v2146, %v2232
        %v2236 = vld [vmem:[%s1611] sm:$0xff]
        %s2237 = scalar_lea.vmem %s4, 128
        %v2238 = vld [vmem:[%s2237] sm:$0xff]
        %v2239 = vld [vmem:[%s2237 + $0x8] sm:$0xff]
        %v2240 = vld [vmem:[%s2237 + $0x10] sm:$0xff]
        %v2241 = vld [vmem:[%s2237 + $0x18] sm:$0xff]
        %v2242 = vld [vmem:[%s2237 + $0x20] sm:$0xff]
        %v2243 = vld [vmem:[%s2237 + $0x28] sm:$0xff]
        %v2244 = vld [vmem:[%s2237 + $0x30] sm:$0xff]
        %v2245 = vld [vmem:[%s2237 + $0x38] sm:$0xff]
        %v2246 = vld [vmem:[%s2237 + $0x40] sm:$0xff]
        %v2247 = vld [vmem:[%s2237 + $0x48] sm:$0xff]
        %v2248 = vld [vmem:[%s2237 + $0x50] sm:$0xff]
        %v2249 = vld [vmem:[%s2237 + $0x58] sm:$0xff]
        %v2250 = vld [vmem:[%s2237 + $0x60] sm:$0xff]
        %v2251 = vld [vmem:[%s2237 + $0x68] sm:$0xff]
        %v2252 = vld [vmem:[%s2237 + $0x70] sm:$0xff]
        %v2253 = vld [vmem:[%s2237 + $0x78] sm:$0xff]
        %2254 = vmatprep.subr.mxu0 0.0
        %2255 = vmatpush1.msra.mxu0 %v2253
        %2256 = vmatprep.subr.mxu0 0.0
        %2257 = vmatpush1.msra.mxu0 %v2252
        %2258 = vmatprep.subr.mxu0 0.0
        %2259 = vmatpush1.msra.mxu0 %v2251
        %2260 = vmatprep.subr.mxu0 0.0
        %2261 = vmatpush1.msra.mxu0 %v2250
        %2262 = vmatprep.subr.mxu0 0.0
        %2263 = vmatpush1.msra.mxu0 %v2249
        %2264 = vmatprep.subr.mxu0 0.0
        %2265 = vmatpush1.msra.mxu0 %v2248
        %2266 = vmatprep.subr.mxu0 0.0
        %2267 = vmatpush1.msra.mxu0 %v2247
        %2268 = vmatprep.subr.mxu0 0.0
        %2269 = vmatpush1.msra.mxu0 %v2246
        %2270 = vmatprep.subr.mxu0 0.0
        %2271 = vmatpush1.msra.mxu0 %v2245
        %2272 = vmatprep.subr.mxu0 0.0
        %2273 = vmatpush1.msra.mxu0 %v2244
        %2274 = vmatprep.subr.mxu0 0.0
        %2275 = vmatpush1.msra.mxu0 %v2243
        %2276 = vmatprep.subr.mxu0 0.0
        %2277 = vmatpush1.msra.mxu0 %v2242
        %2278 = vmatprep.subr.mxu0 0.0
        %2279 = vmatpush1.msra.mxu0 %v2241
        %2280 = vmatprep.subr.mxu0 0.0
        %2281 = vmatpush1.msra.mxu0 %v2240
        %2282 = vmatprep.subr.mxu0 0.0
        %2283 = vmatpush1.msra.mxu0 %v2239
        %2284 = vmatprep.subr.mxu0 0.0
        %2285 = vmatpush1.msra.mxu0 %v2238
        %2286 = vmatprep.subr.mxu0 0.0
        %2287 = vmatpush2.msra.mxu0 0.0
        %2288 = vmatprep.subr.mxu0 0.0
        %2289 = vmatpush2.msra.mxu0 0.0
        %2290 = vmatprep.subr.mxu0 0.0
        %2291 = vmatpush2.msra.mxu0 0.0
        %2292 = vmatprep.subr.mxu0 0.0
        %2293 = vmatpush2.msra.mxu0 0.0
        %2294 = vmatprep.subr.mxu0 0.0
        %2295 = vmatpush2.msra.mxu0 0.0
        %2296 = vmatprep.subr.mxu0 0.0
        %2297 = vmatpush2.msra.mxu0 0.0
        %2298 = vmatprep.subr.mxu0 0.0
        %2299 = vmatpush2.msra.mxu0 0.0
        %2300 = vmatprep.subr.mxu0 0.0
        %2301 = vmatpush2.msra.mxu0 0.0
        %2302 = vmatprep.subr.mxu0 0.0
        %2303 = vmatpush2.msra.mxu0 0.0
        %2304 = vmatprep.subr.mxu0 0.0
        %2305 = vmatpush2.msra.mxu0 0.0
        %2306 = vmatprep.subr.mxu0 0.0
        %2307 = vmatpush2.msra.mxu0 0.0
        %2308 = vmatprep.subr.mxu0 0.0
        %2309 = vmatpush2.msra.mxu0 0.0
        %2310 = vmatprep.subr.mxu0 0.0
        %2311 = vmatpush2.msra.mxu0 0.0
        %2312 = vmatprep.subr.mxu0 0.0
        %2313 = vmatpush2.msra.mxu0 0.0
        %2314 = vmatprep.subr.mxu0 0.0
        %2315 = vmatpush2.msra.mxu0 0.0
        %2316 = vmatprep.subr.mxu0 0.0
        %2317 = vmatpush2.msra.mxu0 0.0
        %2318 = vmatprep.mubr.f32.mxu0 0.0
        %2319 = vmatmul.mubr.f32.gmra.mxu0 %v2236
        %v2320 = vpop.f32.mrf.mxu0
        %v2321 = vadd.f32 0.0, %v2320
        %v2322 = vpop.f32.mrf.mxu0
        %2323 = vdwg.mxu0
        %v2324 = vadd.f32 %v2235, %v2321
        %v2325 = vld [vmem:[%s1787] sm:$0xff]
        %s2326 = scalar_lea.vmem %s4, 256
        %v2327 = vld [vmem:[%s2326] sm:$0xff]
        %v2328 = vld [vmem:[%s2326 + $0x8] sm:$0xff]
        %v2329 = vld [vmem:[%s2326 + $0x10] sm:$0xff]
        %v2330 = vld [vmem:[%s2326 + $0x18] sm:$0xff]
        %v2331 = vld [vmem:[%s2326 + $0x20] sm:$0xff]
        %v2332 = vld [vmem:[%s2326 + $0x28] sm:$0xff]
        %v2333 = vld [vmem:[%s2326 + $0x30] sm:$0xff]
        %v2334 = vld [vmem:[%s2326 + $0x38] sm:$0xff]
        %v2335 = vld [vmem:[%s2326 + $0x40] sm:$0xff]
        %v2336 = vld [vmem:[%s2326 + $0x48] sm:$0xff]
        %v2337 = vld [vmem:[%s2326 + $0x50] sm:$0xff]
        %v2338 = vld [vmem:[%s2326 + $0x58] sm:$0xff]
        %v2339 = vld [vmem:[%s2326 + $0x60] sm:$0xff]
        %v2340 = vld [vmem:[%s2326 + $0x68] sm:$0xff]
        %v2341 = vld [vmem:[%s2326 + $0x70] sm:$0xff]
        %v2342 = vld [vmem:[%s2326 + $0x78] sm:$0xff]
        %2343 = vmatprep.subr.mxu0 0.0
        %2344 = vmatpush1.msra.mxu0 %v2342
        %2345 = vmatprep.subr.mxu0 0.0
        %2346 = vmatpush1.msra.mxu0 %v2341
        %2347 = vmatprep.subr.mxu0 0.0
        %2348 = vmatpush1.msra.mxu0 %v2340
        %2349 = vmatprep.subr.mxu0 0.0
        %2350 = vmatpush1.msra.mxu0 %v2339
        %2351 = vmatprep.subr.mxu0 0.0
        %2352 = vmatpush1.msra.mxu0 %v2338
        %2353 = vmatprep.subr.mxu0 0.0
        %2354 = vmatpush1.msra.mxu0 %v2337
        %2355 = vmatprep.subr.mxu0 0.0
        %2356 = vmatpush1.msra.mxu0 %v2336
        %2357 = vmatprep.subr.mxu0 0.0
        %2358 = vmatpush1.msra.mxu0 %v2335
        %2359 = vmatprep.subr.mxu0 0.0
        %2360 = vmatpush1.msra.mxu0 %v2334
        %2361 = vmatprep.subr.mxu0 0.0
        %2362 = vmatpush1.msra.mxu0 %v2333
        %2363 = vmatprep.subr.mxu0 0.0
        %2364 = vmatpush1.msra.mxu0 %v2332
        %2365 = vmatprep.subr.mxu0 0.0
        %2366 = vmatpush1.msra.mxu0 %v2331
        %2367 = vmatprep.subr.mxu0 0.0
        %2368 = vmatpush1.msra.mxu0 %v2330
        %2369 = vmatprep.subr.mxu0 0.0
        %2370 = vmatpush1.msra.mxu0 %v2329
        %2371 = vmatprep.subr.mxu0 0.0
        %2372 = vmatpush1.msra.mxu0 %v2328
        %2373 = vmatprep.subr.mxu0 0.0
        %2374 = vmatpush1.msra.mxu0 %v2327
        %2375 = vmatprep.subr.mxu0 0.0
        %2376 = vmatpush2.msra.mxu0 0.0
        %2377 = vmatprep.subr.mxu0 0.0
        %2378 = vmatpush2.msra.mxu0 0.0
        %2379 = vmatprep.subr.mxu0 0.0
        %2380 = vmatpush2.msra.mxu0 0.0
        %2381 = vmatprep.subr.mxu0 0.0
        %2382 = vmatpush2.msra.mxu0 0.0
        %2383 = vmatprep.subr.mxu0 0.0
        %2384 = vmatpush2.msra.mxu0 0.0
        %2385 = vmatprep.subr.mxu0 0.0
        %2386 = vmatpush2.msra.mxu0 0.0
        %2387 = vmatprep.subr.mxu0 0.0
        %2388 = vmatpush2.msra.mxu0 0.0
        %2389 = vmatprep.subr.mxu0 0.0
        %2390 = vmatpush2.msra.mxu0 0.0
        %2391 = vmatprep.subr.mxu0 0.0
        %2392 = vmatpush2.msra.mxu0 0.0
        %2393 = vmatprep.subr.mxu0 0.0
        %2394 = vmatpush2.msra.mxu0 0.0
        %2395 = vmatprep.subr.mxu0 0.0
        %2396 = vmatpush2.msra.mxu0 0.0
        %2397 = vmatprep.subr.mxu0 0.0
        %2398 = vmatpush2.msra.mxu0 0.0
        %2399 = vmatprep.subr.mxu0 0.0
        %2400 = vmatpush2.msra.mxu0 0.0
        %2401 = vmatprep.subr.mxu0 0.0
        %2402 = vmatpush2.msra.mxu0 0.0
        %2403 = vmatprep.subr.mxu0 0.0
        %2404 = vmatpush2.msra.mxu0 0.0
        %2405 = vmatprep.subr.mxu0 0.0
        %2406 = vmatpush2.msra.mxu0 0.0
        %2407 = vmatprep.mubr.f32.mxu0 0.0
        %2408 = vmatmul.mubr.f32.gmra.mxu0 %v2325
        %v2409 = vpop.f32.mrf.mxu0
        %v2410 = vadd.f32 0.0, %v2409
        %v2411 = vpop.f32.mrf.mxu0
        %2412 = vdwg.mxu0
        %v2413 = vadd.f32 %v2324, %v2410
        %v2414 = vld [vmem:[%s1963] sm:$0xff]
        %s2415 = scalar_lea.vmem %s4, 384
        %v2416 = vld [vmem:[%s2415] sm:$0xff]
        %v2417 = vld [vmem:[%s2415 + $0x8] sm:$0xff]
        %v2418 = vld [vmem:[%s2415 + $0x10] sm:$0xff]
        %v2419 = vld [vmem:[%s2415 + $0x18] sm:$0xff]
        %v2420 = vld [vmem:[%s2415 + $0x20] sm:$0xff]
        %v2421 = vld [vmem:[%s2415 + $0x28] sm:$0xff]
        %v2422 = vld [vmem:[%s2415 + $0x30] sm:$0xff]
        %v2423 = vld [vmem:[%s2415 + $0x38] sm:$0xff]
        %v2424 = vld [vmem:[%s2415 + $0x40] sm:$0xff]
        %v2425 = vld [vmem:[%s2415 + $0x48] sm:$0xff]
        %v2426 = vld [vmem:[%s2415 + $0x50] sm:$0xff]
        %v2427 = vld [vmem:[%s2415 + $0x58] sm:$0xff]
        %v2428 = vld [vmem:[%s2415 + $0x60] sm:$0xff]
        %v2429 = vld [vmem:[%s2415 + $0x68] sm:$0xff]
        %v2430 = vld [vmem:[%s2415 + $0x70] sm:$0xff]
        %v2431 = vld [vmem:[%s2415 + $0x78] sm:$0xff]
        %2432 = vmatprep.subr.mxu0 0.0
        %2433 = vmatpush1.msra.mxu0 %v2431
        %2434 = vmatprep.subr.mxu0 0.0
        %2435 = vmatpush1.msra.mxu0 %v2430
        %2436 = vmatprep.subr.mxu0 0.0
        %2437 = vmatpush1.msra.mxu0 %v2429
        %2438 = vmatprep.subr.mxu0 0.0
        %2439 = vmatpush1.msra.mxu0 %v2428
        %2440 = vmatprep.subr.mxu0 0.0
        %2441 = vmatpush1.msra.mxu0 %v2427
        %2442 = vmatprep.subr.mxu0 0.0
        %2443 = vmatpush1.msra.mxu0 %v2426
        %2444 = vmatprep.subr.mxu0 0.0
        %2445 = vmatpush1.msra.mxu0 %v2425
        %2446 = vmatprep.subr.mxu0 0.0
        %2447 = vmatpush1.msra.mxu0 %v2424
        %2448 = vmatprep.subr.mxu0 0.0
        %2449 = vmatpush1.msra.mxu0 %v2423
        %2450 = vmatprep.subr.mxu0 0.0
        %2451 = vmatpush1.msra.mxu0 %v2422
        %2452 = vmatprep.subr.mxu0 0.0
        %2453 = vmatpush1.msra.mxu0 %v2421
        %2454 = vmatprep.subr.mxu0 0.0
        %2455 = vmatpush1.msra.mxu0 %v2420
        %2456 = vmatprep.subr.mxu0 0.0
        %2457 = vmatpush1.msra.mxu0 %v2419
        %2458 = vmatprep.subr.mxu0 0.0
        %2459 = vmatpush1.msra.mxu0 %v2418
        %2460 = vmatprep.subr.mxu0 0.0
        %2461 = vmatpush1.msra.mxu0 %v2417
        %2462 = vmatprep.subr.mxu0 0.0
        %2463 = vmatpush1.msra.mxu0 %v2416
        %2464 = vmatprep.subr.mxu0 0.0
        %2465 = vmatpush2.msra.mxu0 0.0
        %2466 = vmatprep.subr.mxu0 0.0
        %2467 = vmatpush2.msra.mxu0 0.0
        %2468 = vmatprep.subr.mxu0 0.0
        %2469 = vmatpush2.msra.mxu0 0.0
        %2470 = vmatprep.subr.mxu0 0.0
        %2471 = vmatpush2.msra.mxu0 0.0
        %2472 = vmatprep.subr.mxu0 0.0
        %2473 = vmatpush2.msra.mxu0 0.0
        %2474 = vmatprep.subr.mxu0 0.0
        %2475 = vmatpush2.msra.mxu0 0.0
        %2476 = vmatprep.subr.mxu0 0.0
        %2477 = vmatpush2.msra.mxu0 0.0
        %2478 = vmatprep.subr.mxu0 0.0
        %2479 = vmatpush2.msra.mxu0 0.0
        %2480 = vmatprep.subr.mxu0 0.0
        %2481 = vmatpush2.msra.mxu0 0.0
        %2482 = vmatprep.subr.mxu0 0.0
        %2483 = vmatpush2.msra.mxu0 0.0
        %2484 = vmatprep.subr.mxu0 0.0
        %2485 = vmatpush2.msra.mxu0 0.0
        %2486 = vmatprep.subr.mxu0 0.0
        %2487 = vmatpush2.msra.mxu0 0.0
        %2488 = vmatprep.subr.mxu0 0.0
        %2489 = vmatpush2.msra.mxu0 0.0
        %2490 = vmatprep.subr.mxu0 0.0
        %2491 = vmatpush2.msra.mxu0 0.0
        %2492 = vmatprep.subr.mxu0 0.0
        %2493 = vmatpush2.msra.mxu0 0.0
        %2494 = vmatprep.subr.mxu0 0.0
        %2495 = vmatpush2.msra.mxu0 0.0
        %2496 = vmatprep.mubr.f32.mxu0 0.0
        %2497 = vmatmul.mubr.f32.gmra.mxu0 %v2414
        %v2498 = vpop.f32.mrf.mxu0
        %v2499 = vadd.f32 0.0, %v2498
        %v2500 = vpop.f32.mrf.mxu0
        %2501 = vdwg.mxu0
        %v2502 = vadd.f32 %v2413, %v2499
        %v2503 = vld [vmem:[%s2139] sm:$0xff]
        %s2504 = scalar_lea.vmem %s4, 512
        %v2505 = vld [vmem:[%s2504] sm:$0xff]
        %v2506 = vld [vmem:[%s2504 + $0x8] sm:$0xff]
        %v2507 = vld [vmem:[%s2504 + $0x10] sm:$0xff]
        %v2508 = vld [vmem:[%s2504 + $0x18] sm:$0xff]
        %v2509 = vld [vmem:[%s2504 + $0x20] sm:$0xff]
        %v2510 = vld [vmem:[%s2504 + $0x28] sm:$0xff]
        %v2511 = vld [vmem:[%s2504 + $0x30] sm:$0xff]
        %v2512 = vld [vmem:[%s2504 + $0x38] sm:$0xff]
        %v2513 = vld [vmem:[%s2504 + $0x40] sm:$0xff]
        %v2514 = vld [vmem:[%s2504 + $0x48] sm:$0xff]
        %v2515 = vld [vmem:[%s2504 + $0x50] sm:$0xff]
        %v2516 = vld [vmem:[%s2504 + $0x58] sm:$0xff]
        %v2517 = vld [vmem:[%s2504 + $0x60] sm:$0xff]
        %v2518 = vld [vmem:[%s2504 + $0x68] sm:$0xff]
        %v2519 = vld [vmem:[%s2504 + $0x70] sm:$0xff]
        %v2520 = vld [vmem:[%s2504 + $0x78] sm:$0xff]
        %2521 = vmatprep.subr.mxu0 0.0
        %2522 = vmatpush1.msra.mxu0 %v2520
        %2523 = vmatprep.subr.mxu0 0.0
        %2524 = vmatpush1.msra.mxu0 %v2519
        %2525 = vmatprep.subr.mxu0 0.0
        %2526 = vmatpush1.msra.mxu0 %v2518
        %2527 = vmatprep.subr.mxu0 0.0
        %2528 = vmatpush1.msra.mxu0 %v2517
        %2529 = vmatprep.subr.mxu0 0.0
        %2530 = vmatpush1.msra.mxu0 %v2516
        %2531 = vmatprep.subr.mxu0 0.0
        %2532 = vmatpush1.msra.mxu0 %v2515
        %2533 = vmatprep.subr.mxu0 0.0
        %2534 = vmatpush1.msra.mxu0 %v2514
        %2535 = vmatprep.subr.mxu0 0.0
        %2536 = vmatpush1.msra.mxu0 %v2513
        %2537 = vmatprep.subr.mxu0 0.0
        %2538 = vmatpush1.msra.mxu0 %v2512
        %2539 = vmatprep.subr.mxu0 0.0
        %2540 = vmatpush1.msra.mxu0 %v2511
        %2541 = vmatprep.subr.mxu0 0.0
        %2542 = vmatpush1.msra.mxu0 %v2510
        %2543 = vmatprep.subr.mxu0 0.0
        %2544 = vmatpush1.msra.mxu0 %v2509
        %2545 = vmatprep.subr.mxu0 0.0
        %2546 = vmatpush1.msra.mxu0 %v2508
        %2547 = vmatprep.subr.mxu0 0.0
        %2548 = vmatpush1.msra.mxu0 %v2507
        %2549 = vmatprep.subr.mxu0 0.0
        %2550 = vmatpush1.msra.mxu0 %v2506
        %2551 = vmatprep.subr.mxu0 0.0
        %2552 = vmatpush1.msra.mxu0 %v2505
        %2553 = vmatprep.subr.mxu0 0.0
        %2554 = vmatpush2.msra.mxu0 0.0
        %2555 = vmatprep.subr.mxu0 0.0
        %2556 = vmatpush2.msra.mxu0 0.0
        %2557 = vmatprep.subr.mxu0 0.0
        %2558 = vmatpush2.msra.mxu0 0.0
        %2559 = vmatprep.subr.mxu0 0.0
        %2560 = vmatpush2.msra.mxu0 0.0
        %2561 = vmatprep.subr.mxu0 0.0
        %2562 = vmatpush2.msra.mxu0 0.0
        %2563 = vmatprep.subr.mxu0 0.0
        %2564 = vmatpush2.msra.mxu0 0.0
        %2565 = vmatprep.subr.mxu0 0.0
        %2566 = vmatpush2.msra.mxu0 0.0
        %2567 = vmatprep.subr.mxu0 0.0
        %2568 = vmatpush2.msra.mxu0 0.0
        %2569 = vmatprep.subr.mxu0 0.0
        %2570 = vmatpush2.msra.mxu0 0.0
        %2571 = vmatprep.subr.mxu0 0.0
        %2572 = vmatpush2.msra.mxu0 0.0
        %2573 = vmatprep.subr.mxu0 0.0
        %2574 = vmatpush2.msra.mxu0 0.0
        %2575 = vmatprep.subr.mxu0 0.0
        %2576 = vmatpush2.msra.mxu0 0.0
        %2577 = vmatprep.subr.mxu0 0.0
        %2578 = vmatpush2.msra.mxu0 0.0
        %2579 = vmatprep.subr.mxu0 0.0
        %2580 = vmatpush2.msra.mxu0 0.0
        %2581 = vmatprep.subr.mxu0 0.0
        %2582 = vmatpush2.msra.mxu0 0.0
        %2583 = vmatprep.subr.mxu0 0.0
        %2584 = vmatpush2.msra.mxu0 0.0
        %2585 = vmatprep.mubr.f32.mxu0 0.0
        %2586 = vmatmul.mubr.f32.gmra.mxu0 %v2503
        %v2587 = vpop.f32.mrf.mxu0
        %v2588 = vadd.f32 0.0, %v2587
        %v2589 = vpop.f32.mrf.mxu0
        %2590 = vdwg.mxu0
        %v2591 = vadd.f32 %v2502, %v2588
        %v2592 = vmax.f32 %v2591, 0.0
        %v2593 = vld [vmem:[%s6] sm:$0xff]
        %v2594 = vld [vmem:[%s6 + $0x8] sm:$0xff]
        %v2595 = vld [vmem:[%s6 + $0x10] sm:$0xff]
        %v2596 = vld [vmem:[%s6 + $0x18] sm:$0xff]
        %v2597 = vld [vmem:[%s7] sm:$0x1]
        %v2599 = vlaneseq
        %v2600 = vshrl.u32 %v2599, 7
        %v2601 = vsub.s32 0, %v2600
        %v2602 = vrot.slane %v2597, %v2601
        %vm2604 = vcmask 261120
        %v2606 = vsel %vm2604, %v2592, 0
        %2608 = vmatprep.subr.mxu0 0.0
        %2609 = vmatpush1.msra.mxu0 0.0
        %2610 = vmatprep.subr.mxu0 0.0
        %2611 = vmatpush1.msra.mxu0 0.0
        %2612 = vmatprep.subr.mxu0 0.0
        %2613 = vmatpush1.msra.mxu0 0.0
        %2614 = vmatprep.subr.mxu0 0.0
        %2615 = vmatpush1.msra.mxu0 0.0
        %2616 = vmatprep.subr.mxu0 0.0
        %2617 = vmatpush1.msra.mxu0 0.0
        %2618 = vmatprep.subr.mxu0 0.0
        %2619 = vmatpush1.msra.mxu0 0.0
        %2620 = vmatprep.subr.mxu0 0.0
        %2621 = vmatpush1.msra.mxu0 0.0
        %2622 = vmatprep.subr.mxu0 0.0
        %2623 = vmatpush1.msra.mxu0 0.0
        %2624 = vmatprep.subr.mxu0 0.0
        %2625 = vmatpush1.msra.mxu0 0.0
        %2626 = vmatprep.subr.mxu0 0.0
        %2627 = vmatpush1.msra.mxu0 0.0
        %2628 = vmatprep.subr.mxu0 0.0
        %2629 = vmatpush1.msra.mxu0 0.0
        %2630 = vmatprep.subr.mxu0 0.0
        %2631 = vmatpush1.msra.mxu0 0.0
        %2632 = vmatprep.subr.mxu0 0.0
        %2633 = vmatpush1.msra.mxu0 %v2596
        %2634 = vmatprep.subr.mxu0 0.0
        %2635 = vmatpush1.msra.mxu0 %v2595
        %2636 = vmatprep.subr.mxu0 0.0
        %2637 = vmatpush1.msra.mxu0 %v2594
        %2638 = vmatprep.subr.mxu0 0.0
        %2639 = vmatpush1.msra.mxu0 %v2593
        %2640 = vmatprep.subr.mxu0 0.0
        %2641 = vmatpush2.msra.mxu0 0.0
        %2642 = vmatprep.subr.mxu0 0.0
        %2643 = vmatpush2.msra.mxu0 0.0
        %2644 = vmatprep.subr.mxu0 0.0
        %2645 = vmatpush2.msra.mxu0 0.0
        %2646 = vmatprep.subr.mxu0 0.0
        %2647 = vmatpush2.msra.mxu0 0.0
        %2648 = vmatprep.subr.mxu0 0.0
        %2649 = vmatpush2.msra.mxu0 0.0
        %2650 = vmatprep.subr.mxu0 0.0
        %2651 = vmatpush2.msra.mxu0 0.0
        %2652 = vmatprep.subr.mxu0 0.0
        %2653 = vmatpush2.msra.mxu0 0.0
        %2654 = vmatprep.subr.mxu0 0.0
        %2655 = vmatpush2.msra.mxu0 0.0
        %2656 = vmatprep.subr.mxu0 0.0
        %2657 = vmatpush2.msra.mxu0 0.0
        %2658 = vmatprep.subr.mxu0 0.0
        %2659 = vmatpush2.msra.mxu0 0.0
        %2660 = vmatprep.subr.mxu0 0.0
        %2661 = vmatpush2.msra.mxu0 0.0
        %2662 = vmatprep.subr.mxu0 0.0
        %2663 = vmatpush2.msra.mxu0 0.0
        %2664 = vmatprep.subr.mxu0 0.0
        %2665 = vmatpush2.msra.mxu0 0.0
        %2666 = vmatprep.subr.mxu0 0.0
        %2667 = vmatpush2.msra.mxu0 0.0
        %2668 = vmatprep.subr.mxu0 0.0
        %2669 = vmatpush2.msra.mxu0 0.0
        %2670 = vmatprep.subr.mxu0 0.0
        %2671 = vmatpush2.msra.mxu0 0.0
        %2672 = vmatprep.mubr.f32.mxu0 0.0
        %2673 = vmatmul.mubr.f32.gmra.mxu0 %v2606
        %v2674 = vpop.f32.mrf.mxu0
        %v2675 = vadd.f32 %v2602, %v2674
        %v2676 = vpop.f32.mrf.mxu0
        %2677 = vdwg.mxu0
        %v2678 = vmax.f32 %v2675, 0.0
        %v2679 = vld [vmem:[%s8] sm:$0xff]
        %v2680 = vld [vmem:[%s8 + $0x8] sm:$0xff]
        %v2681 = vld [vmem:[%s8 + $0x10] sm:$0xff]
        %v2682 = vld [vmem:[%s8 + $0x18] sm:$0xff]
        %v2683 = vld [vmem:[%s9] sm:$0x1]
        %v2685 = vlaneseq
        %v2686 = vshrl.u32 %v2685, 7
        %v2687 = vsub.s32 0, %v2686
        %v2688 = vrot.slane %v2683, %v2687
        %v2691 = vsel %vm2604, %v2678, 0
        %2693 = vmatprep.subr.mxu0 0.0
        %2694 = vmatpush1.msra.mxu0 0.0
        %2695 = vmatprep.subr.mxu0 0.0
        %2696 = vmatpush1.msra.mxu0 0.0
        %2697 = vmatprep.subr.mxu0 0.0
        %2698 = vmatpush1.msra.mxu0 0.0
        %2699 = vmatprep.subr.mxu0 0.0
        %2700 = vmatpush1.msra.mxu0 0.0
        %2701 = vmatprep.subr.mxu0 0.0
        %2702 = vmatpush1.msra.mxu0 0.0
        %2703 = vmatprep.subr.mxu0 0.0
        %2704 = vmatpush1.msra.mxu0 0.0
        %2705 = vmatprep.subr.mxu0 0.0
        %2706 = vmatpush1.msra.mxu0 0.0
        %2707 = vmatprep.subr.mxu0 0.0
        %2708 = vmatpush1.msra.mxu0 0.0
        %2709 = vmatprep.subr.mxu0 0.0
        %2710 = vmatpush1.msra.mxu0 0.0
        %2711 = vmatprep.subr.mxu0 0.0
        %2712 = vmatpush1.msra.mxu0 0.0
        %2713 = vmatprep.subr.mxu0 0.0
        %2714 = vmatpush1.msra.mxu0 0.0
        %2715 = vmatprep.subr.mxu0 0.0
        %2716 = vmatpush1.msra.mxu0 0.0
        %2717 = vmatprep.subr.mxu0 0.0
        %2718 = vmatpush1.msra.mxu0 %v2682
        %2719 = vmatprep.subr.mxu0 0.0
        %2720 = vmatpush1.msra.mxu0 %v2681
        %2721 = vmatprep.subr.mxu0 0.0
        %2722 = vmatpush1.msra.mxu0 %v2680
        %2723 = vmatprep.subr.mxu0 0.0
        %2724 = vmatpush1.msra.mxu0 %v2679
        %2725 = vmatprep.subr.mxu0 0.0
        %2726 = vmatpush2.msra.mxu0 0.0
        %2727 = vmatprep.subr.mxu0 0.0
        %2728 = vmatpush2.msra.mxu0 0.0
        %2729 = vmatprep.subr.mxu0 0.0
        %2730 = vmatpush2.msra.mxu0 0.0
        %2731 = vmatprep.subr.mxu0 0.0
        %2732 = vmatpush2.msra.mxu0 0.0
        %2733 = vmatprep.subr.mxu0 0.0
        %2734 = vmatpush2.msra.mxu0 0.0
        %2735 = vmatprep.subr.mxu0 0.0
        %2736 = vmatpush2.msra.mxu0 0.0
        %2737 = vmatprep.subr.mxu0 0.0
        %2738 = vmatpush2.msra.mxu0 0.0
        %2739 = vmatprep.subr.mxu0 0.0
        %2740 = vmatpush2.msra.mxu0 0.0
        %2741 = vmatprep.subr.mxu0 0.0
        %2742 = vmatpush2.msra.mxu0 0.0
        %2743 = vmatprep.subr.mxu0 0.0
        %2744 = vmatpush2.msra.mxu0 0.0
        %2745 = vmatprep.subr.mxu0 0.0
        %2746 = vmatpush2.msra.mxu0 0.0
        %2747 = vmatprep.subr.mxu0 0.0
        %2748 = vmatpush2.msra.mxu0 0.0
        %2749 = vmatprep.subr.mxu0 0.0
        %2750 = vmatpush2.msra.mxu0 0.0
        %2751 = vmatprep.subr.mxu0 0.0
        %2752 = vmatpush2.msra.mxu0 0.0
        %2753 = vmatprep.subr.mxu0 0.0
        %2754 = vmatpush2.msra.mxu0 0.0
        %2755 = vmatprep.subr.mxu0 0.0
        %2756 = vmatpush2.msra.mxu0 0.0
        %2757 = vmatprep.mubr.f32.mxu0 0.0
        %2758 = vmatmul.mubr.f32.gmra.mxu0 %v2691
        %v2759 = vpop.f32.mrf.mxu0
        %v2760 = vadd.f32 %v2688, %v2759
        %v2761 = vpop.f32.mrf.mxu0
        %2762 = vdwg.mxu0
        %2763 = vmax.xlane.f32.xlu0 %v2760
        %v2764 = vpop.xlane.xlu0 %2763
        %v2765 = vsub.f32 %v2760, %v2764
        %v2766 = vmul.f32 %v2765, 1.442695
        %v2767 = vpow.pop %v2766
        %2768 = vadd.xlane.f32.xlu0 %v2767
        %v2769 = vpop.xlane.xlu0 %2768
        %v2770 = vrcp.pop %v2769
        %v2771 = vmul.f32 %v2767, %v2770
        %v2772 = vpack.c.bf16 %v2771, %v2771
        %2773 = vst [vmem:[%s408] sm:$0xf] %v2772
        %p2774 = scmp.lt.s32.totalorder %s21, 1
        %s2775 = scalar_select %p2774, %s21, 1
        %s2776 = smul.addr %s2775, 4
        %s2777 = scalar_lea.vmem %s10, %s2776
        // Predicated region
        $region99: #{alloc_actor2_forward.1} parent=93 // pred_check
          %p2778 = pneg %p254
        $region100: #{alloc_actor2_forward.1} parent=93 // pred_check_branch
          %2780 = sbr.rel (%p2778) target = $region102
        $region101: #{alloc_actor2_forward.1} parent=93 // pred_region
          _
        $region102: #{alloc_actor2_forward.1} parent=93 // pred_fallthru
          _
      $region94: #{alloc_actor2_forward.1} parent=5 // pred_fallthru
        _
      %p2781 = scmp.le.s32.totalorder 2, %s16
      // Predicated region
      $region103: #{alloc_actor2_forward.1} parent=5 // pred_check
        %p2782 = pneg %p2781
      $region104: #{alloc_actor2_forward.1} parent=5 // pred_check_branch
        %2784 = sbr.rel (%p2782) target = $region106
      $region105: #{alloc_actor2_forward.1} parent=5 // pred_region
        %s2785 = ssub.s32 %s16, 2
        // Predicated region
        $region107: #{alloc_actor2_forward.1} parent=105 // pred_check
          %p2786 = pneg %p260
        $region108: #{alloc_actor2_forward.1} parent=105 // pred_check_branch
          %2788 = sbr.rel (%p2786) target = $region110
        $region109: #{alloc_actor2_forward.1} parent=105 // pred_region
          %p2789 = scmp.lt.s32.totalorder %s22, 1
          %s2790 = scalar_select %p2789, %s22, 1
          %s2791 = smul.addr %s2790, 4
          %s2792 = scalar_lea.vmem %s10, %s2791
        $region110: #{alloc_actor2_forward.1} parent=105 // pred_fallthru
          _
      $region106: #{alloc_actor2_forward.1} parent=5 // pred_fallthru
        _
    $region6: #{alloc_actor2_forward.1} parent=1 // loop_footer
      %s20 = sadd.s32 1, %s16
    $region7: #{alloc_actor2_forward.1} parent=1 // loop_footer_branch
      %15 = sbr.rel target = $region3
    $region8: #{alloc_actor2_forward.1} parent=1 // loop_exit
      _

</llo_original>
